<compile_context>
chip_gen: v7x
topology: tpu7x:2x2x1
jax: 0.10.0
libtpu: 0.0.40
codegen_flags: <defaults>
</compile_context>

<pallas_src>
import functools
import math

import jax
import jax.numpy as jnp
from jax.experimental import pallas as pl
from jax.experimental.pallas import tpu as pltpu


# ---------------------------------------------------------------------------
# In-kernel math helpers (traced inside the Pallas kernel body).
# ---------------------------------------------------------------------------
def _layernorm(x, g, b, eps):
    mu = jnp.mean(x, axis=-1, keepdims=True)
    var = jnp.mean(jnp.square(x - mu), axis=-1, keepdims=True)
    return (x - mu) * jax.lax.rsqrt(var + eps) * g + b


def _gelu_tanh(x):
    # torch.nn.functional.gelu(x, approximate='tanh')
    c = math.sqrt(2.0 / math.pi)
    return 0.5 * x * (1.0 + jnp.tanh(c * (x + 0.044715 * x * x * x)))


# ---------------------------------------------------------------------------
# One SiglipEncoderLayer for a tile of Bt batch elements, entirely in VMEM.
#   * wq/bq arrive with the attention scale already folded in (wrapper).
#   * All dense matmuls run on R = Bt*S flattened rows.
# ---------------------------------------------------------------------------
def siglip_layer_kernel(x_ref, ln1_g, ln1_b, wq, bq, wk, bk, wv, bv, wo, bo,
                        ln2_g, ln2_b, w1, b1, w2, b2, out_ref,
                        *, num_heads, eps):
    f32 = jnp.float32
    bf16 = jnp.bfloat16

    Bt, S, D = x_ref.shape
    R = Bt * S
    H = num_heads
    hd = D // H

    # Flatten (Bt, S) -> R rows (leading-dim merge: free, keeps lane layout).
    x = x_ref[...].reshape(R, D).astype(f32)

    # ----- attention block -----
    h = _layernorm(x, ln1_g[...], ln1_b[...], eps)          # f32 statistics
    hb = h.astype(bf16)
    # Big MXU matmuls over all R rows (f32 accumulation), scale folded into wq/bq.
    q = (jnp.dot(hb, wq[...], preferred_element_type=f32) + bq[...]).astype(bf16)
    k = (jnp.dot(hb, wk[...], preferred_element_type=f32) + bk[...]).astype(bf16)
    v = (jnp.dot(hb, wv[...], preferred_element_type=f32) + bv[...]).astype(bf16)

    def split_heads(t2d):
        # (S, D) -> (H, S, hd): static lane slices of bf16 data stacked on a
        # new LEADING head axis (no minor-dim reshape; compile-safe).
        return jnp.stack([t2d[:, hh * hd:(hh + 1) * hd] for hh in range(H)],
                         axis=0)

    # Attention stays per batch element (sequences must not mix); Bt is a
    # small static constant so this unrolls.
    ctx_rows = []
    for b in range(Bt):
        rows = slice(b * S, (b + 1) * S)
        qh = split_heads(q[rows, :])                         # (H, S, hd) bf16
        kh = split_heads(k[rows, :])
        vh = split_heads(v[rows, :])

        # Head-batched score / context contractions (f32 accumulation).
        s = jnp.einsum('hqd,hkd->hqk', qh, kh, preferred_element_type=f32)
        s = s - jnp.max(s, axis=-1, keepdims=True)
        p = jnp.exp(s)
        p = p * pl.reciprocal(jnp.sum(p, axis=-1, keepdims=True), approx=True)
        # attention_dropout = 0.0 in the reference config -> no-op.

        ctx = jnp.einsum('hqk,hkd->hqd', p.astype(bf16), vh,
                         preferred_element_type=f32)         # (H, S, hd) f32

        # Re-merge heads to (S, D) (review item 2, option "merge heads and do
        # one (S,D)@(D,D) matmul") — no (H,S,D) intermediate, no head-sum.
        ctx_rows.append(jnp.concatenate([ctx[hh] for hh in range(H)], axis=-1))

    ctx_all = jnp.concatenate(ctx_rows, axis=0).astype(bf16)  # (R, D)

    # Single D-deep output projection over ALL rows in the tile.
    attn = jnp.dot(ctx_all, wo[...], preferred_element_type=f32) + bo[...]
    x = x + attn                                              # residual 1

    # ----- MLP block (all R rows at once) -----
    h2 = _layernorm(x, ln2_g[...], ln2_b[...], eps)
    h2 = jnp.dot(h2.astype(bf16), w1[...], preferred_element_type=f32) + b1[...]
    h2 = _gelu_tanh(h2)
    h2 = jnp.dot(h2.astype(bf16), w2[...], preferred_element_type=f32) + b2[...]
    # TODO(synk): tile this MLP over F (lane chunks of w1/w2) for production
    # intermediate_size; unnecessary at these shapes.

    out_ref[...] = (x + h2).reshape(Bt, S, D).astype(out_ref.dtype)  # residual 2


# ---------------------------------------------------------------------------
# Wrapper: one pallas_call for the whole encoder layer, grid over batch TILES.
# ---------------------------------------------------------------------------
def siglip_encoder_layer(x, p, *, num_heads, eps, batch_tile=None):
    B, S, D = x.shape
    H = num_heads
    hd = D // H
    scale = hd ** (-0.5)
    bf16 = jnp.bfloat16

    # Batch-tile size: choose so batch_tile*S fills the MXU M dimension
    # (>=256 rows on v6e/v7x). Must divide B.
    if batch_tile is None:
        batch_tile = B
        target_rows = 256
        for cand in range(1, B + 1):
            if B % cand == 0 and cand * S >= target_rows:
                batch_tile = cand
                break
    assert B % batch_tile == 0, "batch must be divisible by batch_tile"
    Bt = batch_tile

    # One-time parameter prep (plain XLA, negligible):
    #   * fold the attention scale into the q projection (weight AND bias),
    #   * cast matmul weights to bf16 (f32 accumulation happens in-kernel).
    wq = (p["wq"] * scale).astype(bf16)
    bq = p["bq"] * scale
    wk = p["wk"].astype(bf16)
    wv = p["wv"].astype(bf16)
    wo = p["wo"].astype(bf16)
    w1 = p["w1"].astype(bf16)
    w2 = p["w2"].astype(bf16)

    def rep(arr):
        # Replicated (grid-invariant) operand: full block, constant index map.
        # For production-size weights add pipeline_mode=pl.Buffered(1) here to
        # halve weight residency in VMEM (not needed at these toy shapes).
        n = arr.ndim
        return pl.BlockSpec(arr.shape, lambda i, _n=n: (0,) * _n)

    kernel = functools.partial(siglip_layer_kernel, num_heads=num_heads, eps=eps)
    return pl.pallas_call(
        kernel,
        out_shape=jax.ShapeDtypeStruct((B, S, D), x.dtype),
        grid=(B // Bt,),
        in_specs=[
            pl.BlockSpec((Bt, S, D), lambda i: (i, 0, 0)),   # hidden states tile
            rep(p["ln1_g"]), rep(p["ln1_b"]),                # ln1 gamma/beta
            rep(wq), rep(bq),                                # q proj (scaled)
            rep(wk), rep(p["bk"]),                           # k proj
            rep(wv), rep(p["bv"]),                           # v proj
            rep(wo), rep(p["bo"]),                           # out proj
            rep(p["ln2_g"]), rep(p["ln2_b"]),                # ln2 gamma/beta
            rep(w1), rep(p["b1"]),                           # fc1
            rep(w2), rep(p["b2"]),                           # fc2
        ],
        out_specs=pl.BlockSpec((Bt, S, D), lambda i: (i, 0, 0)),
        compiler_params=pltpu.CompilerParams(
            dimension_semantics=("parallel",),               # megacore shards tiles
            vmem_limit_bytes=32 * 1024 * 1024),              # > v5e 16 MiB default
    )(x, p["ln1_g"], p["ln1_b"], wq, bq, wk, p["bk"], wv, p["bv"], wo, p["bo"],
      p["ln2_g"], p["ln2_b"], w1, p["b1"], w2, p["b2"])


# ---------------------------------------------------------------------------
# Pure-JAX references (torch-equivalent math).  mm_dtype=float32 is the exact
# fp32 reference; mm_dtype=bfloat16 mirrors the kernel's mixed precision
# (bf16 matmul operands, f32 accumulation, f32 softmax/LN).
# ---------------------------------------------------------------------------
def ref_layer(x, p, num_heads, eps, mm_dtype):
    B, S, D = x.shape
    hd = D // num_heads
    scale = hd ** (-0.5)

    def mm(a, b):
        return jnp.matmul(a.astype(mm_dtype), b.astype(mm_dtype),
                          preferred_element_type=jnp.float32)

    h = _layernorm(x, p["ln1_g"], p["ln1_b"], eps)
    q = mm(h, p["wq"]) + p["bq"]
    k = mm(h, p["wk"]) + p["bk"]
    v = mm(h, p["wv"]) + p["bv"]
    q = q.reshape(B, S, num_heads, hd).transpose(0, 2, 1, 3)
    k = k.reshape(B, S, num_heads, hd).transpose(0, 2, 1, 3)
    v = v.reshape(B, S, num_heads, hd).transpose(0, 2, 1, 3)
    s = jnp.einsum("bhqd,bhkd->bhqk", q.astype(mm_dtype), k.astype(mm_dtype),
                   preferred_element_type=jnp.float32) * scale
    pw = jax.nn.softmax(s, axis=-1)
    o = jnp.einsum("bhqk,bhkd->bhqd", pw.astype(mm_dtype), v.astype(mm_dtype),
                   preferred_element_type=jnp.float32)
    o = o.transpose(0, 2, 1, 3).reshape(B, S, D)
    o = mm(o, p["wo"]) + p["bo"]
    x = x + o

    h = _layernorm(x, p["ln2_g"], p["ln2_b"], eps)
    h = mm(h, p["w1"]) + p["b1"]
    h = _gelu_tanh(h)
    h = mm(h, p["w2"]) + p["b2"]
    return x + h


# ---------------------------------------------------------------------------
# Deterministic synthetic parameters (weights stored as (in, out): y = x@W+b).
# ---------------------------------------------------------------------------
def init_layer_params(key, D, F):
    ks = jax.random.split(key, 12)

    def lin(k, din, dout):
        return jax.random.normal(k, (din, dout), jnp.float32) / math.sqrt(din)

    def bias(k, dout):
        return 0.02 * jax.random.normal(k, (1, dout), jnp.float32)

    return {
        "ln1_g": jnp.ones((1, D), jnp.float32),
        "ln1_b": jnp.zeros((1, D), jnp.float32),
        "wq": lin(ks[0], D, D), "bq": bias(ks[1], D),
        "wk": lin(ks[2], D, D), "bk": bias(ks[3], D),
        "wv": lin(ks[4], D, D), "bv": bias(ks[5], D),
        "wo": lin(ks[6], D, D), "bo": bias(ks[7], D),
        "ln2_g": jnp.ones((1, D), jnp.float32),
        "ln2_b": jnp.zeros((1, D), jnp.float32),
        "w1": lin(ks[8], D, F), "b1": bias(ks[9], F),
        "w2": lin(ks[10], F, D), "b2": bias(ks[11], D),
    }


if __name__ == "__main__":
    # Small SiglipVisionConfig-consistent shapes:
    #   hidden_size=128, intermediate_size=256, num_attention_heads=4
    #   inputs_embeds: (batch=4, seq=16, hidden=128); batch_tile=2 per grid step.
    B, S, D, F = 4, 16, 128, 256
    NUM_HEADS = 4
    EPS = 1e-6

    key = jax.random.PRNGKey(0)
    k_x, k_p = jax.random.split(key)
    hidden_states = jax.random.normal(k_x, (B, S, D), jnp.float32)
    params = init_layer_params(k_p, D, F)

    out = siglip_encoder_layer(hidden_states, params, num_heads=NUM_HEADS,
                               eps=EPS, batch_tile=2)
    out = jax.block_until_ready(out)
    assert out.shape == (B, S, D)

    # Check against a mixed-precision reference that mirrors the kernel's
    # numerics (bf16 matmul operands, f32 accumulation) ...
    ref_mixed = jax.block_until_ready(
        ref_layer(hidden_states, params, NUM_HEADS, EPS, jnp.bfloat16))
    err_mixed = float(jnp.max(jnp.abs(out - ref_mixed)))
    assert jnp.allclose(out, ref_mixed, rtol=5e-2, atol=5e-2), err_mixed

    # ... and a looser sanity check against the pure-f32 reference.
    ref_full = jax.block_until_ready(
        ref_layer(hidden_states, params, NUM_HEADS, EPS, jnp.float32))
    err_full = float(jnp.max(jnp.abs(out - ref_full)))
    assert jnp.allclose(out, ref_full, rtol=2.5e-1, atol=2.5e-1), err_full

    print("KERNEL_OK")
</pallas_src>

<mosaic_0001>
module attributes {stable_mosaic.version = 11 : i64} {
  func.func @siglip_layer_kernel(%arg0: i32, %arg1: memref<2x16x128xf32, #tpu.memory_space<vmem>>, %arg2: memref<1x128xf32, #tpu.memory_space<vmem>>, %arg3: memref<1x128xf32, #tpu.memory_space<vmem>>, %arg4: memref<128x128xbf16, #tpu.memory_space<vmem>>, %arg5: memref<1x128xf32, #tpu.memory_space<vmem>>, %arg6: memref<128x128xbf16, #tpu.memory_space<vmem>>, %arg7: memref<1x128xf32, #tpu.memory_space<vmem>>, %arg8: memref<128x128xbf16, #tpu.memory_space<vmem>>, %arg9: memref<1x128xf32, #tpu.memory_space<vmem>>, %arg10: memref<128x128xbf16, #tpu.memory_space<vmem>>, %arg11: memref<1x128xf32, #tpu.memory_space<vmem>>, %arg12: memref<1x128xf32, #tpu.memory_space<vmem>>, %arg13: memref<1x128xf32, #tpu.memory_space<vmem>>, %arg14: memref<128x256xbf16, #tpu.memory_space<vmem>>, %arg15: memref<1x256xf32, #tpu.memory_space<vmem>>, %arg16: memref<256x128xbf16, #tpu.memory_space<vmem>>, %arg17: memref<1x128xf32, #tpu.memory_space<vmem>>, %arg18: memref<2x16x128xf32, #tpu.memory_space<vmem>>) attributes {dimension_semantics = [#tpu.dimension_semantics<parallel>], iteration_bounds = array<i64: 2>, scalar_prefetch = 0 : i64, scratch_operands = 0 : i64, tpu.core_type = #tpu.core_type<tc>, window_params = [{transform_indices = @transform_0, window_bounds = array<i64: 2, 16, 128>}, {pipeline_mode = #tpu.pipeline_mode<synchronous>, transform_indices = @transform_1, window_bounds = array<i64: 1, 128>}, {pipeline_mode = #tpu.pipeline_mode<synchronous>, transform_indices = @transform_2, window_bounds = array<i64: 1, 128>}, {pipeline_mode = #tpu.pipeline_mode<synchronous>, transform_indices = @transform_3, window_bounds = array<i64: 128, 128>}, {pipeline_mode = #tpu.pipeline_mode<synchronous>, transform_indices = @transform_4, window_bounds = array<i64: 1, 128>}, {pipeline_mode = #tpu.pipeline_mode<synchronous>, transform_indices = @transform_5, window_bounds = array<i64: 128, 128>}, {pipeline_mode = #tpu.pipeline_mode<synchronous>, transform_indices = @transform_6, window_bounds = array<i64: 1, 128>}, {pipeline_mode = #tpu.pipeline_mode<synchronous>, transform_indices = @transform_7, window_bounds = array<i64: 128, 128>}, {pipeline_mode = #tpu.pipeline_mode<synchronous>, transform_indices = @transform_8, window_bounds = array<i64: 1, 128>}, {pipeline_mode = #tpu.pipeline_mode<synchronous>, transform_indices = @transform_9, window_bounds = array<i64: 128, 128>}, {pipeline_mode = #tpu.pipeline_mode<synchronous>, transform_indices = @transform_10, window_bounds = array<i64: 1, 128>}, {pipeline_mode = #tpu.pipeline_mode<synchronous>, transform_indices = @transform_11, window_bounds = array<i64: 1, 128>}, {pipeline_mode = #tpu.pipeline_mode<synchronous>, transform_indices = @transform_12, window_bounds = array<i64: 1, 128>}, {pipeline_mode = #tpu.pipeline_mode<synchronous>, transform_indices = @transform_13, window_bounds = array<i64: 128, 256>}, {pipeline_mode = #tpu.pipeline_mode<synchronous>, transform_indices = @transform_14, window_bounds = array<i64: 1, 256>}, {pipeline_mode = #tpu.pipeline_mode<synchronous>, transform_indices = @transform_15, window_bounds = array<i64: 256, 128>}, {pipeline_mode = #tpu.pipeline_mode<synchronous>, transform_indices = @transform_16, window_bounds = array<i64: 1, 128>}, {transform_indices = @transform_17, window_bounds = array<i64: 2, 16, 128>}]} {
    %c0 = arith.constant 0 : index
    %c0_0 = arith.constant 0 : index
    %c0_1 = arith.constant 0 : index
    %0 = vector.load %arg1[%c0, %c0_0, %c0_1] : memref<2x16x128xf32, #tpu.memory_space<vmem>>, vector<2x16x128xf32>
    %1 = vector.shape_cast %0 : vector<2x16x128xf32> to vector<32x128xf32>
    %c0_2 = arith.constant 0 : index
    %c0_3 = arith.constant 0 : index
    %2 = vector.load %arg2[%c0_2, %c0_3] : memref<1x128xf32, #tpu.memory_space<vmem>>, vector<1x128xf32>
    %c0_4 = arith.constant 0 : index
    %c0_5 = arith.constant 0 : index
    %3 = vector.load %arg3[%c0_4, %c0_5] : memref<1x128xf32, #tpu.memory_space<vmem>>, vector<1x128xf32>
    %cst = arith.constant dense<0.000000e+00> : vector<32xf32>
    %4 = vector.multi_reduction <add>, %1, %cst [1] : vector<32x128xf32> to vector<32xf32>
    %5 = vector.shape_cast %4 : vector<32xf32> to vector<32x1xf32>
    %cst_6 = arith.constant 1.280000e+02 : f32
    %6 = vector.broadcast %cst_6 : f32 to vector<32x1xf32>
    %7 = arith.divf %5, %6 : vector<32x1xf32>
    %8 = vector.broadcast %7 : vector<32x1xf32> to vector<32x128xf32>
    %9 = arith.subf %1, %8 : vector<32x128xf32>
    %10 = arith.mulf %9, %9 : vector<32x128xf32>
    %cst_7 = arith.constant dense<0.000000e+00> : vector<32xf32>
    %11 = vector.multi_reduction <add>, %10, %cst_7 [1] : vector<32x128xf32> to vector<32xf32>
    %12 = vector.shape_cast %11 : vector<32xf32> to vector<32x1xf32>
    %cst_8 = arith.constant 1.280000e+02 : f32
    %13 = vector.broadcast %cst_8 : f32 to vector<32x1xf32>
    %14 = arith.divf %12, %13 : vector<32x1xf32>
    %15 = vector.broadcast %7 : vector<32x1xf32> to vector<32x128xf32>
    %16 = arith.subf %1, %15 : vector<32x128xf32>
    %cst_9 = arith.constant 9.99999997E-7 : f32
    %17 = vector.broadcast %cst_9 : f32 to vector<32x1xf32>
    %18 = arith.addf %14, %17 : vector<32x1xf32>
    %19 = math.rsqrt %18 : vector<32x1xf32>
    %20 = vector.broadcast %19 : vector<32x1xf32> to vector<32x128xf32>
    %21 = arith.mulf %16, %20 : vector<32x128xf32>
    %22 = vector.broadcast %2 : vector<1x128xf32> to vector<32x128xf32>
    %23 = arith.mulf %21, %22 : vector<32x128xf32>
    %24 = vector.broadcast %3 : vector<1x128xf32> to vector<32x128xf32>
    %25 = arith.addf %23, %24 : vector<32x128xf32>
    %26 = arith.truncf %25 : vector<32x128xf32> to vector<32x128xbf16>
    %c0_10 = arith.constant 0 : index
    %c0_11 = arith.constant 0 : index
    %27 = vector.load %arg4[%c0_10, %c0_11] : memref<128x128xbf16, #tpu.memory_space<vmem>>, vector<128x128xbf16>
    %cst_12 = arith.constant dense<0.000000e+00> : vector<32x128xf32>
    %28 = tpu.matmul %26, %27, %cst_12 {dimension_numbers = #tpu.dot_dimension_numbers<[1], [0], [0], [1], [0, 0, 1, 1], [], []>} : vector<32x128xbf16>, vector<128x128xbf16>, vector<32x128xf32> -> vector<32x128xf32>
    %c0_13 = arith.constant 0 : index
    %c0_14 = arith.constant 0 : index
    %29 = vector.load %arg5[%c0_13, %c0_14] : memref<1x128xf32, #tpu.memory_space<vmem>>, vector<1x128xf32>
    %30 = vector.broadcast %29 : vector<1x128xf32> to vector<32x128xf32>
    %31 = arith.addf %28, %30 : vector<32x128xf32>
    %32 = arith.truncf %31 : vector<32x128xf32> to vector<32x128xbf16>
    %c0_15 = arith.constant 0 : index
    %c0_16 = arith.constant 0 : index
    %33 = vector.load %arg6[%c0_15, %c0_16] : memref<128x128xbf16, #tpu.memory_space<vmem>>, vector<128x128xbf16>
    %cst_17 = arith.constant dense<0.000000e+00> : vector<32x128xf32>
    %34 = tpu.matmul %26, %33, %cst_17 {dimension_numbers = #tpu.dot_dimension_numbers<[1], [0], [0], [1], [0, 0, 1, 1], [], []>} : vector<32x128xbf16>, vector<128x128xbf16>, vector<32x128xf32> -> vector<32x128xf32>
    %c0_18 = arith.constant 0 : index
    %c0_19 = arith.constant 0 : index
    %35 = vector.load %arg7[%c0_18, %c0_19] : memref<1x128xf32, #tpu.memory_space<vmem>>, vector<1x128xf32>
    %36 = vector.broadcast %35 : vector<1x128xf32> to vector<32x128xf32>
    %37 = arith.addf %34, %36 : vector<32x128xf32>
    %38 = arith.truncf %37 : vector<32x128xf32> to vector<32x128xbf16>
    %c0_20 = arith.constant 0 : index
    %c0_21 = arith.constant 0 : index
    %39 = vector.load %arg8[%c0_20, %c0_21] : memref<128x128xbf16, #tpu.memory_space<vmem>>, vector<128x128xbf16>
    %cst_22 = arith.constant dense<0.000000e+00> : vector<32x128xf32>
    %40 = tpu.matmul %26, %39, %cst_22 {dimension_numbers = #tpu.dot_dimension_numbers<[1], [0], [0], [1], [0, 0, 1, 1], [], []>} : vector<32x128xbf16>, vector<128x128xbf16>, vector<32x128xf32> -> vector<32x128xf32>
    %c0_23 = arith.constant 0 : index
    %c0_24 = arith.constant 0 : index
    %41 = vector.load %arg9[%c0_23, %c0_24] : memref<1x128xf32, #tpu.memory_space<vmem>>, vector<1x128xf32>
    %42 = vector.broadcast %41 : vector<1x128xf32> to vector<32x128xf32>
    %43 = arith.addf %40, %42 : vector<32x128xf32>
    %44 = arith.truncf %43 : vector<32x128xf32> to vector<32x128xbf16>
    %45 = vector.extract_strided_slice %32 {offsets = [0, 0], sizes = [16, 128], strides = [1, 1]} : vector<32x128xbf16> to vector<16x128xbf16>
    %46 = vector.extract_strided_slice %45 {offsets = [0, 0], sizes = [16, 32], strides = [1, 1]} : vector<16x128xbf16> to vector<16x32xbf16>
    %47 = vector.extract_strided_slice %45 {offsets = [0, 32], sizes = [16, 32], strides = [1, 1]} : vector<16x128xbf16> to vector<16x32xbf16>
    %48 = vector.extract_strided_slice %45 {offsets = [0, 64], sizes = [16, 32], strides = [1, 1]} : vector<16x128xbf16> to vector<16x32xbf16>
    %49 = vector.extract_strided_slice %45 {offsets = [0, 96], sizes = [16, 32], strides = [1, 1]} : vector<16x128xbf16> to vector<16x32xbf16>
    %50 = vector.shape_cast %46 : vector<16x32xbf16> to vector<1x16x32xbf16>
    %51 = vector.shape_cast %47 : vector<16x32xbf16> to vector<1x16x32xbf16>
    %52 = vector.shape_cast %48 : vector<16x32xbf16> to vector<1x16x32xbf16>
    %53 = vector.shape_cast %49 : vector<16x32xbf16> to vector<1x16x32xbf16>
    %54 = tpu.concatenate %50, %51, %52, %53 in 0 : vector<1x16x32xbf16>, vector<1x16x32xbf16>, vector<1x16x32xbf16>, vector<1x16x32xbf16> -> vector<4x16x32xbf16>
    %55 = vector.extract_strided_slice %38 {offsets = [0, 0], sizes = [16, 128], strides = [1, 1]} : vector<32x128xbf16> to vector<16x128xbf16>
    %56 = vector.extract_strided_slice %55 {offsets = [0, 0], sizes = [16, 32], strides = [1, 1]} : vector<16x128xbf16> to vector<16x32xbf16>
    %57 = vector.extract_strided_slice %55 {offsets = [0, 32], sizes = [16, 32], strides = [1, 1]} : vector<16x128xbf16> to vector<16x32xbf16>
    %58 = vector.extract_strided_slice %55 {offsets = [0, 64], sizes = [16, 32], strides = [1, 1]} : vector<16x128xbf16> to vector<16x32xbf16>
    %59 = vector.extract_strided_slice %55 {offsets = [0, 96], sizes = [16, 32], strides = [1, 1]} : vector<16x128xbf16> to vector<16x32xbf16>
    %60 = vector.shape_cast %56 : vector<16x32xbf16> to vector<1x16x32xbf16>
    %61 = vector.shape_cast %57 : vector<16x32xbf16> to vector<1x16x32xbf16>
    %62 = vector.shape_cast %58 : vector<16x32xbf16> to vector<1x16x32xbf16>
    %63 = vector.shape_cast %59 : vector<16x32xbf16> to vector<1x16x32xbf16>
    %64 = tpu.concatenate %60, %61, %62, %63 in 0 : vector<1x16x32xbf16>, vector<1x16x32xbf16>, vector<1x16x32xbf16>, vector<1x16x32xbf16> -> vector<4x16x32xbf16>
    %65 = vector.extract_strided_slice %44 {offsets = [0, 0], sizes = [16, 128], strides = [1, 1]} : vector<32x128xbf16> to vector<16x128xbf16>
    %66 = vector.extract_strided_slice %65 {offsets = [0, 0], sizes = [16, 32], strides = [1, 1]} : vector<16x128xbf16> to vector<16x32xbf16>
    %67 = vector.extract_strided_slice %65 {offsets = [0, 32], sizes = [16, 32], strides = [1, 1]} : vector<16x128xbf16> to vector<16x32xbf16>
    %68 = vector.extract_strided_slice %65 {offsets = [0, 64], sizes = [16, 32], strides = [1, 1]} : vector<16x128xbf16> to vector<16x32xbf16>
    %69 = vector.extract_strided_slice %65 {offsets = [0, 96], sizes = [16, 32], strides = [1, 1]} : vector<16x128xbf16> to vector<16x32xbf16>
    %70 = vector.shape_cast %66 : vector<16x32xbf16> to vector<1x16x32xbf16>
    %71 = vector.shape_cast %67 : vector<16x32xbf16> to vector<1x16x32xbf16>
    %72 = vector.shape_cast %68 : vector<16x32xbf16> to vector<1x16x32xbf16>
    %73 = vector.shape_cast %69 : vector<16x32xbf16> to vector<1x16x32xbf16>
    %74 = tpu.concatenate %70, %71, %72, %73 in 0 : vector<1x16x32xbf16>, vector<1x16x32xbf16>, vector<1x16x32xbf16>, vector<1x16x32xbf16> -> vector<4x16x32xbf16>
    "tpu.trace_start"() <{level = 10 : i32, message = "hqd,hkd->hqk"}> : () -> ()
    %cst_25 = arith.constant dense<0.000000e+00> : vector<4x16x16xf32>
    %75 = tpu.matmul %54, %64, %cst_25 {dimension_numbers = #tpu.dot_dimension_numbers<[2], [2], [1], [1], [0, 0, 0, 1, 1, 1], [0], [0]>} : vector<4x16x32xbf16>, vector<4x16x32xbf16>, vector<4x16x16xf32> -> vector<4x16x16xf32>
    "tpu.trace_stop"() : () -> ()
    %cst_26 = arith.constant dense<0xFF800000> : vector<4x16xf32>
    %76 = vector.multi_reduction <maximumf>, %75, %cst_26 [2] : vector<4x16x16xf32> to vector<4x16xf32>
    %77 = vector.shape_cast %76 : vector<4x16xf32> to vector<4x16x1xf32>
    %78 = vector.broadcast %77 : vector<4x16x1xf32> to vector<4x16x16xf32>
    %79 = arith.subf %75, %78 : vector<4x16x16xf32>
    %80 = math.exp %79 : vector<4x16x16xf32>
    %cst_27 = arith.constant dense<0.000000e+00> : vector<4x16xf32>
    %81 = vector.multi_reduction <add>, %80, %cst_27 [2] : vector<4x16x16xf32> to vector<4x16xf32>
    %82 = vector.shape_cast %81 : vector<4x16xf32> to vector<4x16x1xf32>
    %83 = tpu.reciprocal %82 {approx = true} : vector<4x16x1xf32> -> vector<4x16x1xf32>
    %84 = vector.broadcast %83 : vector<4x16x1xf32> to vector<4x16x16xf32>
    %85 = arith.mulf %80, %84 : vector<4x16x16xf32>
    %86 = arith.truncf %85 : vector<4x16x16xf32> to vector<4x16x16xbf16>
    "tpu.trace_start"() <{level = 10 : i32, message = "hqk,hkd->hqd"}> : () -> ()
    %cst_28 = arith.constant dense<0.000000e+00> : vector<4x16x32xf32>
    %87 = tpu.matmul %86, %74, %cst_28 {dimension_numbers = #tpu.dot_dimension_numbers<[2], [1], [1], [2], [0, 0, 0, 1, 1, 2], [0], [0]>} : vector<4x16x16xbf16>, vector<4x16x32xbf16>, vector<4x16x32xf32> -> vector<4x16x32xf32>
    "tpu.trace_stop"() : () -> ()
    %88 = vector.extract_strided_slice %87 {offsets = [0, 0, 0], sizes = [1, 16, 32], strides = [1, 1, 1]} : vector<4x16x32xf32> to vector<1x16x32xf32>
    %89 = vector.shape_cast %88 : vector<1x16x32xf32> to vector<16x32xf32>
    %90 = vector.extract_strided_slice %87 {offsets = [1, 0, 0], sizes = [1, 16, 32], strides = [1, 1, 1]} : vector<4x16x32xf32> to vector<1x16x32xf32>
    %91 = vector.shape_cast %90 : vector<1x16x32xf32> to vector<16x32xf32>
    %92 = vector.extract_strided_slice %87 {offsets = [2, 0, 0], sizes = [1, 16, 32], strides = [1, 1, 1]} : vector<4x16x32xf32> to vector<1x16x32xf32>
    %93 = vector.shape_cast %92 : vector<1x16x32xf32> to vector<16x32xf32>
    %94 = vector.extract_strided_slice %87 {offsets = [3, 0, 0], sizes = [1, 16, 32], strides = [1, 1, 1]} : vector<4x16x32xf32> to vector<1x16x32xf32>
    %95 = vector.shape_cast %94 : vector<1x16x32xf32> to vector<16x32xf32>
    %96 = tpu.concatenate %89, %91, %93, %95 in 1 : vector<16x32xf32>, vector<16x32xf32>, vector<16x32xf32>, vector<16x32xf32> -> vector<16x128xf32>
    %97 = vector.extract_strided_slice %32 {offsets = [16, 0], sizes = [16, 128], strides = [1, 1]} : vector<32x128xbf16> to vector<16x128xbf16>
    %98 = vector.extract_strided_slice %97 {offsets = [0, 0], sizes = [16, 32], strides = [1, 1]} : vector<16x128xbf16> to vector<16x32xbf16>
    %99 = vector.extract_strided_slice %97 {offsets = [0, 32], sizes = [16, 32], strides = [1, 1]} : vector<16x128xbf16> to vector<16x32xbf16>
    %100 = vector.extract_strided_slice %97 {offsets = [0, 64], sizes = [16, 32], strides = [1, 1]} : vector<16x128xbf16> to vector<16x32xbf16>
    %101 = vector.extract_strided_slice %97 {offsets = [0, 96], sizes = [16, 32], strides = [1, 1]} : vector<16x128xbf16> to vector<16x32xbf16>
    %102 = vector.shape_cast %98 : vector<16x32xbf16> to vector<1x16x32xbf16>
    %103 = vector.shape_cast %99 : vector<16x32xbf16> to vector<1x16x32xbf16>
    %104 = vector.shape_cast %100 : vector<16x32xbf16> to vector<1x16x32xbf16>
    %105 = vector.shape_cast %101 : vector<16x32xbf16> to vector<1x16x32xbf16>
    %106 = tpu.concatenate %102, %103, %104, %105 in 0 : vector<1x16x32xbf16>, vector<1x16x32xbf16>, vector<1x16x32xbf16>, vector<1x16x32xbf16> -> vector<4x16x32xbf16>
    %107 = vector.extract_strided_slice %38 {offsets = [16, 0], sizes = [16, 128], strides = [1, 1]} : vector<32x128xbf16> to vector<16x128xbf16>
    %108 = vector.extract_strided_slice %107 {offsets = [0, 0], sizes = [16, 32], strides = [1, 1]} : vector<16x128xbf16> to vector<16x32xbf16>
    %109 = vector.extract_strided_slice %107 {offsets = [0, 32], sizes = [16, 32], strides = [1, 1]} : vector<16x128xbf16> to vector<16x32xbf16>
    %110 = vector.extract_strided_slice %107 {offsets = [0, 64], sizes = [16, 32], strides = [1, 1]} : vector<16x128xbf16> to vector<16x32xbf16>
    %111 = vector.extract_strided_slice %107 {offsets = [0, 96], sizes = [16, 32], strides = [1, 1]} : vector<16x128xbf16> to vector<16x32xbf16>
    %112 = vector.shape_cast %108 : vector<16x32xbf16> to vector<1x16x32xbf16>
    %113 = vector.shape_cast %109 : vector<16x32xbf16> to vector<1x16x32xbf16>
    %114 = vector.shape_cast %110 : vector<16x32xbf16> to vector<1x16x32xbf16>
    %115 = vector.shape_cast %111 : vector<16x32xbf16> to vector<1x16x32xbf16>
    %116 = tpu.concatenate %112, %113, %114, %115 in 0 : vector<1x16x32xbf16>, vector<1x16x32xbf16>, vector<1x16x32xbf16>, vector<1x16x32xbf16> -> vector<4x16x32xbf16>
    %117 = vector.extract_strided_slice %44 {offsets = [16, 0], sizes = [16, 128], strides = [1, 1]} : vector<32x128xbf16> to vector<16x128xbf16>
    %118 = vector.extract_strided_slice %117 {offsets = [0, 0], sizes = [16, 32], strides = [1, 1]} : vector<16x128xbf16> to vector<16x32xbf16>
    %119 = vector.extract_strided_slice %117 {offsets = [0, 32], sizes = [16, 32], strides = [1, 1]} : vector<16x128xbf16> to vector<16x32xbf16>
    %120 = vector.extract_strided_slice %117 {offsets = [0, 64], sizes = [16, 32], strides = [1, 1]} : vector<16x128xbf16> to vector<16x32xbf16>
    %121 = vector.extract_strided_slice %117 {offsets = [0, 96], sizes = [16, 32], strides = [1, 1]} : vector<16x128xbf16> to vector<16x32xbf16>
    %122 = vector.shape_cast %118 : vector<16x32xbf16> to vector<1x16x32xbf16>
    %123 = vector.shape_cast %119 : vector<16x32xbf16> to vector<1x16x32xbf16>
    %124 = vector.shape_cast %120 : vector<16x32xbf16> to vector<1x16x32xbf16>
    %125 = vector.shape_cast %121 : vector<16x32xbf16> to vector<1x16x32xbf16>
    %126 = tpu.concatenate %122, %123, %124, %125 in 0 : vector<1x16x32xbf16>, vector<1x16x32xbf16>, vector<1x16x32xbf16>, vector<1x16x32xbf16> -> vector<4x16x32xbf16>
    "tpu.trace_start"() <{level = 10 : i32, message = "hqd,hkd->hqk"}> : () -> ()
    %cst_29 = arith.constant dense<0.000000e+00> : vector<4x16x16xf32>
    %127 = tpu.matmul %106, %116, %cst_29 {dimension_numbers = #tpu.dot_dimension_numbers<[2], [2], [1], [1], [0, 0, 0, 1, 1, 1], [0], [0]>} : vector<4x16x32xbf16>, vector<4x16x32xbf16>, vector<4x16x16xf32> -> vector<4x16x16xf32>
    "tpu.trace_stop"() : () -> ()
    %cst_30 = arith.constant dense<0xFF800000> : vector<4x16xf32>
    %128 = vector.multi_reduction <maximumf>, %127, %cst_30 [2] : vector<4x16x16xf32> to vector<4x16xf32>
    %129 = vector.shape_cast %128 : vector<4x16xf32> to vector<4x16x1xf32>
    %130 = vector.broadcast %129 : vector<4x16x1xf32> to vector<4x16x16xf32>
    %131 = arith.subf %127, %130 : vector<4x16x16xf32>
    %132 = math.exp %131 : vector<4x16x16xf32>
    %cst_31 = arith.constant dense<0.000000e+00> : vector<4x16xf32>
    %133 = vector.multi_reduction <add>, %132, %cst_31 [2] : vector<4x16x16xf32> to vector<4x16xf32>
    %134 = vector.shape_cast %133 : vector<4x16xf32> to vector<4x16x1xf32>
    %135 = tpu.reciprocal %134 {approx = true} : vector<4x16x1xf32> -> vector<4x16x1xf32>
    %136 = vector.broadcast %135 : vector<4x16x1xf32> to vector<4x16x16xf32>
    %137 = arith.mulf %132, %136 : vector<4x16x16xf32>
    %138 = arith.truncf %137 : vector<4x16x16xf32> to vector<4x16x16xbf16>
    "tpu.trace_start"() <{level = 10 : i32, message = "hqk,hkd->hqd"}> : () -> ()
    %cst_32 = arith.constant dense<0.000000e+00> : vector<4x16x32xf32>
    %139 = tpu.matmul %138, %126, %cst_32 {dimension_numbers = #tpu.dot_dimension_numbers<[2], [1], [1], [2], [0, 0, 0, 1, 1, 2], [0], [0]>} : vector<4x16x16xbf16>, vector<4x16x32xbf16>, vector<4x16x32xf32> -> vector<4x16x32xf32>
    "tpu.trace_stop"() : () -> ()
    %140 = vector.extract_strided_slice %139 {offsets = [0, 0, 0], sizes = [1, 16, 32], strides = [1, 1, 1]} : vector<4x16x32xf32> to vector<1x16x32xf32>
    %141 = vector.shape_cast %140 : vector<1x16x32xf32> to vector<16x32xf32>
    %142 = vector.extract_strided_slice %139 {offsets = [1, 0, 0], sizes = [1, 16, 32], strides = [1, 1, 1]} : vector<4x16x32xf32> to vector<1x16x32xf32>
    %143 = vector.shape_cast %142 : vector<1x16x32xf32> to vector<16x32xf32>
    %144 = vector.extract_strided_slice %139 {offsets = [2, 0, 0], sizes = [1, 16, 32], strides = [1, 1, 1]} : vector<4x16x32xf32> to vector<1x16x32xf32>
    %145 = vector.shape_cast %144 : vector<1x16x32xf32> to vector<16x32xf32>
    %146 = vector.extract_strided_slice %139 {offsets = [3, 0, 0], sizes = [1, 16, 32], strides = [1, 1, 1]} : vector<4x16x32xf32> to vector<1x16x32xf32>
    %147 = vector.shape_cast %146 : vector<1x16x32xf32> to vector<16x32xf32>
    %148 = tpu.concatenate %141, %143, %145, %147 in 1 : vector<16x32xf32>, vector<16x32xf32>, vector<16x32xf32>, vector<16x32xf32> -> vector<16x128xf32>
    %149 = tpu.concatenate %96, %148 in 0 : vector<16x128xf32>, vector<16x128xf32> -> vector<32x128xf32>
    %150 = arith.truncf %149 : vector<32x128xf32> to vector<32x128xbf16>
    %c0_33 = arith.constant 0 : index
    %c0_34 = arith.constant 0 : index
    %151 = vector.load %arg10[%c0_33, %c0_34] : memref<128x128xbf16, #tpu.memory_space<vmem>>, vector<128x128xbf16>
    %cst_35 = arith.constant dense<0.000000e+00> : vector<32x128xf32>
    %152 = tpu.matmul %150, %151, %cst_35 {dimension_numbers = #tpu.dot_dimension_numbers<[1], [0], [0], [1], [0, 0, 1, 1], [], []>} : vector<32x128xbf16>, vector<128x128xbf16>, vector<32x128xf32> -> vector<32x128xf32>
    %c0_36 = arith.constant 0 : index
    %c0_37 = arith.constant 0 : index
    %153 = vector.load %arg11[%c0_36, %c0_37] : memref<1x128xf32, #tpu.memory_space<vmem>>, vector<1x128xf32>
    %154 = vector.broadcast %153 : vector<1x128xf32> to vector<32x128xf32>
    %155 = arith.addf %152, %154 : vector<32x128xf32>
    %156 = arith.addf %1, %155 : vector<32x128xf32>
    %c0_38 = arith.constant 0 : index
    %c0_39 = arith.constant 0 : index
    %157 = vector.load %arg12[%c0_38, %c0_39] : memref<1x128xf32, #tpu.memory_space<vmem>>, vector<1x128xf32>
    %c0_40 = arith.constant 0 : index
    %c0_41 = arith.constant 0 : index
    %158 = vector.load %arg13[%c0_40, %c0_41] : memref<1x128xf32, #tpu.memory_space<vmem>>, vector<1x128xf32>
    %cst_42 = arith.constant dense<0.000000e+00> : vector<32xf32>
    %159 = vector.multi_reduction <add>, %156, %cst_42 [1] : vector<32x128xf32> to vector<32xf32>
    %160 = vector.shape_cast %159 : vector<32xf32> to vector<32x1xf32>
    %cst_43 = arith.constant 1.280000e+02 : f32
    %161 = vector.broadcast %cst_43 : f32 to vector<32x1xf32>
    %162 = arith.divf %160, %161 : vector<32x1xf32>
    %163 = vector.broadcast %162 : vector<32x1xf32> to vector<32x128xf32>
    %164 = arith.subf %156, %163 : vector<32x128xf32>
    %165 = arith.mulf %164, %164 : vector<32x128xf32>
    %cst_44 = arith.constant dense<0.000000e+00> : vector<32xf32>
    %166 = vector.multi_reduction <add>, %165, %cst_44 [1] : vector<32x128xf32> to vector<32xf32>
    %167 = vector.shape_cast %166 : vector<32xf32> to vector<32x1xf32>
    %cst_45 = arith.constant 1.280000e+02 : f32
    %168 = vector.broadcast %cst_45 : f32 to vector<32x1xf32>
    %169 = arith.divf %167, %168 : vector<32x1xf32>
    %170 = vector.broadcast %162 : vector<32x1xf32> to vector<32x128xf32>
    %171 = arith.subf %156, %170 : vector<32x128xf32>
    %cst_46 = arith.constant 9.99999997E-7 : f32
    %172 = vector.broadcast %cst_46 : f32 to vector<32x1xf32>
    %173 = arith.addf %169, %172 : vector<32x1xf32>
    %174 = math.rsqrt %173 : vector<32x1xf32>
    %175 = vector.broadcast %174 : vector<32x1xf32> to vector<32x128xf32>
    %176 = arith.mulf %171, %175 : vector<32x128xf32>
    %177 = vector.broadcast %157 : vector<1x128xf32> to vector<32x128xf32>
    %178 = arith.mulf %176, %177 : vector<32x128xf32>
    %179 = vector.broadcast %158 : vector<1x128xf32> to vector<32x128xf32>
    %180 = arith.addf %178, %179 : vector<32x128xf32>
    %181 = arith.truncf %180 : vector<32x128xf32> to vector<32x128xbf16>
    %c0_47 = arith.constant 0 : index
    %c0_48 = arith.constant 0 : index
    %182 = vector.load %arg14[%c0_47, %c0_48] : memref<128x256xbf16, #tpu.memory_space<vmem>>, vector<128x256xbf16>
    %cst_49 = arith.constant dense<0.000000e+00> : vector<32x256xf32>
    %183 = tpu.matmul %181, %182, %cst_49 {dimension_numbers = #tpu.dot_dimension_numbers<[1], [0], [0], [1], [0, 0, 1, 1], [], []>} : vector<32x128xbf16>, vector<128x256xbf16>, vector<32x256xf32> -> vector<32x256xf32>
    %c0_50 = arith.constant 0 : index
    %c0_51 = arith.constant 0 : index
    %184 = vector.load %arg15[%c0_50, %c0_51] : memref<1x256xf32, #tpu.memory_space<vmem>>, vector<1x256xf32>
    %185 = vector.broadcast %184 : vector<1x256xf32> to vector<32x256xf32>
    %186 = arith.addf %183, %185 : vector<32x256xf32>
    %cst_52 = arith.constant 5.000000e-01 : f32
    %187 = vector.broadcast %cst_52 : f32 to vector<32x256xf32>
    %188 = arith.mulf %187, %186 : vector<32x256xf32>
    %cst_53 = arith.constant 4.471500e-02 : f32
    %189 = vector.broadcast %cst_53 : f32 to vector<32x256xf32>
    %190 = arith.mulf %189, %186 : vector<32x256xf32>
    %191 = arith.mulf %190, %186 : vector<32x256xf32>
    %192 = arith.mulf %191, %186 : vector<32x256xf32>
    %193 = arith.addf %186, %192 : vector<32x256xf32>
    %cst_54 = arith.constant 0.797884583 : f32
    %194 = vector.broadcast %cst_54 : f32 to vector<32x256xf32>
    %195 = arith.mulf %194, %193 : vector<32x256xf32>
    %196 = math.tanh %195 : vector<32x256xf32>
    %cst_55 = arith.constant 1.000000e+00 : f32
    %197 = vector.broadcast %cst_55 : f32 to vector<32x256xf32>
    %198 = arith.addf %197, %196 : vector<32x256xf32>
    %199 = arith.mulf %188, %198 : vector<32x256xf32>
    %200 = arith.truncf %199 : vector<32x256xf32> to vector<32x256xbf16>
    %c0_56 = arith.constant 0 : index
    %c0_57 = arith.constant 0 : index
    %201 = vector.load %arg16[%c0_56, %c0_57] : memref<256x128xbf16, #tpu.memory_space<vmem>>, vector<256x128xbf16>
    %cst_58 = arith.constant dense<0.000000e+00> : vector<32x128xf32>
    %202 = tpu.matmul %200, %201, %cst_58 {dimension_numbers = #tpu.dot_dimension_numbers<[1], [0], [0], [1], [0, 0, 1, 1], [], []>} : vector<32x256xbf16>, vector<256x128xbf16>, vector<32x128xf32> -> vector<32x128xf32>
    %c0_59 = arith.constant 0 : index
    %c0_60 = arith.constant 0 : index
    %203 = vector.load %arg17[%c0_59, %c0_60] : memref<1x128xf32, #tpu.memory_space<vmem>>, vector<1x128xf32>
    %204 = vector.broadcast %203 : vector<1x128xf32> to vector<32x128xf32>
    %205 = arith.addf %202, %204 : vector<32x128xf32>
    %206 = arith.addf %156, %205 : vector<32x128xf32>
    %207 = vector.shape_cast %206 : vector<32x128xf32> to vector<2x16x128xf32>
    %c0_61 = arith.constant 0 : index
    %c0_62 = arith.constant 0 : index
    %c0_63 = arith.constant 0 : index
    %208 = vector.load %arg18[%c0_61, %c0_62, %c0_63] : memref<2x16x128xf32, #tpu.memory_space<vmem>>, vector<2x16x128xf32>
    tpu.vector_store %arg18[%c0_61, %c0_62, %c0_63], %207 {strides = array<i32>} : memref<2x16x128xf32, #tpu.memory_space<vmem>>, vector<2x16x128xf32>,
    return
  }
  func.func @transform_0(%arg0: i32) -> (i32, i32, i32) {
    %c0_i32 = arith.constant 0 : i32
    %c0_i32_0 = arith.constant 0 : i32
    %c0_i32_1 = arith.constant 0 : i32
    return %arg0, %c0_i32, %c0_i32_0 : i32, i32, i32
  }
  func.func @transform_1(%arg0: i32) -> (i32, i32) {
    %c0_i32 = arith.constant 0 : i32
    %c0_i32_0 = arith.constant 0 : i32
    %c0_i32_1 = arith.constant 0 : i32
    return %c0_i32, %c0_i32_0 : i32, i32
  }
  func.func @transform_2(%arg0: i32) -> (i32, i32) {
    %c0_i32 = arith.constant 0 : i32
    %c0_i32_0 = arith.constant 0 : i32
    %c0_i32_1 = arith.constant 0 : i32
    return %c0_i32, %c0_i32_0 : i32, i32
  }
  func.func @transform_3(%arg0: i32) -> (i32, i32) {
    %c0_i32 = arith.constant 0 : i32
    %c0_i32_0 = arith.constant 0 : i32
    %c0_i32_1 = arith.constant 0 : i32
    return %c0_i32, %c0_i32_0 : i32, i32
  }
  func.func @transform_4(%arg0: i32) -> (i32, i32) {
    %c0_i32 = arith.constant 0 : i32
    %c0_i32_0 = arith.constant 0 : i32
    %c0_i32_1 = arith.constant 0 : i32
    return %c0_i32, %c0_i32_0 : i32, i32
  }
  func.func @transform_5(%arg0: i32) -> (i32, i32) {
    %c0_i32 = arith.constant 0 : i32
    %c0_i32_0 = arith.constant 0 : i32
    %c0_i32_1 = arith.constant 0 : i32
    return %c0_i32, %c0_i32_0 : i32, i32
  }
  func.func @transform_6(%arg0: i32) -> (i32, i32) {
    %c0_i32 = arith.constant 0 : i32
    %c0_i32_0 = arith.constant 0 : i32
    %c0_i32_1 = arith.constant 0 : i32
    return %c0_i32, %c0_i32_0 : i32, i32
  }
  func.func @transform_7(%arg0: i32) -> (i32, i32) {
    %c0_i32 = arith.constant 0 : i32
    %c0_i32_0 = arith.constant 0 : i32
    %c0_i32_1 = arith.constant 0 : i32
    return %c0_i32, %c0_i32_0 : i32, i32
  }
  func.func @transform_8(%arg0: i32) -> (i32, i32) {
    %c0_i32 = arith.constant 0 : i32
    %c0_i32_0 = arith.constant 0 : i32
    %c0_i32_1 = arith.constant 0 : i32
    return %c0_i32, %c0_i32_0 : i32, i32
  }
  func.func @transform_9(%arg0: i32) -> (i32, i32) {
    %c0_i32 = arith.constant 0 : i32
    %c0_i32_0 = arith.constant 0 : i32
    %c0_i32_1 = arith.constant 0 : i32
    return %c0_i32, %c0_i32_0 : i32, i32
  }
  func.func @transform_10(%arg0: i32) -> (i32, i32) {
    %c0_i32 = arith.constant 0 : i32
    %c0_i32_0 = arith.constant 0 : i32
    %c0_i32_1 = arith.constant 0 : i32
    return %c0_i32, %c0_i32_0 : i32, i32
  }
  func.func @transform_11(%arg0: i32) -> (i32, i32) {
    %c0_i32 = arith.constant 0 : i32
    %c0_i32_0 = arith.constant 0 : i32
    %c0_i32_1 = arith.constant 0 : i32
    return %c0_i32, %c0_i32_0 : i32, i32
  }
  func.func @transform_12(%arg0: i32) -> (i32, i32) {
    %c0_i32 = arith.constant 0 : i32
    %c0_i32_0 = arith.constant 0 : i32
    %c0_i32_1 = arith.constant 0 : i32
    return %c0_i32, %c0_i32_0 : i32, i32
  }
  func.func @transform_13(%arg0: i32) -> (i32, i32) {
    %c0_i32 = arith.constant 0 : i32
    %c0_i32_0 = arith.constant 0 : i32
    %c0_i32_1 = arith.constant 0 : i32
    return %c0_i32, %c0_i32_0 : i32, i32
  }
  func.func @transform_14(%arg0: i32) -> (i32, i32) {
    %c0_i32 = arith.constant 0 : i32
    %c0_i32_0 = arith.constant 0 : i32
    %c0_i32_1 = arith.constant 0 : i32
    return %c0_i32, %c0_i32_0 : i32, i32
  }
  func.func @transform_15(%arg0: i32) -> (i32, i32) {
    %c0_i32 = arith.constant 0 : i32
    %c0_i32_0 = arith.constant 0 : i32
    %c0_i32_1 = arith.constant 0 : i32
    return %c0_i32, %c0_i32_0 : i32, i32
  }
  func.func @transform_16(%arg0: i32) -> (i32, i32) {
    %c0_i32 = arith.constant 0 : i32
    %c0_i32_0 = arith.constant 0 : i32
    %c0_i32_1 = arith.constant 0 : i32
    return %c0_i32, %c0_i32_0 : i32, i32
  }
  func.func @transform_17(%arg0: i32) -> (i32, i32, i32) {
    %c0_i32 = arith.constant 0 : i32
    %c0_i32_0 = arith.constant 0 : i32
    %c0_i32_1 = arith.constant 0 : i32
    return %arg0, %c0_i32, %c0_i32_0 : i32, i32, i32
  }
}

</mosaic_0001>

<llo_original>
// kernel: tpu_custom_call.1
$region0: #{tpu_custom_call.1}
  #allocation0 [shape = 'u32[]', space=smem, size = 0x4, offset = 0x4, fixed_abs, tag = 'smem constant byte address 0x4 - core index']
  #allocation1 [shape = 'u32[144,128]{1,0:T(1,128)}', space=vmem, size = 0x12000, scoped, tag = 'internal scratch']
  %s0 = inlined_call_operand.hbm [shape: f32[4,16,128], index: 0, kind: input, shape index: {}]
  %s1 = inlined_call_operand.vmem [shape: f32[1,128], index: 1, kind: input, shape index: {}]
  %s2 = inlined_call_operand.vmem [shape: f32[1,128], index: 2, kind: input, shape index: {}]
  %s3 = inlined_call_operand.hbm [shape: bf16[128,128], index: 3, kind: input, shape index: {}]
  %s4 = inlined_call_operand.vmem [shape: f32[1,128], index: 4, kind: input, shape index: {}]
  %s5 = inlined_call_operand.hbm [shape: bf16[128,128], index: 5, kind: input, shape index: {}]
  %s6 = inlined_call_operand.vmem [shape: f32[1,128], index: 6, kind: input, shape index: {}]
  %s7 = inlined_call_operand.hbm [shape: bf16[128,128], index: 7, kind: input, shape index: {}]
  %s8 = inlined_call_operand.vmem [shape: f32[1,128], index: 8, kind: input, shape index: {}]
  %s9 = inlined_call_operand.hbm [shape: bf16[128,128], index: 9, kind: input, shape index: {}]
  %s10 = inlined_call_operand.vmem [shape: f32[1,128], index: 10, kind: input, shape index: {}]
  %s11 = inlined_call_operand.vmem [shape: f32[1,128], index: 11, kind: input, shape index: {}]
  %s12 = inlined_call_operand.vmem [shape: f32[1,128], index: 12, kind: input, shape index: {}]
  %s13 = inlined_call_operand.hbm [shape: bf16[128,256], index: 13, kind: input, shape index: {}]
  %s14 = inlined_call_operand.vmem [shape: f32[1,256], index: 14, kind: input, shape index: {}]
  %s15 = inlined_call_operand.hbm [shape: bf16[256,128], index: 15, kind: input, shape index: {}]
  %s16 = inlined_call_operand.vmem [shape: f32[1,128], index: 16, kind: input, shape index: {}]
  %s17 = inlined_call_operand.hbm [shape: f32[4,16,128], index: 17, kind: output, shape index: {}]
  %s18 = sld [smem:[#allocation0]]
  $region129: #{tpu_custom_call.1} parent=0
    _
  %s20 = ssub.s32 1, %s18
  %s21 = scalar_select 0, %s20, %s18
  $region1: #{tpu_custom_call.1} parent=0
    #allocation2 [shape = 'u8[32768]{0}', space=vmem, size = 0x8000, scoped, tag = 'input window, operand 0']
    #allocation3 [shape = 's32[2]{0}', space=sflag, size = 0x8, scoped, tag = 'scoped memory for tpu_custom_call.1']
    #allocation4 [shape = 's32[2]{0}', space=sflag, size = 0x8, scoped, tag = 'scoped memory for tpu_custom_call.1']
    #allocation5 [shape = 'u8[32768]{0}', space=vmem, size = 0x8000, scoped, tag = 'input window, operand 3, single buffered']
    #allocation6 [shape = 's32[1]{0}', space=sflag, size = 0x4, scoped, tag = 'scoped memory for tpu_custom_call.1']
    #allocation7 [shape = 'u8[32768]{0}', space=vmem, size = 0x8000, scoped, tag = 'input window, operand 5, single buffered']
    #allocation8 [shape = 'u8[32768]{0}', space=vmem, size = 0x8000, scoped, tag = 'input window, operand 7, single buffered']
    #allocation9 [shape = 's32[1]{0}', space=sflag, size = 0x4, scoped, tag = 'scoped memory for tpu_custom_call.1']
    #allocation10 [shape = 'u8[32768]{0}', space=vmem, size = 0x8000, scoped, tag = 'input window, operand 9, single buffered']
    #allocation11 [shape = 'u8[65536]{0}', space=vmem, size = 0x10000, scoped, tag = 'input window, operand 13, single buffered']
    #allocation12 [shape = 's32[1]{0}', space=sflag, size = 0x4, scoped, tag = 'scoped memory for tpu_custom_call.1']
    #allocation13 [shape = 'u8[65536]{0}', space=vmem, size = 0x10000, scoped, tag = 'input window, operand 15, single buffered']
    #allocation14 [shape = 'u8[32768]{0}', space=vmem, size = 0x8000, scoped, tag = 'output window, operand 0']
    %22 = vsyncpa [#allocation3], 0
    %s23 = scalar_lea.sflag [#allocation3], 1
    %24 = vsyncpa %s23, 0
    %25 = vsyncpa [#allocation6], 0
    %26 = vsyncpa [#allocation9], 0
    %27 = vsyncpa [#allocation12], 0
    %28 = vsyncpa [#allocation4], 0
    %s29 = scalar_lea.sflag [#allocation4], 1
    %30 = vsyncpa %s29, 0
    loop: start=0, step=1, limit=4
    $region2: #{tpu_custom_call.1} parent=1 // loop_pre_header
      _
    $region3: #{tpu_custom_call.1} parent=1 // loop_header
      %s32 = sphi 0, %s36
      %p33 = scmp.ge.s32.totalorder %s32, 4
      %s42 = sphi 0, %s44
      %s45 = sphi 0, %s42
      %s46 = sphi 0, %s45
      %s62 = sphi 0, %s46
      %s66 = sphi 0, %s66
      %s68 = sphi 0, %s66
      %s69 = sphi 0, %s68
      %s83 = sphi 0, %s69
      %s87 = sphi 0, %s87
      %s89 = sphi 0, %s87
      %s90 = sphi 0, %s89
      %s104 = sphi 0, %s90
      %s108 = sphi 0, %s108
      %s110 = sphi 0, %s108
      %s111 = sphi 0, %s110
      %s125 = sphi 0, %s111
      %s129 = sphi 0, %s129
      %s131 = sphi 0, %s129
      %s132 = sphi 0, %s131
      %s146 = sphi 0, %s132
      %s150 = sphi 0, %s150
      %s152 = sphi 0, %s150
      %s153 = sphi 0, %s152
      %s167 = sphi 0, %s153
      %s171 = sphi 0, %s171
      %s173 = sphi 0, %s171
      %s174 = sphi 0, %s173
      %s188 = sphi 0, %s174
      %s192 = sphi 0, %s192
      %s194 = sphi 0, %s192
      %s195 = sphi 0, %s194
      %s209 = sphi 0, %s195
      %s213 = sphi 0, %s213
      %s215 = sphi 0, %s213
      %s216 = sphi 0, %s215
      %s230 = sphi 0, %s216
      %s234 = sphi 0, %s234
      %s236 = sphi 0, %s234
      %s237 = sphi 0, %s236
      %s251 = sphi 0, %s237
      %s255 = sphi 0, %s255
      %s257 = sphi 0, %s255
      %s258 = sphi 0, %s257
      %s272 = sphi 0, %s258
      %s276 = sphi 0, %s276
      %s278 = sphi 0, %s276
      %s279 = sphi 0, %s278
      %s293 = sphi 0, %s279
      %s297 = sphi 0, %s297
      %s299 = sphi 0, %s297
      %s300 = sphi 0, %s299
      %s314 = sphi 0, %s300
      %s318 = sphi 0, %s318
      %s320 = sphi 0, %s318
      %s321 = sphi 0, %s320
      %s335 = sphi 0, %s321
      %s339 = sphi 0, %s339
      %s341 = sphi 0, %s339
      %s342 = sphi 0, %s341
      %s356 = sphi 0, %s342
      %s360 = sphi 0, %s360
      %s362 = sphi 0, %s360
      %s363 = sphi 0, %s362
      %s377 = sphi 0, %s363
      %s381 = sphi 0, %s381
      %s383 = sphi 0, %s381
      %s384 = sphi 0, %s383
      %s398 = sphi 0, %s384
      %s404 = sphi 0, %s406
      %s407 = sphi 0, %s404
      %s408 = sphi 0, %s407
      %s424 = sphi 0, %s408
    $region4: #{tpu_custom_call.1} parent=1 // loop_header_branch
      %35 = sbr.rel (%p33) target = $region8
    $region5: #{tpu_custom_call.1} parent=1 // loop_body
      %s37 = ssub.s32 %s32, 1
      %s38 = ssub.s32 %s32, 2
      %s39 = sadd.s32 %s32, 1
      %s40 = ssub.s32 %s32, %s39
      %p41 = scmp.eq.s32.totalorder %s40, 0
      %s43 = sadd.s32 %s42, 1
      %s44 = scalar_select %p41, %s42, %s43
      %p47 = pneg %p41
      %p48 = scmp.eq.s32.totalorder %s32, 1
      %p49 = por %p47, %p48
      %p50 = scmp.ne.s32.totalorder %s42, %s45
      %p51 = scmp.eq.s32.totalorder %s32, 0
      %p52 = por %p50, %p51
      %p53 = scmp.ne.s32.totalorder %s42, %s45
      %p54 = scmp.eq.s32.totalorder %s37, 1
      %p55 = por %p53, %p54
      %p56 = scmp.ne.s32.totalorder %s45, %s46
      %p57 = scmp.eq.s32.totalorder %s37, 0
      %p58 = por %p56, %p57
      %p59 = scmp.ne.s32.totalorder %s45, %s46
      %p60 = scmp.eq.s32.totalorder %s38, 1
      %p61 = por %p59, %p60
      %p63 = scmp.ne.s32.totalorder %s46, %s62
      %p64 = scmp.eq.s32.totalorder %s38, 0
      %p65 = por %p63, %p64
      %s67 = sadd.s32 %s66, 1
      %p70 = scmp.eq.s32.totalorder %s32, 1
      %p71 = scmp.ne.s32.totalorder %s66, %s68
      %p72 = scmp.eq.s32.totalorder %s32, 0
      %p73 = por %p71, %p72
      %p74 = scmp.ne.s32.totalorder %s66, %s68
      %p75 = scmp.eq.s32.totalorder %s37, 1
      %p76 = por %p74, %p75
      %p77 = scmp.ne.s32.totalorder %s68, %s69
      %p78 = scmp.eq.s32.totalorder %s37, 0
      %p79 = por %p77, %p78
      %p80 = scmp.ne.s32.totalorder %s68, %s69
      %p81 = scmp.eq.s32.totalorder %s38, 1
      %p82 = por %p80, %p81
      %p84 = scmp.ne.s32.totalorder %s69, %s83
      %p85 = scmp.eq.s32.totalorder %s38, 0
      %p86 = por %p84, %p85
      %s88 = sadd.s32 %s87, 1
      %p91 = scmp.eq.s32.totalorder %s32, 1
      %p92 = scmp.ne.s32.totalorder %s87, %s89
      %p93 = scmp.eq.s32.totalorder %s32, 0
      %p94 = por %p92, %p93
      %p95 = scmp.ne.s32.totalorder %s87, %s89
      %p96 = scmp.eq.s32.totalorder %s37, 1
      %p97 = por %p95, %p96
      %p98 = scmp.ne.s32.totalorder %s89, %s90
      %p99 = scmp.eq.s32.totalorder %s37, 0
      %p100 = por %p98, %p99
      %p101 = scmp.ne.s32.totalorder %s89, %s90
      %p102 = scmp.eq.s32.totalorder %s38, 1
      %p103 = por %p101, %p102
      %p105 = scmp.ne.s32.totalorder %s90, %s104
      %p106 = scmp.eq.s32.totalorder %s38, 0
      %p107 = por %p105, %p106
      %s109 = sadd.s32 %s108, 1
      %p112 = scmp.eq.s32.totalorder %s32, 1
      %p113 = scmp.ne.s32.totalorder %s108, %s110
      %p114 = scmp.eq.s32.totalorder %s32, 0
      %p115 = por %p113, %p114
      %p116 = scmp.ne.s32.totalorder %s108, %s110
      %p117 = scmp.eq.s32.totalorder %s37, 1
      %p118 = por %p116, %p117
      %p119 = scmp.ne.s32.totalorder %s110, %s111
      %p120 = scmp.eq.s32.totalorder %s37, 0
      %p121 = por %p119, %p120
      %p122 = scmp.ne.s32.totalorder %s110, %s111
      %p123 = scmp.eq.s32.totalorder %s38, 1
      %p124 = por %p122, %p123
      %p126 = scmp.ne.s32.totalorder %s111, %s125
      %p127 = scmp.eq.s32.totalorder %s38, 0
      %p128 = por %p126, %p127
      %s130 = sadd.s32 %s129, 1
      %p133 = scmp.eq.s32.totalorder %s32, 1
      %p134 = scmp.ne.s32.totalorder %s129, %s131
      %p135 = scmp.eq.s32.totalorder %s32, 0
      %p136 = por %p134, %p135
      %p137 = scmp.ne.s32.totalorder %s129, %s131
      %p138 = scmp.eq.s32.totalorder %s37, 1
      %p139 = por %p137, %p138
      %p140 = scmp.ne.s32.totalorder %s131, %s132
      %p141 = scmp.eq.s32.totalorder %s37, 0
      %p142 = por %p140, %p141
      %p143 = scmp.ne.s32.totalorder %s131, %s132
      %p144 = scmp.eq.s32.totalorder %s38, 1
      %p145 = por %p143, %p144
      %p147 = scmp.ne.s32.totalorder %s132, %s146
      %p148 = scmp.eq.s32.totalorder %s38, 0
      %p149 = por %p147, %p148
      %s151 = sadd.s32 %s150, 1
      %p154 = scmp.eq.s32.totalorder %s32, 1
      %p155 = scmp.ne.s32.totalorder %s150, %s152
      %p156 = scmp.eq.s32.totalorder %s32, 0
      %p157 = por %p155, %p156
      %p158 = scmp.ne.s32.totalorder %s150, %s152
      %p159 = scmp.eq.s32.totalorder %s37, 1
      %p160 = por %p158, %p159
      %p161 = scmp.ne.s32.totalorder %s152, %s153
      %p162 = scmp.eq.s32.totalorder %s37, 0
      %p163 = por %p161, %p162
      %p164 = scmp.ne.s32.totalorder %s152, %s153
      %p165 = scmp.eq.s32.totalorder %s38, 1
      %p166 = por %p164, %p165
      %p168 = scmp.ne.s32.totalorder %s153, %s167
      %p169 = scmp.eq.s32.totalorder %s38, 0
      %p170 = por %p168, %p169
      %s172 = sadd.s32 %s171, 1
      %p175 = scmp.eq.s32.totalorder %s32, 1
      %p176 = scmp.ne.s32.totalorder %s171, %s173
      %p177 = scmp.eq.s32.totalorder %s32, 0
      %p178 = por %p176, %p177
      %p179 = scmp.ne.s32.totalorder %s171, %s173
      %p180 = scmp.eq.s32.totalorder %s37, 1
      %p181 = por %p179, %p180
      %p182 = scmp.ne.s32.totalorder %s173, %s174
      %p183 = scmp.eq.s32.totalorder %s37, 0
      %p184 = por %p182, %p183
      %p185 = scmp.ne.s32.totalorder %s173, %s174
      %p186 = scmp.eq.s32.totalorder %s38, 1
      %p187 = por %p185, %p186
      %p189 = scmp.ne.s32.totalorder %s174, %s188
      %p190 = scmp.eq.s32.totalorder %s38, 0
      %p191 = por %p189, %p190
      %s193 = sadd.s32 %s192, 1
      %p196 = scmp.eq.s32.totalorder %s32, 1
      %p197 = scmp.ne.s32.totalorder %s192, %s194
      %p198 = scmp.eq.s32.totalorder %s32, 0
      %p199 = por %p197, %p198
      %p200 = scmp.ne.s32.totalorder %s192, %s194
      %p201 = scmp.eq.s32.totalorder %s37, 1
      %p202 = por %p200, %p201
      %p203 = scmp.ne.s32.totalorder %s194, %s195
      %p204 = scmp.eq.s32.totalorder %s37, 0
      %p205 = por %p203, %p204
      %p206 = scmp.ne.s32.totalorder %s194, %s195
      %p207 = scmp.eq.s32.totalorder %s38, 1
      %p208 = por %p206, %p207
      %p210 = scmp.ne.s32.totalorder %s195, %s209
      %p211 = scmp.eq.s32.totalorder %s38, 0
      %p212 = por %p210, %p211
      %s214 = sadd.s32 %s213, 1
      %p217 = scmp.eq.s32.totalorder %s32, 1
      %p218 = scmp.ne.s32.totalorder %s213, %s215
      %p219 = scmp.eq.s32.totalorder %s32, 0
      %p220 = por %p218, %p219
      %p221 = scmp.ne.s32.totalorder %s213, %s215
      %p222 = scmp.eq.s32.totalorder %s37, 1
      %p223 = por %p221, %p222
      %p224 = scmp.ne.s32.totalorder %s215, %s216
      %p225 = scmp.eq.s32.totalorder %s37, 0
      %p226 = por %p224, %p225
      %p227 = scmp.ne.s32.totalorder %s215, %s216
      %p228 = scmp.eq.s32.totalorder %s38, 1
      %p229 = por %p227, %p228
      %p231 = scmp.ne.s32.totalorder %s216, %s230
      %p232 = scmp.eq.s32.totalorder %s38, 0
      %p233 = por %p231, %p232
      %s235 = sadd.s32 %s234, 1
      %p238 = scmp.eq.s32.totalorder %s32, 1
      %p239 = scmp.ne.s32.totalorder %s234, %s236
      %p240 = scmp.eq.s32.totalorder %s32, 0
      %p241 = por %p239, %p240
      %p242 = scmp.ne.s32.totalorder %s234, %s236
      %p243 = scmp.eq.s32.totalorder %s37, 1
      %p244 = por %p242, %p243
      %p245 = scmp.ne.s32.totalorder %s236, %s237
      %p246 = scmp.eq.s32.totalorder %s37, 0
      %p247 = por %p245, %p246
      %p248 = scmp.ne.s32.totalorder %s236, %s237
      %p249 = scmp.eq.s32.totalorder %s38, 1
      %p250 = por %p248, %p249
      %p252 = scmp.ne.s32.totalorder %s237, %s251
      %p253 = scmp.eq.s32.totalorder %s38, 0
      %p254 = por %p252, %p253
      %s256 = sadd.s32 %s255, 1
      %p259 = scmp.eq.s32.totalorder %s32, 1
      %p260 = scmp.ne.s32.totalorder %s255, %s257
      %p261 = scmp.eq.s32.totalorder %s32, 0
      %p262 = por %p260, %p261
      %p263 = scmp.ne.s32.totalorder %s255, %s257
      %p264 = scmp.eq.s32.totalorder %s37, 1
      %p265 = por %p263, %p264
      %p266 = scmp.ne.s32.totalorder %s257, %s258
      %p267 = scmp.eq.s32.totalorder %s37, 0
      %p268 = por %p266, %p267
      %p269 = scmp.ne.s32.totalorder %s257, %s258
      %p270 = scmp.eq.s32.totalorder %s38, 1
      %p271 = por %p269, %p270
      %p273 = scmp.ne.s32.totalorder %s258, %s272
      %p274 = scmp.eq.s32.totalorder %s38, 0
      %p275 = por %p273, %p274
      %s277 = sadd.s32 %s276, 1
      %p280 = scmp.eq.s32.totalorder %s32, 1
      %p281 = scmp.ne.s32.totalorder %s276, %s278
      %p282 = scmp.eq.s32.totalorder %s32, 0
      %p283 = por %p281, %p282
      %p284 = scmp.ne.s32.totalorder %s276, %s278
      %p285 = scmp.eq.s32.totalorder %s37, 1
      %p286 = por %p284, %p285
      %p287 = scmp.ne.s32.totalorder %s278, %s279
      %p288 = scmp.eq.s32.totalorder %s37, 0
      %p289 = por %p287, %p288
      %p290 = scmp.ne.s32.totalorder %s278, %s279
      %p291 = scmp.eq.s32.totalorder %s38, 1
      %p292 = por %p290, %p291
      %p294 = scmp.ne.s32.totalorder %s279, %s293
      %p295 = scmp.eq.s32.totalorder %s38, 0
      %p296 = por %p294, %p295
      %s298 = sadd.s32 %s297, 1
      %p301 = scmp.eq.s32.totalorder %s32, 1
      %p302 = scmp.ne.s32.totalorder %s297, %s299
      %p303 = scmp.eq.s32.totalorder %s32, 0
      %p304 = por %p302, %p303
      %p305 = scmp.ne.s32.totalorder %s297, %s299
      %p306 = scmp.eq.s32.totalorder %s37, 1
      %p307 = por %p305, %p306
      %p308 = scmp.ne.s32.totalorder %s299, %s300
      %p309 = scmp.eq.s32.totalorder %s37, 0
      %p310 = por %p308, %p309
      %p311 = scmp.ne.s32.totalorder %s299, %s300
      %p312 = scmp.eq.s32.totalorder %s38, 1
      %p313 = por %p311, %p312
      %p315 = scmp.ne.s32.totalorder %s300, %s314
      %p316 = scmp.eq.s32.totalorder %s38, 0
      %p317 = por %p315, %p316
      %s319 = sadd.s32 %s318, 1
      %p322 = scmp.eq.s32.totalorder %s32, 1
      %p323 = scmp.ne.s32.totalorder %s318, %s320
      %p324 = scmp.eq.s32.totalorder %s32, 0
      %p325 = por %p323, %p324
      %p326 = scmp.ne.s32.totalorder %s318, %s320
      %p327 = scmp.eq.s32.totalorder %s37, 1
      %p328 = por %p326, %p327
      %p329 = scmp.ne.s32.totalorder %s320, %s321
      %p330 = scmp.eq.s32.totalorder %s37, 0
      %p331 = por %p329, %p330
      %p332 = scmp.ne.s32.totalorder %s320, %s321
      %p333 = scmp.eq.s32.totalorder %s38, 1
      %p334 = por %p332, %p333
      %p336 = scmp.ne.s32.totalorder %s321, %s335
      %p337 = scmp.eq.s32.totalorder %s38, 0
      %p338 = por %p336, %p337
      %s340 = sadd.s32 %s339, 1
      %p343 = scmp.eq.s32.totalorder %s32, 1
      %p344 = scmp.ne.s32.totalorder %s339, %s341
      %p345 = scmp.eq.s32.totalorder %s32, 0
      %p346 = por %p344, %p345
      %p347 = scmp.ne.s32.totalorder %s339, %s341
      %p348 = scmp.eq.s32.totalorder %s37, 1
      %p349 = por %p347, %p348
      %p350 = scmp.ne.s32.totalorder %s341, %s342
      %p351 = scmp.eq.s32.totalorder %s37, 0
      %p352 = por %p350, %p351
      %p353 = scmp.ne.s32.totalorder %s341, %s342
      %p354 = scmp.eq.s32.totalorder %s38, 1
      %p355 = por %p353, %p354
      %p357 = scmp.ne.s32.totalorder %s342, %s356
      %p358 = scmp.eq.s32.totalorder %s38, 0
      %p359 = por %p357, %p358
      %s361 = sadd.s32 %s360, 1
      %p364 = scmp.eq.s32.totalorder %s32, 1
      %p365 = scmp.ne.s32.totalorder %s360, %s362
      %p366 = scmp.eq.s32.totalorder %s32, 0
      %p367 = por %p365, %p366
      %p368 = scmp.ne.s32.totalorder %s360, %s362
      %p369 = scmp.eq.s32.totalorder %s37, 1
      %p370 = por %p368, %p369
      %p371 = scmp.ne.s32.totalorder %s362, %s363
      %p372 = scmp.eq.s32.totalorder %s37, 0
      %p373 = por %p371, %p372
      %p374 = scmp.ne.s32.totalorder %s362, %s363
      %p375 = scmp.eq.s32.totalorder %s38, 1
      %p376 = por %p374, %p375
      %p378 = scmp.ne.s32.totalorder %s363, %s377
      %p379 = scmp.eq.s32.totalorder %s38, 0
      %p380 = por %p378, %p379
      %s382 = sadd.s32 %s381, 1
      %p385 = scmp.eq.s32.totalorder %s32, 1
      %p386 = scmp.ne.s32.totalorder %s381, %s383
      %p387 = scmp.eq.s32.totalorder %s32, 0
      %p388 = por %p386, %p387
      %p389 = scmp.ne.s32.totalorder %s381, %s383
      %p390 = scmp.eq.s32.totalorder %s37, 1
      %p391 = por %p389, %p390
      %p392 = scmp.ne.s32.totalorder %s383, %s384
      %p393 = scmp.eq.s32.totalorder %s37, 0
      %p394 = por %p392, %p393
      %p395 = scmp.ne.s32.totalorder %s383, %s384
      %p396 = scmp.eq.s32.totalorder %s38, 1
      %p397 = por %p395, %p396
      %p399 = scmp.ne.s32.totalorder %s384, %s398
      %p400 = scmp.eq.s32.totalorder %s38, 0
      %p401 = por %p399, %p400
      %s402 = ssub.s32 %s32, %s39
      %p403 = scmp.eq.s32.totalorder %s402, 0
      %s405 = sadd.s32 %s404, 1
      %s406 = scalar_select %p403, %s404, %s405
      %p409 = pneg %p403
      %p410 = scmp.eq.s32.totalorder %s32, 1
      %p411 = por %p409, %p410
      %p412 = scmp.ne.s32.totalorder %s404, %s407
      %p413 = scmp.eq.s32.totalorder %s32, 0
      %p414 = por %p412, %p413
      %p415 = scmp.ne.s32.totalorder %s404, %s407
      %p416 = scmp.eq.s32.totalorder %s37, 1
      %p417 = por %p415, %p416
      %p418 = scmp.ne.s32.totalorder %s407, %s408
      %p419 = scmp.eq.s32.totalorder %s37, 0
      %p420 = por %p418, %p419
      %p421 = scmp.ne.s32.totalorder %s407, %s408
      %p422 = scmp.eq.s32.totalorder %s38, 1
      %p423 = por %p421, %p422
      %p425 = scmp.ne.s32.totalorder %s408, %s424
      %p426 = scmp.eq.s32.totalorder %s38, 0
      %p427 = por %p425, %p426
      %p428 = scmp.le.s32.totalorder 1, %s32
      %p429 = scmp.lt.s32.totalorder %s32, 3
      %p430 = pnand %p428, %p429
      %p431 = pneg %p430
      // Predicated region
      $region9: #{tpu_custom_call.1} parent=5 // pred_check
        _
      $region10: #{tpu_custom_call.1} parent=5 // pred_check_branch
        %433 = sbr.rel (%p430) target = $region12
      $region11: #{tpu_custom_call.1} parent=5 // pred_region
        %s434 = ssub.s32 %s32, 1
        // Predicated region
        $region13: #{tpu_custom_call.1} parent=11 // pred_check
          %p435 = pneg %p79
        $region14: #{tpu_custom_call.1} parent=11 // pred_check_branch
          %437 = sbr.rel (%p435) target = $region16
        $region15: #{tpu_custom_call.1} parent=11 // pred_region
          _
        $region16: #{tpu_custom_call.1} parent=11 // pred_fallthru
          _
        // Predicated region
        $region17: #{tpu_custom_call.1} parent=11 // pred_check
          %p438 = pneg %p100
        $region18: #{tpu_custom_call.1} parent=11 // pred_check_branch
          %440 = sbr.rel (%p438) target = $region20
        $region19: #{tpu_custom_call.1} parent=11 // pred_region
          _
        $region20: #{tpu_custom_call.1} parent=11 // pred_fallthru
          _
        // Predicated region
        $region21: #{tpu_custom_call.1} parent=11 // pred_check
          %p441 = pneg %p121
        $region22: #{tpu_custom_call.1} parent=11 // pred_check_branch
          %443 = sbr.rel (%p441) target = $region24
        $region23: #{tpu_custom_call.1} parent=11 // pred_region
          %s445 = ssub.s32 1024, 1024
          %446 = vsyncadd [#allocation6], %s445
          %s447 = sshll.u32 [#allocation5], 4
          %s448 = int_to_ptr.vmem [resolvable:$true] %s447
          %453 = dma.hbm_to_vmem [thread:$0]  %s3, 1024, %s448, [#allocation6], 64, 64, 4
        $region24: #{tpu_custom_call.1} parent=11 // pred_fallthru
          _
        // Predicated region
        $region25: #{tpu_custom_call.1} parent=11 // pred_check
          %p454 = pneg %p142
        $region26: #{tpu_custom_call.1} parent=11 // pred_check_branch
          %456 = sbr.rel (%p454) target = $region28
        $region27: #{tpu_custom_call.1} parent=11 // pred_region
          _
        $region28: #{tpu_custom_call.1} parent=11 // pred_fallthru
          _
        // Predicated region
        $region29: #{tpu_custom_call.1} parent=11 // pred_check
          %p457 = pneg %p163
        $region30: #{tpu_custom_call.1} parent=11 // pred_check_branch
          %459 = sbr.rel (%p457) target = $region32
        $region31: #{tpu_custom_call.1} parent=11 // pred_region
          %s461 = ssub.s32 1024, 1024
          %462 = vsyncadd [#allocation6], %s461
          %s463 = sshll.u32 [#allocation7], 4
          %s464 = int_to_ptr.vmem [resolvable:$true] %s463
          %469 = dma.hbm_to_vmem [thread:$0]  %s5, 1024, %s464, [#allocation6], 64, 64, 4
        $region32: #{tpu_custom_call.1} parent=11 // pred_fallthru
          _
        // Predicated region
        $region33: #{tpu_custom_call.1} parent=11 // pred_check
          %p470 = pneg %p184
        $region34: #{tpu_custom_call.1} parent=11 // pred_check_branch
          %472 = sbr.rel (%p470) target = $region36
        $region35: #{tpu_custom_call.1} parent=11 // pred_region
          _
        $region36: #{tpu_custom_call.1} parent=11 // pred_fallthru
          _
        // Predicated region
        $region37: #{tpu_custom_call.1} parent=11 // pred_check
          %p473 = pneg %p205
        $region38: #{tpu_custom_call.1} parent=11 // pred_check_branch
          %475 = sbr.rel (%p473) target = $region40
        $region39: #{tpu_custom_call.1} parent=11 // pred_region
          %s477 = ssub.s32 1024, 1024
          %478 = vsyncadd [#allocation9], %s477
          %s479 = sshll.u32 [#allocation8], 4
          %s480 = int_to_ptr.vmem [resolvable:$true] %s479
          %485 = dma.hbm_to_vmem [thread:$0]  %s7, 1024, %s480, [#allocation9], 64, 64, 4
        $region40: #{tpu_custom_call.1} parent=11 // pred_fallthru
          _
        // Predicated region
        $region41: #{tpu_custom_call.1} parent=11 // pred_check
          %p486 = pneg %p226
        $region42: #{tpu_custom_call.1} parent=11 // pred_check_branch
          %488 = sbr.rel (%p486) target = $region44
        $region43: #{tpu_custom_call.1} parent=11 // pred_region
          _
        $region44: #{tpu_custom_call.1} parent=11 // pred_fallthru
          _
        // Predicated region
        $region45: #{tpu_custom_call.1} parent=11 // pred_check
          %p489 = pneg %p247
        $region46: #{tpu_custom_call.1} parent=11 // pred_check_branch
          %491 = sbr.rel (%p489) target = $region48
        $region47: #{tpu_custom_call.1} parent=11 // pred_region
          %s493 = ssub.s32 1024, 1024
          %494 = vsyncadd [#allocation9], %s493
          %s495 = sshll.u32 [#allocation10], 4
          %s496 = int_to_ptr.vmem [resolvable:$true] %s495
          %501 = dma.hbm_to_vmem [thread:$0]  %s9, 1024, %s496, [#allocation9], 64, 64, 4
        $region48: #{tpu_custom_call.1} parent=11 // pred_fallthru
          _
        // Predicated region
        $region49: #{tpu_custom_call.1} parent=11 // pred_check
          %p502 = pneg %p268
        $region50: #{tpu_custom_call.1} parent=11 // pred_check_branch
          %504 = sbr.rel (%p502) target = $region52
        $region51: #{tpu_custom_call.1} parent=11 // pred_region
          _
        $region52: #{tpu_custom_call.1} parent=11 // pred_fallthru
          _
        // Predicated region
        $region53: #{tpu_custom_call.1} parent=11 // pred_check
          %p505 = pneg %p289
        $region54: #{tpu_custom_call.1} parent=11 // pred_check_branch
          %507 = sbr.rel (%p505) target = $region56
        $region55: #{tpu_custom_call.1} parent=11 // pred_region
          _
        $region56: #{tpu_custom_call.1} parent=11 // pred_fallthru
          _
        // Predicated region
        $region57: #{tpu_custom_call.1} parent=11 // pred_check
          %p508 = pneg %p310
        $region58: #{tpu_custom_call.1} parent=11 // pred_check_branch
          %510 = sbr.rel (%p508) target = $region60
        $region59: #{tpu_custom_call.1} parent=11 // pred_region
          _
        $region60: #{tpu_custom_call.1} parent=11 // pred_fallthru
          _
        // Predicated region
        $region61: #{tpu_custom_call.1} parent=11 // pred_check
          %p511 = pneg %p331
        $region62: #{tpu_custom_call.1} parent=11 // pred_check_branch
          %513 = sbr.rel (%p511) target = $region64
        $region63: #{tpu_custom_call.1} parent=11 // pred_region
          %s515 = ssub.s32 2048, 2048
          %516 = vsyncadd [#allocation12], %s515
          %s517 = sshll.u32 [#allocation11], 4
          %s518 = int_to_ptr.vmem [resolvable:$true] %s517
          %523 = dma.hbm_to_vmem [thread:$0]  %s13, 2048, %s518, [#allocation12], 128, 128, 8
        $region64: #{tpu_custom_call.1} parent=11 // pred_fallthru
          _
        // Predicated region
        $region65: #{tpu_custom_call.1} parent=11 // pred_check
          %p524 = pneg %p352
        $region66: #{tpu_custom_call.1} parent=11 // pred_check_branch
          %526 = sbr.rel (%p524) target = $region68
        $region67: #{tpu_custom_call.1} parent=11 // pred_region
          _
        $region68: #{tpu_custom_call.1} parent=11 // pred_fallthru
          _
        // Predicated region
        $region69: #{tpu_custom_call.1} parent=11 // pred_check
          %p527 = pneg %p373
        $region70: #{tpu_custom_call.1} parent=11 // pred_check_branch
          %529 = sbr.rel (%p527) target = $region72
        $region71: #{tpu_custom_call.1} parent=11 // pred_region
          %s531 = ssub.s32 2048, 2048
          %532 = vsyncadd [#allocation12], %s531
          %s533 = sshll.u32 [#allocation13], 4
          %s534 = int_to_ptr.vmem [resolvable:$true] %s533
          %539 = dma.hbm_to_vmem [thread:$0]  %s15, 2048, %s534, [#allocation12], 64, 64, 4
        $region72: #{tpu_custom_call.1} parent=11 // pred_fallthru
          _
        // Predicated region
        $region73: #{tpu_custom_call.1} parent=11 // pred_check
          %p540 = pneg %p394
        $region74: #{tpu_custom_call.1} parent=11 // pred_check_branch
          %542 = sbr.rel (%p540) target = $region76
        $region75: #{tpu_custom_call.1} parent=11 // pred_region
          _
        $region76: #{tpu_custom_call.1} parent=11 // pred_fallthru
          _
      $region12: #{tpu_custom_call.1} parent=5 // pred_fallthru
        _
      %p543 = scmp.lt.s32.totalorder %s32, 2
      // Predicated region
      $region77: #{tpu_custom_call.1} parent=5 // pred_check
        %p544 = pneg %p543
      $region78: #{tpu_custom_call.1} parent=5 // pred_check_branch
        %546 = sbr.rel (%p544) target = $region80
      $region79: #{tpu_custom_call.1} parent=5 // pred_region
        // Predicated region
        $region81: #{tpu_custom_call.1} parent=79 // pred_check
          %p547 = pneg %p52
        $region82: #{tpu_custom_call.1} parent=79 // pred_check_branch
          %549 = sbr.rel (%p547) target = $region84
        $region83: #{tpu_custom_call.1} parent=79 // pred_region
          %s550 = sand.u32 %s42, 1
          %s551 = scalar_lea.sflag [#allocation3], %s550
          %s552 = sand.u32 %s42, 1
          %s553 = smul.addr %s552, 32
          %s554 = scalar_lea.vmem [#allocation2], %s553
          %s555 = smul.u32 2, %s32
          %s557 = ssub.s32 512, 512
          %558 = vsyncadd %s551, %s557
          %s559 = smul.addr %s555, 2
          %s560 = smul.addr %s559, 128
          %s561 = scalar_lea.hbm %s0, %s560
          %s562 = sshll.u32 %s554, 4
          %s563 = int_to_ptr.vmem [resolvable:$true] %s562
          %568 = dma.hbm_to_vmem [thread:$0]  %s561, 512, %s563, %s551, 128, 128, 8
        $region84: #{tpu_custom_call.1} parent=79 // pred_fallthru
          _
      $region80: #{tpu_custom_call.1} parent=5 // pred_fallthru
        _
      %p569 = scmp.le.s32.totalorder 1, %s32
      %p570 = scmp.lt.s32.totalorder %s32, 3
      %p571 = pnand %p569, %p570
      %p572 = pneg %p571
      // Predicated region
      $region85: #{tpu_custom_call.1} parent=5 // pred_check
        _
      $region86: #{tpu_custom_call.1} parent=5 // pred_check_branch
        %574 = sbr.rel (%p571) target = $region88
      $region87: #{tpu_custom_call.1} parent=5 // pred_region
        %s575 = ssub.s32 %s32, 1
        %s576 = sand.u32 %s45, 1
        %s577 = scalar_lea.sflag [#allocation3], %s576
        %s578 = sand.u32 %s45, 1
        %s579 = smul.addr %s578, 32
        %s580 = scalar_lea.vmem [#allocation2], %s579
        // Predicated region
        $region89: #{tpu_custom_call.1} parent=87 // pred_check
          %p581 = pneg %p58
        $region90: #{tpu_custom_call.1} parent=87 // pred_check_branch
          %583 = sbr.rel (%p581) target = $region92
        $region91: #{tpu_custom_call.1} parent=87 // pred_region
          %584 = dma.done %s577, 512
        $region92: #{tpu_custom_call.1} parent=87 // pred_fallthru
          _
        // Predicated region
        $region93: #{tpu_custom_call.1} parent=87 // pred_check
          %p585 = pneg %p121
        $region94: #{tpu_custom_call.1} parent=87 // pred_check_branch
          %587 = sbr.rel (%p585) target = $region96
        $region95: #{tpu_custom_call.1} parent=87 // pred_region
          %588 = dma.done [#allocation6], 1024
        $region96: #{tpu_custom_call.1} parent=87 // pred_fallthru
          _
        // Predicated region
        $region97: #{tpu_custom_call.1} parent=87 // pred_check
          %p589 = pneg %p163
        $region98: #{tpu_custom_call.1} parent=87 // pred_check_branch
          %591 = sbr.rel (%p589) target = $region100
        $region99: #{tpu_custom_call.1} parent=87 // pred_region
          %592 = dma.done [#allocation6], 1024
        $region100: #{tpu_custom_call.1} parent=87 // pred_fallthru
          _
        // Predicated region
        $region101: #{tpu_custom_call.1} parent=87 // pred_check
          %p593 = pneg %p205
        $region102: #{tpu_custom_call.1} parent=87 // pred_check_branch
          %595 = sbr.rel (%p593) target = $region104
        $region103: #{tpu_custom_call.1} parent=87 // pred_region
          %596 = dma.done [#allocation9], 1024
        $region104: #{tpu_custom_call.1} parent=87 // pred_fallthru
          _
        // Predicated region
        $region105: #{tpu_custom_call.1} parent=87 // pred_check
          %p597 = pneg %p247
        $region106: #{tpu_custom_call.1} parent=87 // pred_check_branch
          %599 = sbr.rel (%p597) target = $region108
        $region107: #{tpu_custom_call.1} parent=87 // pred_region
          %600 = dma.done [#allocation9], 1024
        $region108: #{tpu_custom_call.1} parent=87 // pred_fallthru
          _
        // Predicated region
        $region109: #{tpu_custom_call.1} parent=87 // pred_check
          %p601 = pneg %p331
        $region110: #{tpu_custom_call.1} parent=87 // pred_check_branch
          %603 = sbr.rel (%p601) target = $region112
        $region111: #{tpu_custom_call.1} parent=87 // pred_region
          %604 = dma.done [#allocation12], 2048
        $region112: #{tpu_custom_call.1} parent=87 // pred_fallthru
          _
        // Predicated region
        $region113: #{tpu_custom_call.1} parent=87 // pred_check
          %p605 = pneg %p373
        $region114: #{tpu_custom_call.1} parent=87 // pred_check_branch
          %607 = sbr.rel (%p605) target = $region116
        $region115: #{tpu_custom_call.1} parent=87 // pred_region
          %608 = dma.done [#allocation12], 2048
        $region116: #{tpu_custom_call.1} parent=87 // pred_fallthru
          _
        %s609 = sand.u32 %s45, 1
        %s610 = scalar_lea.sflag [#allocation3], %s609
        %s611 = sand.u32 %s45, 1
        %s612 = smul.addr %s611, 32
        %s613 = scalar_lea.vmem [#allocation2], %s612
        %p614 = pneg %p58
        %p615 = pneg %p55
        %p616 = pneg %p79
        %p617 = pneg %p76
        %p618 = pneg %p100
        %p619 = pneg %p97
        %p620 = pneg %p121
        %p621 = pneg %p118
        %p622 = pneg %p142
        %p623 = pneg %p139
        %p624 = pneg %p163
        %p625 = pneg %p160
        %p626 = pneg %p184
        %p627 = pneg %p181
        %p628 = pneg %p205
        %p629 = pneg %p202
        %p630 = pneg %p226
        %p631 = pneg %p223
        %p632 = pneg %p247
        %p633 = pneg %p244
        %p634 = pneg %p268
        %p635 = pneg %p265
        %p636 = pneg %p289
        %p637 = pneg %p286
        %p638 = pneg %p310
        %p639 = pneg %p307
        %p640 = pneg %p331
        %p641 = pneg %p328
        %p642 = pneg %p352
        %p643 = pneg %p349
        %p644 = pneg %p373
        %p645 = pneg %p370
        %p646 = pneg %p394
        %p647 = pneg %p391
        %p648 = pneg %p420
        %p649 = pneg %p417
        %s650 = sand.u32 %s407, 1
        %s651 = scalar_lea.sflag [#allocation4], %s650
        %s652 = sand.u32 %s407, 1
        %s653 = smul.addr %s652, 32
        %s654 = scalar_lea.vmem [#allocation14], %s653
        %s655 = smul.u32 2, %s37
        %s656 = smul.u32 2, %s37
        %v658 = vld [vmem:[%s580] sm:$0xff]
        %v659 = vld [vmem:[%s580 + $0x8] sm:$0xff]
        %v660 = vld [vmem:[%s580 + $0x10] sm:$0xff]
        %v661 = vld [vmem:[%s580 + $0x18] sm:$0xff]
        %v662 = vld [vmem:[%s1] sm:$0x1]
        %v663 = vld [vmem:[%s2] sm:$0x1]
        %664 = vadd.xlane.f32.xlu0 %v658
        %v665 = vpop.xlane.xlu0 %664
        %666 = vadd.xlane.f32.xlu0 %v659
        %v667 = vpop.xlane.xlu0 %666
        %668 = vadd.xlane.f32.xlu0 %v660
        %v669 = vpop.xlane.xlu0 %668
        %670 = vadd.xlane.f32.xlu0 %v661
        %v671 = vpop.xlane.xlu0 %670
        %v672 = vrcp.pop 128.0
        %v673 = vmul.f32 %v665, %v672
        %v674 = vmul.f32 %v667, %v672
        %v675 = vmul.f32 %v669, %v672
        %v676 = vmul.f32 %v671, %v672
        %v677 = vsub.f32 %v658, %v673
        %v678 = vsub.f32 %v659, %v674
        %v679 = vsub.f32 %v660, %v675
        %v680 = vsub.f32 %v661, %v676
        %v681 = vmul.f32 %v677, %v677
        %v682 = vmul.f32 %v678, %v678
        %v683 = vmul.f32 %v679, %v679
        %v684 = vmul.f32 %v680, %v680
        %685 = vadd.xlane.f32.xlu0 %v681
        %v686 = vpop.xlane.xlu0 %685
        %687 = vadd.xlane.f32.xlu0 %v682
        %v688 = vpop.xlane.xlu0 %687
        %689 = vadd.xlane.f32.xlu0 %v683
        %v690 = vpop.xlane.xlu0 %689
        %691 = vadd.xlane.f32.xlu0 %v684
        %v692 = vpop.xlane.xlu0 %691
        %v693 = vmul.f32 %v686, %v672
        %v694 = vmul.f32 %v688, %v672
        %v695 = vmul.f32 %v690, %v672
        %v696 = vmul.f32 %v692, %v672
        %v697 = vadd.f32 %v693, 1e-06
        %v698 = vadd.f32 %v694, 1e-06
        %v699 = vadd.f32 %v695, 1e-06
        %v700 = vadd.f32 %v696, 1e-06
        %v701 = vrsqrt.pop %v697
        %v702 = vrsqrt.pop %v698
        %v703 = vrsqrt.pop %v699
        %v704 = vrsqrt.pop %v700
        %v705 = vmul.f32 %v677, %v701
        %v706 = vmul.f32 %v678, %v702
        %v707 = vmul.f32 %v679, %v703
        %v708 = vmul.f32 %v680, %v704
        %v710 = vlaneseq
        %v711 = vshrl.u32 %v710, 7
        %v712 = vsub.s32 0, %v711
        %v713 = vrot.slane %v662, %v712
        %v715 = vmul.f32 %v705, %v713
        %v716 = vmul.f32 %v706, %v713
        %v717 = vmul.f32 %v707, %v713
        %v718 = vmul.f32 %v708, %v713
        %v720 = vlaneseq
        %v721 = vshrl.u32 %v720, 7
        %v722 = vsub.s32 0, %v721
        %v723 = vrot.slane %v663, %v722
        %v725 = vadd.f32 %v715, %v723
        %v726 = vadd.f32 %v716, %v723
        %v727 = vadd.f32 %v717, %v723
        %v728 = vadd.f32 %v718, %v723
        %v729 = vpack.c.bf16 %v726, %v725
        %v730 = vpack.c.bf16 %v728, %v727
        %v731 = vld [vmem:[#allocation5] sm:$0xf]
        %v732 = vld [vmem:[#allocation5 + $0x4] sm:$0xf]
        %v733 = vld [vmem:[#allocation5 + $0x8] sm:$0xf]
        %v734 = vld [vmem:[#allocation5 + $0xc] sm:$0xf]
        %v735 = vld [vmem:[#allocation5 + $0x10] sm:$0xf]
        %v736 = vld [vmem:[#allocation5 + $0x14] sm:$0xf]
        %v737 = vld [vmem:[#allocation5 + $0x18] sm:$0xf]
        %v738 = vld [vmem:[#allocation5 + $0x1c] sm:$0xf]
        %v739 = vld [vmem:[#allocation5 + $0x20] sm:$0xf]
        %v740 = vld [vmem:[#allocation5 + $0x24] sm:$0xf]
        %v741 = vld [vmem:[#allocation5 + $0x28] sm:$0xf]
        %v742 = vld [vmem:[#allocation5 + $0x2c] sm:$0xf]
        %v743 = vld [vmem:[#allocation5 + $0x30] sm:$0xf]
        %v744 = vld [vmem:[#allocation5 + $0x34] sm:$0xf]
        %v745 = vld [vmem:[#allocation5 + $0x38] sm:$0xf]
        %v746 = vld [vmem:[#allocation5 + $0x3c] sm:$0xf]
        %v747 = vld [vmem:[%s4] sm:$0x1]
        %v749 = vlaneseq
        %v750 = vshrl.u32 %v749, 7
        %v751 = vsub.s32 0, %v750
        %v752 = vrot.slane %v747, %v751
        %v770 = vunpack.c.l.b16 %v731
        %v771 = vunpack.c.l.b16 %v732
        %v772 = vunpack.c.l.b16 %v733
        %v773 = vunpack.c.l.b16 %v734
        %v774 = vunpack.c.l.b16 %v735
        %v775 = vunpack.c.l.b16 %v736
        %v776 = vunpack.c.l.b16 %v737
        %v777 = vunpack.c.l.b16 %v738
        %v778 = vunpack.c.l.b16 %v739
        %v779 = vunpack.c.l.b16 %v740
        %v780 = vunpack.c.l.b16 %v741
        %v781 = vunpack.c.l.b16 %v742
        %v782 = vunpack.c.l.b16 %v743
        %v783 = vunpack.c.l.b16 %v744
        %v784 = vunpack.c.l.b16 %v745
        %v785 = vunpack.c.l.b16 %v746
        %v786 = vpack.c.b16 %v771, %v770
        %v787 = vpack.c.b16 %v773, %v772
        %v788 = vpack.c.b16 %v775, %v774
        %v789 = vpack.c.b16 %v777, %v776
        %v790 = vpack.c.b16 %v779, %v778
        %v791 = vpack.c.b16 %v781, %v780
        %v792 = vpack.c.b16 %v783, %v782
        %v793 = vpack.c.b16 %v785, %v784
        %802 = vmatprep.subr.bf16.mxu0 0
        %803 = vmatpush1.bf16.msra.mxu0 %v786
        %804 = vmatprep.subr.bf16.mxu0 0
        %805 = vmatpush1.bf16.msra.mxu0 %v787
        %806 = vmatprep.subr.bf16.mxu0 0
        %807 = vmatpush1.bf16.msra.mxu0 %v788
        %808 = vmatprep.subr.bf16.mxu0 0
        %809 = vmatpush1.bf16.msra.mxu0 %v789
        %810 = vmatprep.subr.bf16.mxu0 0
        %811 = vmatpush1.bf16.msra.mxu0 %v790
        %812 = vmatprep.subr.bf16.mxu0 0
        %813 = vmatpush1.bf16.msra.mxu0 %v791
        %814 = vmatprep.subr.bf16.mxu0 0
        %815 = vmatpush1.bf16.msra.mxu0 %v792
        %816 = vmatprep.subr.bf16.mxu0 0
        %817 = vmatpush1.bf16.msra.mxu0 %v793
        %818 = vmatprep.subr.bf16.mxu0 0
        %819 = vmatpush1.bf16.msra.mxu0 0
        %820 = vmatprep.subr.bf16.mxu0 0
        %821 = vmatpush1.bf16.msra.mxu0 0
        %822 = vmatprep.subr.bf16.mxu0 0
        %823 = vmatpush1.bf16.msra.mxu0 0
        %824 = vmatprep.subr.bf16.mxu0 0
        %825 = vmatpush1.bf16.msra.mxu0 0
        %826 = vmatprep.subr.bf16.mxu0 0
        %827 = vmatpush1.bf16.msra.mxu0 0
        %828 = vmatprep.subr.bf16.mxu0 0
        %829 = vmatpush1.bf16.msra.mxu0 0
        %830 = vmatprep.subr.bf16.mxu0 0
        %831 = vmatpush1.bf16.msra.mxu0 0
        %832 = vmatprep.subr.bf16.mxu0 0
        %833 = vmatpush1.bf16.msra.mxu0 0
        %834 = vmatprep.mubr.bf16.mxu0 0
        %835 = vmatmul.mubr.bf16.gmra.mrb[0].mxu0 %v729
        %v836 = vpop.f32.mrb[0].mxu0
        %v837 = vadd.f32 %v752, %v836
        %v838 = vpop.f32.mrb[0].mxu0
        %v839 = vpop.f32.mrb[0].mxu0
        %v840 = vadd.f32 %v752, %v839
        %v841 = vpop.f32.mrb[0].mxu0
        %842 = vmatprep.mubr.bf16.mxu0 0
        %843 = vmatmul.mubr.bf16.gmra.mrb[0].mxu0 %v730
        %v844 = vpop.f32.mrb[0].mxu0
        %v845 = vadd.f32 %v752, %v844
        %v846 = vpop.f32.mrb[0].mxu0
        %v847 = vpop.f32.mrb[0].mxu0
        %v848 = vadd.f32 %v752, %v847
        %v849 = vpop.f32.mrb[0].mxu0
        %850 = vdwg.mxu0
        %v851 = vpack.c.bf16 %v840, %v837
        %v852 = vpack.c.bf16 %v848, %v845
        %v853 = vld [vmem:[#allocation7] sm:$0xf]
        %v854 = vld [vmem:[#allocation7 + $0x4] sm:$0xf]
        %v855 = vld [vmem:[#allocation7 + $0x8] sm:$0xf]
        %v856 = vld [vmem:[#allocation7 + $0xc] sm:$0xf]
        %v857 = vld [vmem:[#allocation7 + $0x10] sm:$0xf]
        %v858 = vld [vmem:[#allocation7 + $0x14] sm:$0xf]
        %v859 = vld [vmem:[#allocation7 + $0x18] sm:$0xf]
        %v860 = vld [vmem:[#allocation7 + $0x1c] sm:$0xf]
        %v861 = vld [vmem:[#allocation7 + $0x20] sm:$0xf]
        %v862 = vld [vmem:[#allocation7 + $0x24] sm:$0xf]
        %v863 = vld [vmem:[#allocation7 + $0x28] sm:$0xf]
        %v864 = vld [vmem:[#allocation7 + $0x2c] sm:$0xf]
        %v865 = vld [vmem:[#allocation7 + $0x30] sm:$0xf]
        %v866 = vld [vmem:[#allocation7 + $0x34] sm:$0xf]
        %v867 = vld [vmem:[#allocation7 + $0x38] sm:$0xf]
        %v868 = vld [vmem:[#allocation7 + $0x3c] sm:$0xf]
        %v869 = vld [vmem:[%s6] sm:$0x1]
        %v871 = vlaneseq
        %v872 = vshrl.u32 %v871, 7
        %v873 = vsub.s32 0, %v872
        %v874 = vrot.slane %v869, %v873
        %v892 = vunpack.c.l.b16 %v853
        %v893 = vunpack.c.l.b16 %v854
        %v894 = vunpack.c.l.b16 %v855
        %v895 = vunpack.c.l.b16 %v856
        %v896 = vunpack.c.l.b16 %v857
        %v897 = vunpack.c.l.b16 %v858
        %v898 = vunpack.c.l.b16 %v859
        %v899 = vunpack.c.l.b16 %v860
        %v900 = vunpack.c.l.b16 %v861
        %v901 = vunpack.c.l.b16 %v862
        %v902 = vunpack.c.l.b16 %v863
        %v903 = vunpack.c.l.b16 %v864
        %v904 = vunpack.c.l.b16 %v865
        %v905 = vunpack.c.l.b16 %v866
        %v906 = vunpack.c.l.b16 %v867
        %v907 = vunpack.c.l.b16 %v868
        %v908 = vpack.c.b16 %v893, %v892
        %v909 = vpack.c.b16 %v895, %v894
        %v910 = vpack.c.b16 %v897, %v896
        %v911 = vpack.c.b16 %v899, %v898
        %v912 = vpack.c.b16 %v901, %v900
        %v913 = vpack.c.b16 %v903, %v902
        %v914 = vpack.c.b16 %v905, %v904
        %v915 = vpack.c.b16 %v907, %v906
        %924 = vmatprep.subr.bf16.mxu0 0
        %925 = vmatpush1.bf16.msra.mxu0 %v908
        %926 = vmatprep.subr.bf16.mxu0 0
        %927 = vmatpush1.bf16.msra.mxu0 %v909
        %928 = vmatprep.subr.bf16.mxu0 0
        %929 = vmatpush1.bf16.msra.mxu0 %v910
        %930 = vmatprep.subr.bf16.mxu0 0
        %931 = vmatpush1.bf16.msra.mxu0 %v911
        %932 = vmatprep.subr.bf16.mxu0 0
        %933 = vmatpush1.bf16.msra.mxu0 %v912
        %934 = vmatprep.subr.bf16.mxu0 0
        %935 = vmatpush1.bf16.msra.mxu0 %v913
        %936 = vmatprep.subr.bf16.mxu0 0
        %937 = vmatpush1.bf16.msra.mxu0 %v914
        %938 = vmatprep.subr.bf16.mxu0 0
        %939 = vmatpush1.bf16.msra.mxu0 %v915
        %940 = vmatprep.subr.bf16.mxu0 0
        %941 = vmatpush1.bf16.msra.mxu0 0
        %942 = vmatprep.subr.bf16.mxu0 0
        %943 = vmatpush1.bf16.msra.mxu0 0
        %944 = vmatprep.subr.bf16.mxu0 0
        %945 = vmatpush1.bf16.msra.mxu0 0
        %946 = vmatprep.subr.bf16.mxu0 0
        %947 = vmatpush1.bf16.msra.mxu0 0
        %948 = vmatprep.subr.bf16.mxu0 0
        %949 = vmatpush1.bf16.msra.mxu0 0
        %950 = vmatprep.subr.bf16.mxu0 0
        %951 = vmatpush1.bf16.msra.mxu0 0
        %952 = vmatprep.subr.bf16.mxu0 0
        %953 = vmatpush1.bf16.msra.mxu0 0
        %954 = vmatprep.subr.bf16.mxu0 0
        %955 = vmatpush1.bf16.msra.mxu0 0
        %956 = vmatprep.mubr.bf16.mxu0 0
        %957 = vmatmul.mubr.bf16.gmra.mrb[0].mxu0 %v729
        %v958 = vpop.f32.mrb[0].mxu0
        %v959 = vadd.f32 %v874, %v958
        %v960 = vpop.f32.mrb[0].mxu0
        %v961 = vpop.f32.mrb[0].mxu0
        %v962 = vadd.f32 %v874, %v961
        %v963 = vpop.f32.mrb[0].mxu0
        %964 = vmatprep.mubr.bf16.mxu0 0
        %965 = vmatmul.mubr.bf16.gmra.mrb[0].mxu0 %v730
        %v966 = vpop.f32.mrb[0].mxu0
        %v967 = vadd.f32 %v874, %v966
        %v968 = vpop.f32.mrb[0].mxu0
        %v969 = vpop.f32.mrb[0].mxu0
        %v970 = vadd.f32 %v874, %v969
        %v971 = vpop.f32.mrb[0].mxu0
        %972 = vdwg.mxu0
        %v973 = vpack.c.bf16 %v962, %v959
        %v974 = vpack.c.bf16 %v970, %v967
        %v975 = vld [vmem:[#allocation8] sm:$0xf]
        %v976 = vld [vmem:[#allocation8 + $0x4] sm:$0xf]
        %v977 = vld [vmem:[#allocation8 + $0x8] sm:$0xf]
        %v978 = vld [vmem:[#allocation8 + $0xc] sm:$0xf]
        %v979 = vld [vmem:[#allocation8 + $0x10] sm:$0xf]
        %v980 = vld [vmem:[#allocation8 + $0x14] sm:$0xf]
        %v981 = vld [vmem:[#allocation8 + $0x18] sm:$0xf]
        %v982 = vld [vmem:[#allocation8 + $0x1c] sm:$0xf]
        %v983 = vld [vmem:[#allocation8 + $0x20] sm:$0xf]
        %v984 = vld [vmem:[#allocation8 + $0x24] sm:$0xf]
        %v985 = vld [vmem:[#allocation8 + $0x28] sm:$0xf]
        %v986 = vld [vmem:[#allocation8 + $0x2c] sm:$0xf]
        %v987 = vld [vmem:[#allocation8 + $0x30] sm:$0xf]
        %v988 = vld [vmem:[#allocation8 + $0x34] sm:$0xf]
        %v989 = vld [vmem:[#allocation8 + $0x38] sm:$0xf]
        %v990 = vld [vmem:[#allocation8 + $0x3c] sm:$0xf]
        %v991 = vld [vmem:[%s8] sm:$0x1]
        %v993 = vlaneseq
        %v994 = vshrl.u32 %v993, 7
        %v995 = vsub.s32 0, %v994
        %v996 = vrot.slane %v991, %v995
        %v1014 = vunpack.c.l.b16 %v975
        %v1015 = vunpack.c.l.b16 %v976
        %v1016 = vunpack.c.l.b16 %v977
        %v1017 = vunpack.c.l.b16 %v978
        %v1018 = vunpack.c.l.b16 %v979
        %v1019 = vunpack.c.l.b16 %v980
        %v1020 = vunpack.c.l.b16 %v981
        %v1021 = vunpack.c.l.b16 %v982
        %v1022 = vunpack.c.l.b16 %v983
        %v1023 = vunpack.c.l.b16 %v984
        %v1024 = vunpack.c.l.b16 %v985
        %v1025 = vunpack.c.l.b16 %v986
        %v1026 = vunpack.c.l.b16 %v987
        %v1027 = vunpack.c.l.b16 %v988
        %v1028 = vunpack.c.l.b16 %v989
        %v1029 = vunpack.c.l.b16 %v990
        %v1030 = vpack.c.b16 %v1015, %v1014
        %v1031 = vpack.c.b16 %v1017, %v1016
        %v1032 = vpack.c.b16 %v1019, %v1018
        %v1033 = vpack.c.b16 %v1021, %v1020
        %v1034 = vpack.c.b16 %v1023, %v1022
        %v1035 = vpack.c.b16 %v1025, %v1024
        %v1036 = vpack.c.b16 %v1027, %v1026
        %v1037 = vpack.c.b16 %v1029, %v1028
        %1046 = vmatprep.subr.bf16.mxu0 0
        %1047 = vmatpush1.bf16.msra.mxu0 %v1030
        %1048 = vmatprep.subr.bf16.mxu0 0
        %1049 = vmatpush1.bf16.msra.mxu0 %v1031
        %1050 = vmatprep.subr.bf16.mxu0 0
        %1051 = vmatpush1.bf16.msra.mxu0 %v1032
        %1052 = vmatprep.subr.bf16.mxu0 0
        %1053 = vmatpush1.bf16.msra.mxu0 %v1033
        %1054 = vmatprep.subr.bf16.mxu0 0
        %1055 = vmatpush1.bf16.msra.mxu0 %v1034
        %1056 = vmatprep.subr.bf16.mxu0 0
        %1057 = vmatpush1.bf16.msra.mxu0 %v1035
        %1058 = vmatprep.subr.bf16.mxu0 0
        %1059 = vmatpush1.bf16.msra.mxu0 %v1036
        %1060 = vmatprep.subr.bf16.mxu0 0
        %1061 = vmatpush1.bf16.msra.mxu0 %v1037
        %1062 = vmatprep.subr.bf16.mxu0 0
        %1063 = vmatpush1.bf16.msra.mxu0 0
        %1064 = vmatprep.subr.bf16.mxu0 0
        %1065 = vmatpush1.bf16.msra.mxu0 0
        %1066 = vmatprep.subr.bf16.mxu0 0
        %1067 = vmatpush1.bf16.msra.mxu0 0
        %1068 = vmatprep.subr.bf16.mxu0 0
        %1069 = vmatpush1.bf16.msra.mxu0 0
        %1070 = vmatprep.subr.bf16.mxu0 0
        %1071 = vmatpush1.bf16.msra.mxu0 0
        %1072 = vmatprep.subr.bf16.mxu0 0
        %1073 = vmatpush1.bf16.msra.mxu0 0
        %1074 = vmatprep.subr.bf16.mxu0 0
        %1075 = vmatpush1.bf16.msra.mxu0 0
        %1076 = vmatprep.subr.bf16.mxu0 0
        %1077 = vmatpush1.bf16.msra.mxu0 0
        %1078 = vmatprep.mubr.bf16.mxu0 0
        %1079 = vmatmul.mubr.bf16.gmra.mrb[0].mxu0 %v729
        %v1080 = vpop.f32.mrb[0].mxu0
        %v1081 = vadd.f32 %v996, %v1080
        %v1082 = vpop.f32.mrb[0].mxu0
        %v1083 = vpop.f32.mrb[0].mxu0
        %v1084 = vadd.f32 %v996, %v1083
        %v1085 = vpop.f32.mrb[0].mxu0
        %1086 = vmatprep.mubr.bf16.mxu0 0
        %1087 = vmatmul.mubr.bf16.gmra.mrb[0].mxu0 %v730
        %v1088 = vpop.f32.mrb[0].mxu0
        %v1089 = vadd.f32 %v996, %v1088
        %v1090 = vpop.f32.mrb[0].mxu0
        %v1091 = vpop.f32.mrb[0].mxu0
        %v1092 = vadd.f32 %v996, %v1091
        %v1093 = vpop.f32.mrb[0].mxu0
        %1094 = vdwg.mxu0
        %v1095 = vpack.c.bf16 %v1084, %v1081
        %v1096 = vpack.c.bf16 %v1092, %v1089
        %1098 = vrot.lane.b32.xlu0 %v851, 96
        %v1099 = vpop.permute.xlu0 %1098
        %1100 = vrot.lane.b32.xlu0 %v851, 64
        %v1101 = vpop.permute.xlu0 %1100
        %1102 = vrot.lane.b32.xlu0 %v851, 32
        %v1103 = vpop.permute.xlu0 %1102
        %1105 = vrot.lane.b32.xlu0 %v973, 96
        %v1106 = vpop.permute.xlu0 %1105
        %1107 = vrot.lane.b32.xlu0 %v973, 64
        %v1108 = vpop.permute.xlu0 %1107
        %1109 = vrot.lane.b32.xlu0 %v973, 32
        %v1110 = vpop.permute.xlu0 %1109
        %1112 = vrot.lane.b32.xlu0 %v1095, 96
        %v1113 = vpop.permute.xlu0 %1112
        %1115 = vrot.lane.b32.xlu0 %v1095, 64
        %v1116 = vpop.permute.xlu0 %1115
        %1118 = vrot.lane.b32.xlu0 %v1095, 32
        %v1119 = vpop.permute.xlu0 %1118
        %vm1121 = vcmask 261120
        %v1123 = vsel %vm1121, %v851, 0
        %v1126 = vsel %vm1121, %v973, 0
        %1128 = vmatprep.subr.bf16.mxu0 0
        %1129 = vmatpush1.bf16.xpose.msra.mxu0 %v1126
        %1130 = vmatprep.subr.bf16.mxu0 0
        %1131 = vmatpush1.bf16.xpose.msra.mxu0 0
        %1132 = vmatprep.subr.bf16.mxu0 0
        %1133 = vmatpush1.bf16.xpose.msra.mxu0 0
        %1134 = vmatprep.subr.bf16.mxu0 0
        %1135 = vmatpush1.bf16.xpose.msra.mxu0 0
        %1136 = vmatprep.subr.bf16.mxu0 0
        %1137 = vmatpush1.bf16.xpose.msra.mxu0 0
        %1138 = vmatprep.subr.bf16.mxu0 0
        %1139 = vmatpush1.bf16.xpose.msra.mxu0 0
        %1140 = vmatprep.subr.bf16.mxu0 0
        %1141 = vmatpush1.bf16.xpose.msra.mxu0 0
        %1142 = vmatprep.subr.bf16.mxu0 0
        %1143 = vmatpush1.bf16.xpose.msra.mxu0 0
        %1144 = vmatprep.subr.bf16.mxu0 0
        %1145 = vmatpush1.bf16.xpose.msra.mxu0 0
        %1146 = vmatprep.subr.bf16.mxu0 0
        %1147 = vmatpush1.bf16.xpose.msra.mxu0 0
        %1148 = vmatprep.subr.bf16.mxu0 0
        %1149 = vmatpush1.bf16.xpose.msra.mxu0 0
        %1150 = vmatprep.subr.bf16.mxu0 0
        %1151 = vmatpush1.bf16.xpose.msra.mxu0 0
        %1152 = vmatprep.subr.bf16.mxu0 0
        %1153 = vmatpush1.bf16.xpose.msra.mxu0 0
        %1154 = vmatprep.subr.bf16.mxu0 0
        %1155 = vmatpush1.bf16.xpose.msra.mxu0 0
        %1156 = vmatprep.subr.bf16.mxu0 0
        %1157 = vmatpush1.bf16.xpose.msra.mxu0 0
        %1158 = vmatprep.subr.bf16.mxu0 0
        %1159 = vmatpush1.bf16.xpose.msra.mxu0 0
        %1160 = vmatprep.mubr.bf16.mxu0 0
        %1161 = vmatmul.mubr.bf16.gmra.mrb[0].mxu0 %v1123
        %v1162 = vpop.f32.mrb[0].mxu0
        %v1163 = vadd.f32 0.0, %v1162
        %v1164 = vpop.f32.mrb[0].mxu0
        %v1165 = vpop.f32.mrb[0].mxu0
        %v1166 = vadd.f32 0.0, %v1165
        %v1167 = vpop.f32.mrb[0].mxu0
        %1168 = vdwg.mxu0
        %v1170 = vsel %vm1121, %v1099, 0
        %v1173 = vsel %vm1121, %v1106, 0
        %1175 = vmatprep.subr.bf16.mxu0 0
        %1176 = vmatpush1.bf16.xpose.msra.mxu0 %v1173
        %1177 = vmatprep.subr.bf16.mxu0 0
        %1178 = vmatpush1.bf16.xpose.msra.mxu0 0
        %1179 = vmatprep.subr.bf16.mxu0 0
        %1180 = vmatpush1.bf16.xpose.msra.mxu0 0
        %1181 = vmatprep.subr.bf16.mxu0 0
        %1182 = vmatpush1.bf16.xpose.msra.mxu0 0
        %1183 = vmatprep.subr.bf16.mxu0 0
        %1184 = vmatpush1.bf16.xpose.msra.mxu0 0
        %1185 = vmatprep.subr.bf16.mxu0 0
        %1186 = vmatpush1.bf16.xpose.msra.mxu0 0
        %1187 = vmatprep.subr.bf16.mxu0 0
        %1188 = vmatpush1.bf16.xpose.msra.mxu0 0
        %1189 = vmatprep.subr.bf16.mxu0 0
        %1190 = vmatpush1.bf16.xpose.msra.mxu0 0
        %1191 = vmatprep.subr.bf16.mxu0 0
        %1192 = vmatpush1.bf16.xpose.msra.mxu0 0
        %1193 = vmatprep.subr.bf16.mxu0 0
        %1194 = vmatpush1.bf16.xpose.msra.mxu0 0
        %1195 = vmatprep.subr.bf16.mxu0 0
        %1196 = vmatpush1.bf16.xpose.msra.mxu0 0
        %1197 = vmatprep.subr.bf16.mxu0 0
        %1198 = vmatpush1.bf16.xpose.msra.mxu0 0
        %1199 = vmatprep.subr.bf16.mxu0 0
        %1200 = vmatpush1.bf16.xpose.msra.mxu0 0
        %1201 = vmatprep.subr.bf16.mxu0 0
        %1202 = vmatpush1.bf16.xpose.msra.mxu0 0
        %1203 = vmatprep.subr.bf16.mxu0 0
        %1204 = vmatpush1.bf16.xpose.msra.mxu0 0
        %1205 = vmatprep.subr.bf16.mxu0 0
        %1206 = vmatpush1.bf16.xpose.msra.mxu0 0
        %1207 = vmatprep.mubr.bf16.mxu0 0
        %1208 = vmatmul.mubr.bf16.gmra.mrb[0].mxu0 %v1170
        %v1209 = vpop.f32.mrb[0].mxu0
        %v1210 = vadd.f32 0.0, %v1209
        %v1211 = vpop.f32.mrb[0].mxu0
        %v1212 = vpop.f32.mrb[0].mxu0
        %v1213 = vadd.f32 0.0, %v1212
        %v1214 = vpop.f32.mrb[0].mxu0
        %1215 = vdwg.mxu0
        %v1217 = vsel %vm1121, %v1101, 0
        %v1220 = vsel %vm1121, %v1108, 0
        %1222 = vmatprep.subr.bf16.mxu0 0
        %1223 = vmatpush1.bf16.xpose.msra.mxu0 %v1220
        %1224 = vmatprep.subr.bf16.mxu0 0
        %1225 = vmatpush1.bf16.xpose.msra.mxu0 0
        %1226 = vmatprep.subr.bf16.mxu0 0
        %1227 = vmatpush1.bf16.xpose.msra.mxu0 0
        %1228 = vmatprep.subr.bf16.mxu0 0
        %1229 = vmatpush1.bf16.xpose.msra.mxu0 0
        %1230 = vmatprep.subr.bf16.mxu0 0
        %1231 = vmatpush1.bf16.xpose.msra.mxu0 0
        %1232 = vmatprep.subr.bf16.mxu0 0
        %1233 = vmatpush1.bf16.xpose.msra.mxu0 0
        %1234 = vmatprep.subr.bf16.mxu0 0
        %1235 = vmatpush1.bf16.xpose.msra.mxu0 0
        %1236 = vmatprep.subr.bf16.mxu0 0
        %1237 = vmatpush1.bf16.xpose.msra.mxu0 0
        %1238 = vmatprep.subr.bf16.mxu0 0
        %1239 = vmatpush1.bf16.xpose.msra.mxu0 0
        %1240 = vmatprep.subr.bf16.mxu0 0
        %1241 = vmatpush1.bf16.xpose.msra.mxu0 0
        %1242 = vmatprep.subr.bf16.mxu0 0
        %1243 = vmatpush1.bf16.xpose.msra.mxu0 0
        %1244 = vmatprep.subr.bf16.mxu0 0
        %1245 = vmatpush1.bf16.xpose.msra.mxu0 0
        %1246 = vmatprep.subr.bf16.mxu0 0
        %1247 = vmatpush1.bf16.xpose.msra.mxu0 0
        %1248 = vmatprep.subr.bf16.mxu0 0
        %1249 = vmatpush1.bf16.xpose.msra.mxu0 0
        %1250 = vmatprep.subr.bf16.mxu0 0
        %1251 = vmatpush1.bf16.xpose.msra.mxu0 0
        %1252 = vmatprep.subr.bf16.mxu0 0
        %1253 = vmatpush1.bf16.xpose.msra.mxu0 0
        %1254 = vmatprep.mubr.bf16.mxu0 0
        %1255 = vmatmul.mubr.bf16.gmra.mrb[0].mxu0 %v1217
        %v1256 = vpop.f32.mrb[0].mxu0
        %v1257 = vadd.f32 0.0, %v1256
        %v1258 = vpop.f32.mrb[0].mxu0
        %v1259 = vpop.f32.mrb[0].mxu0
        %v1260 = vadd.f32 0.0, %v1259
        %v1261 = vpop.f32.mrb[0].mxu0
        %1262 = vdwg.mxu0
        %v1264 = vsel %vm1121, %v1103, 0
        %v1267 = vsel %vm1121, %v1110, 0
        %1269 = vmatprep.subr.bf16.mxu0 0
        %1270 = vmatpush1.bf16.xpose.msra.mxu0 %v1267
        %1271 = vmatprep.subr.bf16.mxu0 0
        %1272 = vmatpush1.bf16.xpose.msra.mxu0 0
        %1273 = vmatprep.subr.bf16.mxu0 0
        %1274 = vmatpush1.bf16.xpose.msra.mxu0 0
        %1275 = vmatprep.subr.bf16.mxu0 0
        %1276 = vmatpush1.bf16.xpose.msra.mxu0 0
        %1277 = vmatprep.subr.bf16.mxu0 0
        %1278 = vmatpush1.bf16.xpose.msra.mxu0 0
        %1279 = vmatprep.subr.bf16.mxu0 0
        %1280 = vmatpush1.bf16.xpose.msra.mxu0 0
        %1281 = vmatprep.subr.bf16.mxu0 0
        %1282 = vmatpush1.bf16.xpose.msra.mxu0 0
        %1283 = vmatprep.subr.bf16.mxu0 0
        %1284 = vmatpush1.bf16.xpose.msra.mxu0 0
        %1285 = vmatprep.subr.bf16.mxu0 0
        %1286 = vmatpush1.bf16.xpose.msra.mxu0 0
        %1287 = vmatprep.subr.bf16.mxu0 0
        %1288 = vmatpush1.bf16.xpose.msra.mxu0 0
        %1289 = vmatprep.subr.bf16.mxu0 0
        %1290 = vmatpush1.bf16.xpose.msra.mxu0 0
        %1291 = vmatprep.subr.bf16.mxu0 0
        %1292 = vmatpush1.bf16.xpose.msra.mxu0 0
        %1293 = vmatprep.subr.bf16.mxu0 0
        %1294 = vmatpush1.bf16.xpose.msra.mxu0 0
        %1295 = vmatprep.subr.bf16.mxu0 0
        %1296 = vmatpush1.bf16.xpose.msra.mxu0 0
        %1297 = vmatprep.subr.bf16.mxu0 0
        %1298 = vmatpush1.bf16.xpose.msra.mxu0 0
        %1299 = vmatprep.subr.bf16.mxu0 0
        %1300 = vmatpush1.bf16.xpose.msra.mxu0 0
        %1301 = vmatprep.mubr.bf16.mxu0 0
        %1302 = vmatmul.mubr.bf16.gmra.mrb[0].mxu0 %v1264
        %v1303 = vpop.f32.mrb[0].mxu0
        %v1304 = vadd.f32 0.0, %v1303
        %v1305 = vpop.f32.mrb[0].mxu0
        %v1306 = vpop.f32.mrb[0].mxu0
        %v1307 = vadd.f32 0.0, %v1306
        %v1308 = vpop.f32.mrb[0].mxu0
        %1309 = vdwg.mxu0
        %vm1310 = vcmask 130048
        %v1311 = vsel %vm1310, %v1163, -inf
        %1312 = vmax.xlane.f32.xlu0 %v1311
        %v1313 = vpop.xlane.xlu0 %1312
        %v1314 = vsel %vm1310, %v1166, -inf
        %1315 = vmax.xlane.f32.xlu0 %v1314
        %v1316 = vpop.xlane.xlu0 %1315
        %v1317 = vsel %vm1310, %v1210, -inf
        %1318 = vmax.xlane.f32.xlu0 %v1317
        %v1319 = vpop.xlane.xlu0 %1318
        %v1320 = vsel %vm1310, %v1213, -inf
        %1321 = vmax.xlane.f32.xlu0 %v1320
        %v1322 = vpop.xlane.xlu0 %1321
        %v1323 = vsel %vm1310, %v1257, -inf
        %1324 = vmax.xlane.f32.xlu0 %v1323
        %v1325 = vpop.xlane.xlu0 %1324
        %v1326 = vsel %vm1310, %v1260, -inf
        %1327 = vmax.xlane.f32.xlu0 %v1326
        %v1328 = vpop.xlane.xlu0 %1327
        %v1329 = vsel %vm1310, %v1304, -inf
        %1330 = vmax.xlane.f32.xlu0 %v1329
        %v1331 = vpop.xlane.xlu0 %1330
        %v1332 = vsel %vm1310, %v1307, -inf
        %1333 = vmax.xlane.f32.xlu0 %v1332
        %v1334 = vpop.xlane.xlu0 %1333
        %v1335 = vsub.f32 %v1163, %v1313
        %v1336 = vsub.f32 %v1166, %v1316
        %v1337 = vsub.f32 %v1210, %v1319
        %v1338 = vsub.f32 %v1213, %v1322
        %v1339 = vsub.f32 %v1257, %v1325
        %v1340 = vsub.f32 %v1260, %v1328
        %v1341 = vsub.f32 %v1304, %v1331
        %v1342 = vsub.f32 %v1307, %v1334
        %v1343 = vmul.f32 %v1335, 1.442695
        %v1344 = vpow.pop %v1343
        %v1345 = vmul.f32 %v1336, 1.442695
        %v1346 = vpow.pop %v1345
        %v1347 = vmul.f32 %v1337, 1.442695
        %v1348 = vpow.pop %v1347
        %v1349 = vmul.f32 %v1338, 1.442695
        %v1350 = vpow.pop %v1349
        %v1351 = vmul.f32 %v1339, 1.442695
        %v1352 = vpow.pop %v1351
        %v1353 = vmul.f32 %v1340, 1.442695
        %v1354 = vpow.pop %v1353
        %v1355 = vmul.f32 %v1341, 1.442695
        %v1356 = vpow.pop %v1355
        %v1357 = vmul.f32 %v1342, 1.442695
        %v1358 = vpow.pop %v1357
        %v1359 = vsel %vm1310, %v1344, 0.0
        %1360 = vadd.xlane.f32.xlu0 %v1359
        %v1361 = vpop.xlane.xlu0 %1360
        %v1362 = vsel %vm1310, %v1346, 0.0
        %1363 = vadd.xlane.f32.xlu0 %v1362
        %v1364 = vpop.xlane.xlu0 %1363
        %v1365 = vsel %vm1310, %v1348, 0.0
        %1366 = vadd.xlane.f32.xlu0 %v1365
        %v1367 = vpop.xlane.xlu0 %1366
        %v1368 = vsel %vm1310, %v1350, 0.0
        %1369 = vadd.xlane.f32.xlu0 %v1368
        %v1370 = vpop.xlane.xlu0 %1369
        %v1371 = vsel %vm1310, %v1352, 0.0
        %1372 = vadd.xlane.f32.xlu0 %v1371
        %v1373 = vpop.xlane.xlu0 %1372
        %v1374 = vsel %vm1310, %v1354, 0.0
        %1375 = vadd.xlane.f32.xlu0 %v1374
        %v1376 = vpop.xlane.xlu0 %1375
        %v1377 = vsel %vm1310, %v1356, 0.0
        %1378 = vadd.xlane.f32.xlu0 %v1377
        %v1379 = vpop.xlane.xlu0 %1378
        %v1380 = vsel %vm1310, %v1358, 0.0
        %1381 = vadd.xlane.f32.xlu0 %v1380
        %v1382 = vpop.xlane.xlu0 %1381
        %v1383 = vrcp.pop %v1361
        %v1384 = vrcp.pop %v1364
        %v1385 = vrcp.pop %v1367
        %v1386 = vrcp.pop %v1370
        %v1387 = vrcp.pop %v1373
        %v1388 = vrcp.pop %v1376
        %v1389 = vrcp.pop %v1379
        %v1390 = vrcp.pop %v1382
        %v1391 = vmul.f32 %v1344, %v1383
        %v1392 = vmul.f32 %v1346, %v1384
        %v1393 = vmul.f32 %v1348, %v1385
        %v1394 = vmul.f32 %v1350, %v1386
        %v1395 = vmul.f32 %v1352, %v1387
        %v1396 = vmul.f32 %v1354, %v1388
        %v1397 = vmul.f32 %v1356, %v1389
        %v1398 = vmul.f32 %v1358, %v1390
        %v1399 = vpack.c.bf16 %v1392, %v1391
        %v1400 = vpack.c.bf16 %v1394, %v1393
        %v1401 = vpack.c.bf16 %v1396, %v1395
        %v1402 = vpack.c.bf16 %v1398, %v1397
        %v1404 = vsel %vm1310, %v1399, 0
        %1406 = vmatprep.subr.bf16.mxu0 0
        %1407 = vmatpush1.bf16.msra.mxu0 %v1095
        %1408 = vmatprep.subr.bf16.mxu0 0
        %1409 = vmatpush1.bf16.msra.mxu0 0
        %1410 = vmatprep.subr.bf16.mxu0 0
        %1411 = vmatpush1.bf16.msra.mxu0 0
        %1412 = vmatprep.subr.bf16.mxu0 0
        %1413 = vmatpush1.bf16.msra.mxu0 0
        %1414 = vmatprep.subr.bf16.mxu0 0
        %1415 = vmatpush1.bf16.msra.mxu0 0
        %1416 = vmatprep.subr.bf16.mxu0 0
        %1417 = vmatpush1.bf16.msra.mxu0 0
        %1418 = vmatprep.subr.bf16.mxu0 0
        %1419 = vmatpush1.bf16.msra.mxu0 0
        %1420 = vmatprep.subr.bf16.mxu0 0
        %1421 = vmatpush1.bf16.msra.mxu0 0
        %1422 = vmatprep.subr.bf16.mxu0 0
        %1423 = vmatpush1.bf16.msra.mxu0 0
        %1424 = vmatprep.subr.bf16.mxu0 0
        %1425 = vmatpush1.bf16.msra.mxu0 0
        %1426 = vmatprep.subr.bf16.mxu0 0
        %1427 = vmatpush1.bf16.msra.mxu0 0
        %1428 = vmatprep.subr.bf16.mxu0 0
        %1429 = vmatpush1.bf16.msra.mxu0 0
        %1430 = vmatprep.subr.bf16.mxu0 0
        %1431 = vmatpush1.bf16.msra.mxu0 0
        %1432 = vmatprep.subr.bf16.mxu0 0
        %1433 = vmatpush1.bf16.msra.mxu0 0
        %1434 = vmatprep.subr.bf16.mxu0 0
        %1435 = vmatpush1.bf16.msra.mxu0 0
        %1436 = vmatprep.subr.bf16.mxu0 0
        %1437 = vmatpush1.bf16.msra.mxu0 0
        %1438 = vmatprep.mubr.bf16.mxu0 0
        %1439 = vmatmul.mubr.bf16.gmra.mrb[0].mxu0 %v1404
        %v1440 = vpop.f32.mrb[0].mxu0
        %v1441 = vadd.f32 0.0, %v1440
        %v1442 = vpop.f32.mrb[0].mxu0
        %v1443 = vpop.f32.mrb[0].mxu0
        %v1444 = vadd.f32 0.0, %v1443
        %v1445 = vpop.f32.mrb[0].mxu0
        %1446 = vdwg.mxu0
        %v1448 = vsel %vm1310, %v1400, 0
        %1450 = vmatprep.subr.bf16.mxu0 0
        %1451 = vmatpush1.bf16.msra.mxu0 %v1113
        %1452 = vmatprep.subr.bf16.mxu0 0
        %1453 = vmatpush1.bf16.msra.mxu0 0
        %1454 = vmatprep.subr.bf16.mxu0 0
        %1455 = vmatpush1.bf16.msra.mxu0 0
        %1456 = vmatprep.subr.bf16.mxu0 0
        %1457 = vmatpush1.bf16.msra.mxu0 0
        %1458 = vmatprep.subr.bf16.mxu0 0
        %1459 = vmatpush1.bf16.msra.mxu0 0
        %1460 = vmatprep.subr.bf16.mxu0 0
        %1461 = vmatpush1.bf16.msra.mxu0 0
        %1462 = vmatprep.subr.bf16.mxu0 0
        %1463 = vmatpush1.bf16.msra.mxu0 0
        %1464 = vmatprep.subr.bf16.mxu0 0
        %1465 = vmatpush1.bf16.msra.mxu0 0
        %1466 = vmatprep.subr.bf16.mxu0 0
        %1467 = vmatpush1.bf16.msra.mxu0 0
        %1468 = vmatprep.subr.bf16.mxu0 0
        %1469 = vmatpush1.bf16.msra.mxu0 0
        %1470 = vmatprep.subr.bf16.mxu0 0
        %1471 = vmatpush1.bf16.msra.mxu0 0
        %1472 = vmatprep.subr.bf16.mxu0 0
        %1473 = vmatpush1.bf16.msra.mxu0 0
        %1474 = vmatprep.subr.bf16.mxu0 0
        %1475 = vmatpush1.bf16.msra.mxu0 0
        %1476 = vmatprep.subr.bf16.mxu0 0
        %1477 = vmatpush1.bf16.msra.mxu0 0
        %1478 = vmatprep.subr.bf16.mxu0 0
        %1479 = vmatpush1.bf16.msra.mxu0 0
        %1480 = vmatprep.subr.bf16.mxu0 0
        %1481 = vmatpush1.bf16.msra.mxu0 0
        %1482 = vmatprep.mubr.bf16.mxu0 0
        %1483 = vmatmul.mubr.bf16.gmra.mrb[0].mxu0 %v1448
        %v1484 = vpop.f32.mrb[0].mxu0
        %v1485 = vadd.f32 0.0, %v1484
        %v1486 = vpop.f32.mrb[0].mxu0
        %v1487 = vpop.f32.mrb[0].mxu0
        %v1488 = vadd.f32 0.0, %v1487
        %v1489 = vpop.f32.mrb[0].mxu0
        %1490 = vdwg.mxu0
        %v1492 = vsel %vm1310, %v1401, 0
        %1494 = vmatprep.subr.bf16.mxu0 0
        %1495 = vmatpush1.bf16.msra.mxu0 %v1116
        %1496 = vmatprep.subr.bf16.mxu0 0
        %1497 = vmatpush1.bf16.msra.mxu0 0
        %1498 = vmatprep.subr.bf16.mxu0 0
        %1499 = vmatpush1.bf16.msra.mxu0 0
        %1500 = vmatprep.subr.bf16.mxu0 0
        %1501 = vmatpush1.bf16.msra.mxu0 0
        %1502 = vmatprep.subr.bf16.mxu0 0
        %1503 = vmatpush1.bf16.msra.mxu0 0
        %1504 = vmatprep.subr.bf16.mxu0 0
        %1505 = vmatpush1.bf16.msra.mxu0 0
        %1506 = vmatprep.subr.bf16.mxu0 0
        %1507 = vmatpush1.bf16.msra.mxu0 0
        %1508 = vmatprep.subr.bf16.mxu0 0
        %1509 = vmatpush1.bf16.msra.mxu0 0
        %1510 = vmatprep.subr.bf16.mxu0 0
        %1511 = vmatpush1.bf16.msra.mxu0 0
        %1512 = vmatprep.subr.bf16.mxu0 0
        %1513 = vmatpush1.bf16.msra.mxu0 0
        %1514 = vmatprep.subr.bf16.mxu0 0
        %1515 = vmatpush1.bf16.msra.mxu0 0
        %1516 = vmatprep.subr.bf16.mxu0 0
        %1517 = vmatpush1.bf16.msra.mxu0 0
        %1518 = vmatprep.subr.bf16.mxu0 0
        %1519 = vmatpush1.bf16.msra.mxu0 0
        %1520 = vmatprep.subr.bf16.mxu0 0
        %1521 = vmatpush1.bf16.msra.mxu0 0
        %1522 = vmatprep.subr.bf16.mxu0 0
        %1523 = vmatpush1.bf16.msra.mxu0 0
        %1524 = vmatprep.subr.bf16.mxu0 0
        %1525 = vmatpush1.bf16.msra.mxu0 0
        %1526 = vmatprep.mubr.bf16.mxu0 0
        %1527 = vmatmul.mubr.bf16.gmra.mrb[0].mxu0 %v1492
        %v1528 = vpop.f32.mrb[0].mxu0
        %v1529 = vadd.f32 0.0, %v1528
        %v1530 = vpop.f32.mrb[0].mxu0
        %v1531 = vpop.f32.mrb[0].mxu0
        %v1532 = vadd.f32 0.0, %v1531
        %v1533 = vpop.f32.mrb[0].mxu0
        %1534 = vdwg.mxu0
        %v1536 = vsel %vm1310, %v1402, 0
        %1538 = vmatprep.subr.bf16.mxu0 0
        %1539 = vmatpush1.bf16.msra.mxu0 %v1119
        %1540 = vmatprep.subr.bf16.mxu0 0
        %1541 = vmatpush1.bf16.msra.mxu0 0
        %1542 = vmatprep.subr.bf16.mxu0 0
        %1543 = vmatpush1.bf16.msra.mxu0 0
        %1544 = vmatprep.subr.bf16.mxu0 0
        %1545 = vmatpush1.bf16.msra.mxu0 0
        %1546 = vmatprep.subr.bf16.mxu0 0
        %1547 = vmatpush1.bf16.msra.mxu0 0
        %1548 = vmatprep.subr.bf16.mxu0 0
        %1549 = vmatpush1.bf16.msra.mxu0 0
        %1550 = vmatprep.subr.bf16.mxu0 0
        %1551 = vmatpush1.bf16.msra.mxu0 0
        %1552 = vmatprep.subr.bf16.mxu0 0
        %1553 = vmatpush1.bf16.msra.mxu0 0
        %1554 = vmatprep.subr.bf16.mxu0 0
        %1555 = vmatpush1.bf16.msra.mxu0 0
        %1556 = vmatprep.subr.bf16.mxu0 0
        %1557 = vmatpush1.bf16.msra.mxu0 0
        %1558 = vmatprep.subr.bf16.mxu0 0
        %1559 = vmatpush1.bf16.msra.mxu0 0
        %1560 = vmatprep.subr.bf16.mxu0 0
        %1561 = vmatpush1.bf16.msra.mxu0 0
        %1562 = vmatprep.subr.bf16.mxu0 0
        %1563 = vmatpush1.bf16.msra.mxu0 0
        %1564 = vmatprep.subr.bf16.mxu0 0
        %1565 = vmatpush1.bf16.msra.mxu0 0
        %1566 = vmatprep.subr.bf16.mxu0 0
        %1567 = vmatpush1.bf16.msra.mxu0 0
        %1568 = vmatprep.subr.bf16.mxu0 0
        %1569 = vmatpush1.bf16.msra.mxu0 0
        %1570 = vmatprep.mubr.bf16.mxu0 0
        %1571 = vmatmul.mubr.bf16.gmra.mrb[0].mxu0 %v1536
        %v1572 = vpop.f32.mrb[0].mxu0
        %v1573 = vadd.f32 0.0, %v1572
        %v1574 = vpop.f32.mrb[0].mxu0
        %v1575 = vpop.f32.mrb[0].mxu0
        %v1576 = vadd.f32 0.0, %v1575
        %v1577 = vpop.f32.mrb[0].mxu0
        %1578 = vdwg.mxu0
        %1581 = vrot.lane.b32.xlu0 %v1485, 32
        %v1582 = vpop.permute.xlu0 %1581
        %1583 = vrot.lane.b32.xlu0 %v1488, 32
        %v1584 = vpop.permute.xlu0 %1583
        %1589 = vrot.lane.b32.xlu0 %v1529, 64
        %v1590 = vpop.permute.xlu0 %1589
        %1591 = vrot.lane.b32.xlu0 %v1532, 64
        %v1592 = vpop.permute.xlu0 %1591
        %1597 = vrot.lane.b32.xlu0 %v1573, 96
        %v1598 = vpop.permute.xlu0 %1597
        %1599 = vrot.lane.b32.xlu0 %v1576, 96
        %v1600 = vpop.permute.xlu0 %1599
        %v1603 = vsel %vm1121, %v1441, %v1582
        %v1604 = vsel %vm1121, %v1444, %v1584
        %vm1605 = vcmask 523264
        %v1606 = vsel %vm1605, %v1603, %v1590
        %v1607 = vsel %vm1605, %v1604, %v1592
        %vm1608 = vcmask 785408
        %v1609 = vsel %vm1608, %v1606, %v1598
        %v1610 = vsel %vm1608, %v1607, %v1600
        %1612 = vrot.lane.b32.xlu0 %v852, 96
        %v1613 = vpop.permute.xlu0 %1612
        %1614 = vrot.lane.b32.xlu0 %v852, 64
        %v1615 = vpop.permute.xlu0 %1614
        %1616 = vrot.lane.b32.xlu0 %v852, 32
        %v1617 = vpop.permute.xlu0 %1616
        %1619 = vrot.lane.b32.xlu0 %v974, 96
        %v1620 = vpop.permute.xlu0 %1619
        %1621 = vrot.lane.b32.xlu0 %v974, 64
        %v1622 = vpop.permute.xlu0 %1621
        %1623 = vrot.lane.b32.xlu0 %v974, 32
        %v1624 = vpop.permute.xlu0 %1623
        %1626 = vrot.lane.b32.xlu0 %v1096, 96
        %v1627 = vpop.permute.xlu0 %1626
        %1629 = vrot.lane.b32.xlu0 %v1096, 64
        %v1630 = vpop.permute.xlu0 %1629
        %1632 = vrot.lane.b32.xlu0 %v1096, 32
        %v1633 = vpop.permute.xlu0 %1632
        %v1636 = vsel %vm1121, %v852, 0
        %v1639 = vsel %vm1121, %v974, 0
        %1641 = vmatprep.subr.bf16.mxu0 0
        %1642 = vmatpush1.bf16.xpose.msra.mxu0 %v1639
        %1643 = vmatprep.subr.bf16.mxu0 0
        %1644 = vmatpush1.bf16.xpose.msra.mxu0 0
        %1645 = vmatprep.subr.bf16.mxu0 0
        %1646 = vmatpush1.bf16.xpose.msra.mxu0 0
        %1647 = vmatprep.subr.bf16.mxu0 0
        %1648 = vmatpush1.bf16.xpose.msra.mxu0 0
        %1649 = vmatprep.subr.bf16.mxu0 0
        %1650 = vmatpush1.bf16.xpose.msra.mxu0 0
        %1651 = vmatprep.subr.bf16.mxu0 0
        %1652 = vmatpush1.bf16.xpose.msra.mxu0 0
        %1653 = vmatprep.subr.bf16.mxu0 0
        %1654 = vmatpush1.bf16.xpose.msra.mxu0 0
        %1655 = vmatprep.subr.bf16.mxu0 0
        %1656 = vmatpush1.bf16.xpose.msra.mxu0 0
        %1657 = vmatprep.subr.bf16.mxu0 0
        %1658 = vmatpush1.bf16.xpose.msra.mxu0 0
        %1659 = vmatprep.subr.bf16.mxu0 0
        %1660 = vmatpush1.bf16.xpose.msra.mxu0 0
        %1661 = vmatprep.subr.bf16.mxu0 0
        %1662 = vmatpush1.bf16.xpose.msra.mxu0 0
        %1663 = vmatprep.subr.bf16.mxu0 0
        %1664 = vmatpush1.bf16.xpose.msra.mxu0 0
        %1665 = vmatprep.subr.bf16.mxu0 0
        %1666 = vmatpush1.bf16.xpose.msra.mxu0 0
        %1667 = vmatprep.subr.bf16.mxu0 0
        %1668 = vmatpush1.bf16.xpose.msra.mxu0 0
        %1669 = vmatprep.subr.bf16.mxu0 0
        %1670 = vmatpush1.bf16.xpose.msra.mxu0 0
        %1671 = vmatprep.subr.bf16.mxu0 0
        %1672 = vmatpush1.bf16.xpose.msra.mxu0 0
        %1673 = vmatprep.mubr.bf16.mxu0 0
        %1674 = vmatmul.mubr.bf16.gmra.mrb[0].mxu0 %v1636
        %v1675 = vpop.f32.mrb[0].mxu0
        %v1676 = vadd.f32 0.0, %v1675
        %v1677 = vpop.f32.mrb[0].mxu0
        %v1678 = vpop.f32.mrb[0].mxu0
        %v1679 = vadd.f32 0.0, %v1678
        %v1680 = vpop.f32.mrb[0].mxu0
        %1681 = vdwg.mxu0
        %v1683 = vsel %vm1121, %v1613, 0
        %v1686 = vsel %vm1121, %v1620, 0
        %1688 = vmatprep.subr.bf16.mxu0 0
        %1689 = vmatpush1.bf16.xpose.msra.mxu0 %v1686
        %1690 = vmatprep.subr.bf16.mxu0 0
        %1691 = vmatpush1.bf16.xpose.msra.mxu0 0
        %1692 = vmatprep.subr.bf16.mxu0 0
        %1693 = vmatpush1.bf16.xpose.msra.mxu0 0
        %1694 = vmatprep.subr.bf16.mxu0 0
        %1695 = vmatpush1.bf16.xpose.msra.mxu0 0
        %1696 = vmatprep.subr.bf16.mxu0 0
        %1697 = vmatpush1.bf16.xpose.msra.mxu0 0
        %1698 = vmatprep.subr.bf16.mxu0 0
        %1699 = vmatpush1.bf16.xpose.msra.mxu0 0
        %1700 = vmatprep.subr.bf16.mxu0 0
        %1701 = vmatpush1.bf16.xpose.msra.mxu0 0
        %1702 = vmatprep.subr.bf16.mxu0 0
        %1703 = vmatpush1.bf16.xpose.msra.mxu0 0
        %1704 = vmatprep.subr.bf16.mxu0 0
        %1705 = vmatpush1.bf16.xpose.msra.mxu0 0
        %1706 = vmatprep.subr.bf16.mxu0 0
        %1707 = vmatpush1.bf16.xpose.msra.mxu0 0
        %1708 = vmatprep.subr.bf16.mxu0 0
        %1709 = vmatpush1.bf16.xpose.msra.mxu0 0
        %1710 = vmatprep.subr.bf16.mxu0 0
        %1711 = vmatpush1.bf16.xpose.msra.mxu0 0
        %1712 = vmatprep.subr.bf16.mxu0 0
        %1713 = vmatpush1.bf16.xpose.msra.mxu0 0
        %1714 = vmatprep.subr.bf16.mxu0 0
        %1715 = vmatpush1.bf16.xpose.msra.mxu0 0
        %1716 = vmatprep.subr.bf16.mxu0 0
        %1717 = vmatpush1.bf16.xpose.msra.mxu0 0
        %1718 = vmatprep.subr.bf16.mxu0 0
        %1719 = vmatpush1.bf16.xpose.msra.mxu0 0
        %1720 = vmatprep.mubr.bf16.mxu0 0
        %1721 = vmatmul.mubr.bf16.gmra.mrb[0].mxu0 %v1683
        %v1722 = vpop.f32.mrb[0].mxu0
        %v1723 = vadd.f32 0.0, %v1722
        %v1724 = vpop.f32.mrb[0].mxu0
        %v1725 = vpop.f32.mrb[0].mxu0
        %v1726 = vadd.f32 0.0, %v1725
        %v1727 = vpop.f32.mrb[0].mxu0
        %1728 = vdwg.mxu0
        %v1730 = vsel %vm1121, %v1615, 0
        %v1733 = vsel %vm1121, %v1622, 0
        %1735 = vmatprep.subr.bf16.mxu0 0
        %1736 = vmatpush1.bf16.xpose.msra.mxu0 %v1733
        %1737 = vmatprep.subr.bf16.mxu0 0
        %1738 = vmatpush1.bf16.xpose.msra.mxu0 0
        %1739 = vmatprep.subr.bf16.mxu0 0
        %1740 = vmatpush1.bf16.xpose.msra.mxu0 0
        %1741 = vmatprep.subr.bf16.mxu0 0
        %1742 = vmatpush1.bf16.xpose.msra.mxu0 0
        %1743 = vmatprep.subr.bf16.mxu0 0
        %1744 = vmatpush1.bf16.xpose.msra.mxu0 0
        %1745 = vmatprep.subr.bf16.mxu0 0
        %1746 = vmatpush1.bf16.xpose.msra.mxu0 0
        %1747 = vmatprep.subr.bf16.mxu0 0
        %1748 = vmatpush1.bf16.xpose.msra.mxu0 0
        %1749 = vmatprep.subr.bf16.mxu0 0
        %1750 = vmatpush1.bf16.xpose.msra.mxu0 0
        %1751 = vmatprep.subr.bf16.mxu0 0
        %1752 = vmatpush1.bf16.xpose.msra.mxu0 0
        %1753 = vmatprep.subr.bf16.mxu0 0
        %1754 = vmatpush1.bf16.xpose.msra.mxu0 0
        %1755 = vmatprep.subr.bf16.mxu0 0
        %1756 = vmatpush1.bf16.xpose.msra.mxu0 0
        %1757 = vmatprep.subr.bf16.mxu0 0
        %1758 = vmatpush1.bf16.xpose.msra.mxu0 0
        %1759 = vmatprep.subr.bf16.mxu0 0
        %1760 = vmatpush1.bf16.xpose.msra.mxu0 0
        %1761 = vmatprep.subr.bf16.mxu0 0
        %1762 = vmatpush1.bf16.xpose.msra.mxu0 0
        %1763 = vmatprep.subr.bf16.mxu0 0
        %1764 = vmatpush1.bf16.xpose.msra.mxu0 0
        %1765 = vmatprep.subr.bf16.mxu0 0
        %1766 = vmatpush1.bf16.xpose.msra.mxu0 0
        %1767 = vmatprep.mubr.bf16.mxu0 0
        %1768 = vmatmul.mubr.bf16.gmra.mrb[0].mxu0 %v1730
        %v1769 = vpop.f32.mrb[0].mxu0
        %v1770 = vadd.f32 0.0, %v1769
        %v1771 = vpop.f32.mrb[0].mxu0
        %v1772 = vpop.f32.mrb[0].mxu0
        %v1773 = vadd.f32 0.0, %v1772
        %v1774 = vpop.f32.mrb[0].mxu0
        %1775 = vdwg.mxu0
        %v1777 = vsel %vm1121, %v1617, 0
        %v1780 = vsel %vm1121, %v1624, 0
        %1782 = vmatprep.subr.bf16.mxu0 0
        %1783 = vmatpush1.bf16.xpose.msra.mxu0 %v1780
        %1784 = vmatprep.subr.bf16.mxu0 0
        %1785 = vmatpush1.bf16.xpose.msra.mxu0 0
        %1786 = vmatprep.subr.bf16.mxu0 0
        %1787 = vmatpush1.bf16.xpose.msra.mxu0 0
        %1788 = vmatprep.subr.bf16.mxu0 0
        %1789 = vmatpush1.bf16.xpose.msra.mxu0 0
        %1790 = vmatprep.subr.bf16.mxu0 0
        %1791 = vmatpush1.bf16.xpose.msra.mxu0 0
        %1792 = vmatprep.subr.bf16.mxu0 0
        %1793 = vmatpush1.bf16.xpose.msra.mxu0 0
        %1794 = vmatprep.subr.bf16.mxu0 0
        %1795 = vmatpush1.bf16.xpose.msra.mxu0 0
        %1796 = vmatprep.subr.bf16.mxu0 0
        %1797 = vmatpush1.bf16.xpose.msra.mxu0 0
        %1798 = vmatprep.subr.bf16.mxu0 0
        %1799 = vmatpush1.bf16.xpose.msra.mxu0 0
        %1800 = vmatprep.subr.bf16.mxu0 0
        %1801 = vmatpush1.bf16.xpose.msra.mxu0 0
        %1802 = vmatprep.subr.bf16.mxu0 0
        %1803 = vmatpush1.bf16.xpose.msra.mxu0 0
        %1804 = vmatprep.subr.bf16.mxu0 0
        %1805 = vmatpush1.bf16.xpose.msra.mxu0 0
        %1806 = vmatprep.subr.bf16.mxu0 0
        %1807 = vmatpush1.bf16.xpose.msra.mxu0 0
        %1808 = vmatprep.subr.bf16.mxu0 0
        %1809 = vmatpush1.bf16.xpose.msra.mxu0 0
        %1810 = vmatprep.subr.bf16.mxu0 0
        %1811 = vmatpush1.bf16.xpose.msra.mxu0 0
        %1812 = vmatprep.subr.bf16.mxu0 0
        %1813 = vmatpush1.bf16.xpose.msra.mxu0 0
        %1814 = vmatprep.mubr.bf16.mxu0 0
        %1815 = vmatmul.mubr.bf16.gmra.mrb[0].mxu0 %v1777
        %v1816 = vpop.f32.mrb[0].mxu0
        %v1817 = vadd.f32 0.0, %v1816
        %v1818 = vpop.f32.mrb[0].mxu0
        %v1819 = vpop.f32.mrb[0].mxu0
        %v1820 = vadd.f32 0.0, %v1819
        %v1821 = vpop.f32.mrb[0].mxu0
        %1822 = vdwg.mxu0
        %v1823 = vsel %vm1310, %v1676, -inf
        %1824 = vmax.xlane.f32.xlu0 %v1823
        %v1825 = vpop.xlane.xlu0 %1824
        %v1826 = vsel %vm1310, %v1679, -inf
        %1827 = vmax.xlane.f32.xlu0 %v1826
        %v1828 = vpop.xlane.xlu0 %1827
        %v1829 = vsel %vm1310, %v1723, -inf
        %1830 = vmax.xlane.f32.xlu0 %v1829
        %v1831 = vpop.xlane.xlu0 %1830
        %v1832 = vsel %vm1310, %v1726, -inf
        %1833 = vmax.xlane.f32.xlu0 %v1832
        %v1834 = vpop.xlane.xlu0 %1833
        %v1835 = vsel %vm1310, %v1770, -inf
        %1836 = vmax.xlane.f32.xlu0 %v1835
        %v1837 = vpop.xlane.xlu0 %1836
        %v1838 = vsel %vm1310, %v1773, -inf
        %1839 = vmax.xlane.f32.xlu0 %v1838
        %v1840 = vpop.xlane.xlu0 %1839
        %v1841 = vsel %vm1310, %v1817, -inf
        %1842 = vmax.xlane.f32.xlu0 %v1841
        %v1843 = vpop.xlane.xlu0 %1842
        %v1844 = vsel %vm1310, %v1820, -inf
        %1845 = vmax.xlane.f32.xlu0 %v1844
        %v1846 = vpop.xlane.xlu0 %1845
        %v1847 = vsub.f32 %v1676, %v1825
        %v1848 = vsub.f32 %v1679, %v1828
        %v1849 = vsub.f32 %v1723, %v1831
        %v1850 = vsub.f32 %v1726, %v1834
        %v1851 = vsub.f32 %v1770, %v1837
        %v1852 = vsub.f32 %v1773, %v1840
        %v1853 = vsub.f32 %v1817, %v1843
        %v1854 = vsub.f32 %v1820, %v1846
        %v1855 = vmul.f32 %v1847, 1.442695
        %v1856 = vpow.pop %v1855
        %v1857 = vmul.f32 %v1848, 1.442695
        %v1858 = vpow.pop %v1857
        %v1859 = vmul.f32 %v1849, 1.442695
        %v1860 = vpow.pop %v1859
        %v1861 = vmul.f32 %v1850, 1.442695
        %v1862 = vpow.pop %v1861
        %v1863 = vmul.f32 %v1851, 1.442695
        %v1864 = vpow.pop %v1863
        %v1865 = vmul.f32 %v1852, 1.442695
        %v1866 = vpow.pop %v1865
        %v1867 = vmul.f32 %v1853, 1.442695
        %v1868 = vpow.pop %v1867
        %v1869 = vmul.f32 %v1854, 1.442695
        %v1870 = vpow.pop %v1869
        %v1871 = vsel %vm1310, %v1856, 0.0
        %1872 = vadd.xlane.f32.xlu0 %v1871
        %v1873 = vpop.xlane.xlu0 %1872
        %v1874 = vsel %vm1310, %v1858, 0.0
        %1875 = vadd.xlane.f32.xlu0 %v1874
        %v1876 = vpop.xlane.xlu0 %1875
        %v1877 = vsel %vm1310, %v1860, 0.0
        %1878 = vadd.xlane.f32.xlu0 %v1877
        %v1879 = vpop.xlane.xlu0 %1878
        %v1880 = vsel %vm1310, %v1862, 0.0
        %1881 = vadd.xlane.f32.xlu0 %v1880
        %v1882 = vpop.xlane.xlu0 %1881
        %v1883 = vsel %vm1310, %v1864, 0.0
        %1884 = vadd.xlane.f32.xlu0 %v1883
        %v1885 = vpop.xlane.xlu0 %1884
        %v1886 = vsel %vm1310, %v1866, 0.0
        %1887 = vadd.xlane.f32.xlu0 %v1886
        %v1888 = vpop.xlane.xlu0 %1887
        %v1889 = vsel %vm1310, %v1868, 0.0
        %1890 = vadd.xlane.f32.xlu0 %v1889
        %v1891 = vpop.xlane.xlu0 %1890
        %v1892 = vsel %vm1310, %v1870, 0.0
        %1893 = vadd.xlane.f32.xlu0 %v1892
        %v1894 = vpop.xlane.xlu0 %1893
        %v1895 = vrcp.pop %v1873
        %v1896 = vrcp.pop %v1876
        %v1897 = vrcp.pop %v1879
        %v1898 = vrcp.pop %v1882
        %v1899 = vrcp.pop %v1885
        %v1900 = vrcp.pop %v1888
        %v1901 = vrcp.pop %v1891
        %v1902 = vrcp.pop %v1894
        %v1903 = vmul.f32 %v1856, %v1895
        %v1904 = vmul.f32 %v1858, %v1896
        %v1905 = vmul.f32 %v1860, %v1897
        %v1906 = vmul.f32 %v1862, %v1898
        %v1907 = vmul.f32 %v1864, %v1899
        %v1908 = vmul.f32 %v1866, %v1900
        %v1909 = vmul.f32 %v1868, %v1901
        %v1910 = vmul.f32 %v1870, %v1902
        %v1911 = vpack.c.bf16 %v1904, %v1903
        %v1912 = vpack.c.bf16 %v1906, %v1905
        %v1913 = vpack.c.bf16 %v1908, %v1907
        %v1914 = vpack.c.bf16 %v1910, %v1909
        %v1916 = vsel %vm1310, %v1911, 0
        %1918 = vmatprep.subr.bf16.mxu0 0
        %1919 = vmatpush1.bf16.msra.mxu0 %v1096
        %1920 = vmatprep.subr.bf16.mxu0 0
        %1921 = vmatpush1.bf16.msra.mxu0 0
        %1922 = vmatprep.subr.bf16.mxu0 0
        %1923 = vmatpush1.bf16.msra.mxu0 0
        %1924 = vmatprep.subr.bf16.mxu0 0
        %1925 = vmatpush1.bf16.msra.mxu0 0
        %1926 = vmatprep.subr.bf16.mxu0 0
        %1927 = vmatpush1.bf16.msra.mxu0 0
        %1928 = vmatprep.subr.bf16.mxu0 0
        %1929 = vmatpush1.bf16.msra.mxu0 0
        %1930 = vmatprep.subr.bf16.mxu0 0
        %1931 = vmatpush1.bf16.msra.mxu0 0
        %1932 = vmatprep.subr.bf16.mxu0 0
        %1933 = vmatpush1.bf16.msra.mxu0 0
        %1934 = vmatprep.subr.bf16.mxu0 0
        %1935 = vmatpush1.bf16.msra.mxu0 0
        %1936 = vmatprep.subr.bf16.mxu0 0
        %1937 = vmatpush1.bf16.msra.mxu0 0
        %1938 = vmatprep.subr.bf16.mxu0 0
        %1939 = vmatpush1.bf16.msra.mxu0 0
        %1940 = vmatprep.subr.bf16.mxu0 0
        %1941 = vmatpush1.bf16.msra.mxu0 0
        %1942 = vmatprep.subr.bf16.mxu0 0
        %1943 = vmatpush1.bf16.msra.mxu0 0
        %1944 = vmatprep.subr.bf16.mxu0 0
        %1945 = vmatpush1.bf16.msra.mxu0 0
        %1946 = vmatprep.subr.bf16.mxu0 0
        %1947 = vmatpush1.bf16.msra.mxu0 0
        %1948 = vmatprep.subr.bf16.mxu0 0
        %1949 = vmatpush1.bf16.msra.mxu0 0
        %1950 = vmatprep.mubr.bf16.mxu0 0
        %1951 = vmatmul.mubr.bf16.gmra.mrb[0].mxu0 %v1916
        %v1952 = vpop.f32.mrb[0].mxu0
        %v1953 = vadd.f32 0.0, %v1952
        %v1954 = vpop.f32.mrb[0].mxu0
        %v1955 = vpop.f32.mrb[0].mxu0
        %v1956 = vadd.f32 0.0, %v1955
        %v1957 = vpop.f32.mrb[0].mxu0
        %1958 = vdwg.mxu0
        %v1960 = vsel %vm1310, %v1912, 0
        %1962 = vmatprep.subr.bf16.mxu0 0
        %1963 = vmatpush1.bf16.msra.mxu0 %v1627
        %1964 = vmatprep.subr.bf16.mxu0 0
        %1965 = vmatpush1.bf16.msra.mxu0 0
        %1966 = vmatprep.subr.bf16.mxu0 0
        %1967 = vmatpush1.bf16.msra.mxu0 0
        %1968 = vmatprep.subr.bf16.mxu0 0
        %1969 = vmatpush1.bf16.msra.mxu0 0
        %1970 = vmatprep.subr.bf16.mxu0 0
        %1971 = vmatpush1.bf16.msra.mxu0 0
        %1972 = vmatprep.subr.bf16.mxu0 0
        %1973 = vmatpush1.bf16.msra.mxu0 0
        %1974 = vmatprep.subr.bf16.mxu0 0
        %1975 = vmatpush1.bf16.msra.mxu0 0
        %1976 = vmatprep.subr.bf16.mxu0 0
        %1977 = vmatpush1.bf16.msra.mxu0 0
        %1978 = vmatprep.subr.bf16.mxu0 0
        %1979 = vmatpush1.bf16.msra.mxu0 0
        %1980 = vmatprep.subr.bf16.mxu0 0
        %1981 = vmatpush1.bf16.msra.mxu0 0
        %1982 = vmatprep.subr.bf16.mxu0 0
        %1983 = vmatpush1.bf16.msra.mxu0 0
        %1984 = vmatprep.subr.bf16.mxu0 0
        %1985 = vmatpush1.bf16.msra.mxu0 0
        %1986 = vmatprep.subr.bf16.mxu0 0
        %1987 = vmatpush1.bf16.msra.mxu0 0
        %1988 = vmatprep.subr.bf16.mxu0 0
        %1989 = vmatpush1.bf16.msra.mxu0 0
        %1990 = vmatprep.subr.bf16.mxu0 0
        %1991 = vmatpush1.bf16.msra.mxu0 0
        %1992 = vmatprep.subr.bf16.mxu0 0
        %1993 = vmatpush1.bf16.msra.mxu0 0
        %1994 = vmatprep.mubr.bf16.mxu0 0
        %1995 = vmatmul.mubr.bf16.gmra.mrb[0].mxu0 %v1960
        %v1996 = vpop.f32.mrb[0].mxu0
        %v1997 = vadd.f32 0.0, %v1996
        %v1998 = vpop.f32.mrb[0].mxu0
        %v1999 = vpop.f32.mrb[0].mxu0
        %v2000 = vadd.f32 0.0, %v1999
        %v2001 = vpop.f32.mrb[0].mxu0
        %2002 = vdwg.mxu0
        %v2004 = vsel %vm1310, %v1913, 0
        %2006 = vmatprep.subr.bf16.mxu0 0
        %2007 = vmatpush1.bf16.msra.mxu0 %v1630
        %2008 = vmatprep.subr.bf16.mxu0 0
        %2009 = vmatpush1.bf16.msra.mxu0 0
        %2010 = vmatprep.subr.bf16.mxu0 0
        %2011 = vmatpush1.bf16.msra.mxu0 0
        %2012 = vmatprep.subr.bf16.mxu0 0
        %2013 = vmatpush1.bf16.msra.mxu0 0
        %2014 = vmatprep.subr.bf16.mxu0 0
        %2015 = vmatpush1.bf16.msra.mxu0 0
        %2016 = vmatprep.subr.bf16.mxu0 0
        %2017 = vmatpush1.bf16.msra.mxu0 0
        %2018 = vmatprep.subr.bf16.mxu0 0
        %2019 = vmatpush1.bf16.msra.mxu0 0
        %2020 = vmatprep.subr.bf16.mxu0 0
        %2021 = vmatpush1.bf16.msra.mxu0 0
        %2022 = vmatprep.subr.bf16.mxu0 0
        %2023 = vmatpush1.bf16.msra.mxu0 0
        %2024 = vmatprep.subr.bf16.mxu0 0
        %2025 = vmatpush1.bf16.msra.mxu0 0
        %2026 = vmatprep.subr.bf16.mxu0 0
        %2027 = vmatpush1.bf16.msra.mxu0 0
        %2028 = vmatprep.subr.bf16.mxu0 0
        %2029 = vmatpush1.bf16.msra.mxu0 0
        %2030 = vmatprep.subr.bf16.mxu0 0
        %2031 = vmatpush1.bf16.msra.mxu0 0
        %2032 = vmatprep.subr.bf16.mxu0 0
        %2033 = vmatpush1.bf16.msra.mxu0 0
        %2034 = vmatprep.subr.bf16.mxu0 0
        %2035 = vmatpush1.bf16.msra.mxu0 0
        %2036 = vmatprep.subr.bf16.mxu0 0
        %2037 = vmatpush1.bf16.msra.mxu0 0
        %2038 = vmatprep.mubr.bf16.mxu0 0
        %2039 = vmatmul.mubr.bf16.gmra.mrb[0].mxu0 %v2004
        %v2040 = vpop.f32.mrb[0].mxu0
        %v2041 = vadd.f32 0.0, %v2040
        %v2042 = vpop.f32.mrb[0].mxu0
        %v2043 = vpop.f32.mrb[0].mxu0
        %v2044 = vadd.f32 0.0, %v2043
        %v2045 = vpop.f32.mrb[0].mxu0
        %2046 = vdwg.mxu0
        %v2048 = vsel %vm1310, %v1914, 0
        %2050 = vmatprep.subr.bf16.mxu0 0
        %2051 = vmatpush1.bf16.msra.mxu0 %v1633
        %2052 = vmatprep.subr.bf16.mxu0 0
        %2053 = vmatpush1.bf16.msra.mxu0 0
        %2054 = vmatprep.subr.bf16.mxu0 0
        %2055 = vmatpush1.bf16.msra.mxu0 0
        %2056 = vmatprep.subr.bf16.mxu0 0
        %2057 = vmatpush1.bf16.msra.mxu0 0
        %2058 = vmatprep.subr.bf16.mxu0 0
        %2059 = vmatpush1.bf16.msra.mxu0 0
        %2060 = vmatprep.subr.bf16.mxu0 0
        %2061 = vmatpush1.bf16.msra.mxu0 0
        %2062 = vmatprep.subr.bf16.mxu0 0
        %2063 = vmatpush1.bf16.msra.mxu0 0
        %2064 = vmatprep.subr.bf16.mxu0 0
        %2065 = vmatpush1.bf16.msra.mxu0 0
        %2066 = vmatprep.subr.bf16.mxu0 0
        %2067 = vmatpush1.bf16.msra.mxu0 0
        %2068 = vmatprep.subr.bf16.mxu0 0
        %2069 = vmatpush1.bf16.msra.mxu0 0
        %2070 = vmatprep.subr.bf16.mxu0 0
        %2071 = vmatpush1.bf16.msra.mxu0 0
        %2072 = vmatprep.subr.bf16.mxu0 0
        %2073 = vmatpush1.bf16.msra.mxu0 0
        %2074 = vmatprep.subr.bf16.mxu0 0
        %2075 = vmatpush1.bf16.msra.mxu0 0
        %2076 = vmatprep.subr.bf16.mxu0 0
        %2077 = vmatpush1.bf16.msra.mxu0 0
        %2078 = vmatprep.subr.bf16.mxu0 0
        %2079 = vmatpush1.bf16.msra.mxu0 0
        %2080 = vmatprep.subr.bf16.mxu0 0
        %2081 = vmatpush1.bf16.msra.mxu0 0
        %2082 = vmatprep.mubr.bf16.mxu0 0
        %2083 = vmatmul.mubr.bf16.gmra.mrb[0].mxu0 %v2048
        %v2084 = vpop.f32.mrb[0].mxu0
        %v2085 = vadd.f32 0.0, %v2084
        %v2086 = vpop.f32.mrb[0].mxu0
        %v2087 = vpop.f32.mrb[0].mxu0
        %v2088 = vadd.f32 0.0, %v2087
        %v2089 = vpop.f32.mrb[0].mxu0
        %2090 = vdwg.mxu0
        %2093 = vrot.lane.b32.xlu0 %v1997, 32
        %v2094 = vpop.permute.xlu0 %2093
        %2095 = vrot.lane.b32.xlu0 %v2000, 32
        %v2096 = vpop.permute.xlu0 %2095
        %2101 = vrot.lane.b32.xlu0 %v2041, 64
        %v2102 = vpop.permute.xlu0 %2101
        %2103 = vrot.lane.b32.xlu0 %v2044, 64
        %v2104 = vpop.permute.xlu0 %2103
        %2109 = vrot.lane.b32.xlu0 %v2085, 96
        %v2110 = vpop.permute.xlu0 %2109
        %2111 = vrot.lane.b32.xlu0 %v2088, 96
        %v2112 = vpop.permute.xlu0 %2111
        %v2115 = vsel %vm1121, %v1953, %v2094
        %v2116 = vsel %vm1121, %v1956, %v2096
        %v2117 = vsel %vm1605, %v2115, %v2102
        %v2118 = vsel %vm1605, %v2116, %v2104
        %v2119 = vsel %vm1608, %v2117, %v2110
        %v2120 = vsel %vm1608, %v2118, %v2112
        %v2121 = vpack.c.bf16 %v1610, %v1609
        %v2122 = vpack.c.bf16 %v2120, %v2119
        %v2123 = vld [vmem:[#allocation10] sm:$0xf]
        %v2124 = vld [vmem:[#allocation10 + $0x4] sm:$0xf]
        %v2125 = vld [vmem:[#allocation10 + $0x8] sm:$0xf]
        %v2126 = vld [vmem:[#allocation10 + $0xc] sm:$0xf]
        %v2127 = vld [vmem:[#allocation10 + $0x10] sm:$0xf]
        %v2128 = vld [vmem:[#allocation10 + $0x14] sm:$0xf]
        %v2129 = vld [vmem:[#allocation10 + $0x18] sm:$0xf]
        %v2130 = vld [vmem:[#allocation10 + $0x1c] sm:$0xf]
        %v2131 = vld [vmem:[#allocation10 + $0x20] sm:$0xf]
        %v2132 = vld [vmem:[#allocation10 + $0x24] sm:$0xf]
        %v2133 = vld [vmem:[#allocation10 + $0x28] sm:$0xf]
        %v2134 = vld [vmem:[#allocation10 + $0x2c] sm:$0xf]
        %v2135 = vld [vmem:[#allocation10 + $0x30] sm:$0xf]
        %v2136 = vld [vmem:[#allocation10 + $0x34] sm:$0xf]
        %v2137 = vld [vmem:[#allocation10 + $0x38] sm:$0xf]
        %v2138 = vld [vmem:[#allocation10 + $0x3c] sm:$0xf]
        %v2139 = vld [vmem:[%s10] sm:$0x1]
        %v2141 = vlaneseq
        %v2142 = vshrl.u32 %v2141, 7
        %v2143 = vsub.s32 0, %v2142
        %v2144 = vrot.slane %v2139, %v2143
        %v2162 = vunpack.c.l.b16 %v2123
        %v2163 = vunpack.c.l.b16 %v2124
        %v2164 = vunpack.c.l.b16 %v2125
        %v2165 = vunpack.c.l.b16 %v2126
        %v2166 = vunpack.c.l.b16 %v2127
        %v2167 = vunpack.c.l.b16 %v2128
        %v2168 = vunpack.c.l.b16 %v2129
        %v2169 = vunpack.c.l.b16 %v2130
        %v2170 = vunpack.c.l.b16 %v2131
        %v2171 = vunpack.c.l.b16 %v2132
        %v2172 = vunpack.c.l.b16 %v2133
        %v2173 = vunpack.c.l.b16 %v2134
        %v2174 = vunpack.c.l.b16 %v2135
        %v2175 = vunpack.c.l.b16 %v2136
        %v2176 = vunpack.c.l.b16 %v2137
        %v2177 = vunpack.c.l.b16 %v2138
        %v2178 = vpack.c.b16 %v2163, %v2162
        %v2179 = vpack.c.b16 %v2165, %v2164
        %v2180 = vpack.c.b16 %v2167, %v2166
        %v2181 = vpack.c.b16 %v2169, %v2168
        %v2182 = vpack.c.b16 %v2171, %v2170
        %v2183 = vpack.c.b16 %v2173, %v2172
        %v2184 = vpack.c.b16 %v2175, %v2174
        %v2185 = vpack.c.b16 %v2177, %v2176
        %2194 = vmatprep.subr.bf16.mxu0 0
        %2195 = vmatpush1.bf16.msra.mxu0 %v2178
        %2196 = vmatprep.subr.bf16.mxu0 0
        %2197 = vmatpush1.bf16.msra.mxu0 %v2179
        %2198 = vmatprep.subr.bf16.mxu0 0
        %2199 = vmatpush1.bf16.msra.mxu0 %v2180
        %2200 = vmatprep.subr.bf16.mxu0 0
        %2201 = vmatpush1.bf16.msra.mxu0 %v2181
        %2202 = vmatprep.subr.bf16.mxu0 0
        %2203 = vmatpush1.bf16.msra.mxu0 %v2182
        %2204 = vmatprep.subr.bf16.mxu0 0
        %2205 = vmatpush1.bf16.msra.mxu0 %v2183
        %2206 = vmatprep.subr.bf16.mxu0 0
        %2207 = vmatpush1.bf16.msra.mxu0 %v2184
        %2208 = vmatprep.subr.bf16.mxu0 0
        %2209 = vmatpush1.bf16.msra.mxu0 %v2185
        %2210 = vmatprep.subr.bf16.mxu0 0
        %2211 = vmatpush1.bf16.msra.mxu0 0
        %2212 = vmatprep.subr.bf16.mxu0 0
        %2213 = vmatpush1.bf16.msra.mxu0 0
        %2214 = vmatprep.subr.bf16.mxu0 0
        %2215 = vmatpush1.bf16.msra.mxu0 0
        %2216 = vmatprep.subr.bf16.mxu0 0
        %2217 = vmatpush1.bf16.msra.mxu0 0
        %2218 = vmatprep.subr.bf16.mxu0 0
        %2219 = vmatpush1.bf16.msra.mxu0 0
        %2220 = vmatprep.subr.bf16.mxu0 0
        %2221 = vmatpush1.bf16.msra.mxu0 0
        %2222 = vmatprep.subr.bf16.mxu0 0
        %2223 = vmatpush1.bf16.msra.mxu0 0
        %2224 = vmatprep.subr.bf16.mxu0 0
        %2225 = vmatpush1.bf16.msra.mxu0 0
        %2226 = vmatprep.mubr.bf16.mxu0 0
        %2227 = vmatmul.mubr.bf16.gmra.mrb[0].mxu0 %v2121
        %v2228 = vpop.f32.mrb[0].mxu0
        %v2229 = vadd.f32 %v2144, %v2228
        %v2230 = vpop.f32.mrb[0].mxu0
        %v2231 = vpop.f32.mrb[0].mxu0
        %v2232 = vadd.f32 %v2144, %v2231
        %v2233 = vpop.f32.mrb[0].mxu0
        %2234 = vmatprep.mubr.bf16.mxu0 0
        %2235 = vmatmul.mubr.bf16.gmra.mrb[0].mxu0 %v2122
        %v2236 = vpop.f32.mrb[0].mxu0
        %v2237 = vadd.f32 %v2144, %v2236
        %v2238 = vpop.f32.mrb[0].mxu0
        %v2239 = vpop.f32.mrb[0].mxu0
        %v2240 = vadd.f32 %v2144, %v2239
        %v2241 = vpop.f32.mrb[0].mxu0
        %2242 = vdwg.mxu0
        %v2243 = vadd.f32 %v658, %v2229
        %v2244 = vadd.f32 %v659, %v2232
        %v2245 = vadd.f32 %v660, %v2237
        %v2246 = vadd.f32 %v661, %v2240
        %v2247 = vld [vmem:[%s11] sm:$0x1]
        %v2248 = vld [vmem:[%s12] sm:$0x1]
        %2249 = vadd.xlane.f32.xlu0 %v2243
        %v2250 = vpop.xlane.xlu0 %2249
        %2251 = vadd.xlane.f32.xlu0 %v2244
        %v2252 = vpop.xlane.xlu0 %2251
        %2253 = vadd.xlane.f32.xlu0 %v2245
        %v2254 = vpop.xlane.xlu0 %2253
        %2255 = vadd.xlane.f32.xlu0 %v2246
        %v2256 = vpop.xlane.xlu0 %2255
        %v2257 = vmul.f32 %v2250, %v672
        %v2258 = vmul.f32 %v2252, %v672
        %v2259 = vmul.f32 %v2254, %v672
        %v2260 = vmul.f32 %v2256, %v672
        %v2261 = vsub.f32 %v2243, %v2257
        %v2262 = vsub.f32 %v2244, %v2258
        %v2263 = vsub.f32 %v2245, %v2259
        %v2264 = vsub.f32 %v2246, %v2260
        %v2265 = vmul.f32 %v2261, %v2261
        %v2266 = vmul.f32 %v2262, %v2262
        %v2267 = vmul.f32 %v2263, %v2263
        %v2268 = vmul.f32 %v2264, %v2264
        %2269 = vadd.xlane.f32.xlu0 %v2265
        %v2270 = vpop.xlane.xlu0 %2269
        %2271 = vadd.xlane.f32.xlu0 %v2266
        %v2272 = vpop.xlane.xlu0 %2271
        %2273 = vadd.xlane.f32.xlu0 %v2267
        %v2274 = vpop.xlane.xlu0 %2273
        %2275 = vadd.xlane.f32.xlu0 %v2268
        %v2276 = vpop.xlane.xlu0 %2275
        %v2277 = vmul.f32 %v2270, %v672
        %v2278 = vmul.f32 %v2272, %v672
        %v2279 = vmul.f32 %v2274, %v672
        %v2280 = vmul.f32 %v2276, %v672
        %v2281 = vadd.f32 %v2277, 1e-06
        %v2282 = vadd.f32 %v2278, 1e-06
        %v2283 = vadd.f32 %v2279, 1e-06
        %v2284 = vadd.f32 %v2280, 1e-06
        %v2285 = vrsqrt.pop %v2281
        %v2286 = vrsqrt.pop %v2282
        %v2287 = vrsqrt.pop %v2283
        %v2288 = vrsqrt.pop %v2284
        %v2289 = vmul.f32 %v2261, %v2285
        %v2290 = vmul.f32 %v2262, %v2286
        %v2291 = vmul.f32 %v2263, %v2287
        %v2292 = vmul.f32 %v2264, %v2288
        %v2294 = vlaneseq
        %v2295 = vshrl.u32 %v2294, 7
        %v2296 = vsub.s32 0, %v2295
        %v2297 = vrot.slane %v2247, %v2296
        %v2299 = vmul.f32 %v2289, %v2297
        %v2300 = vmul.f32 %v2290, %v2297
        %v2301 = vmul.f32 %v2291, %v2297
        %v2302 = vmul.f32 %v2292, %v2297
        %v2304 = vlaneseq
        %v2305 = vshrl.u32 %v2304, 7
        %v2306 = vsub.s32 0, %v2305
        %v2307 = vrot.slane %v2248, %v2306
        %v2309 = vadd.f32 %v2299, %v2307
        %v2310 = vadd.f32 %v2300, %v2307
        %v2311 = vadd.f32 %v2301, %v2307
        %v2312 = vadd.f32 %v2302, %v2307
        %v2313 = vpack.c.bf16 %v2310, %v2309
        %v2314 = vpack.c.bf16 %v2312, %v2311
        %v2315 = vld [vmem:[#allocation11] sm:$0xff]
        %v2316 = vld [vmem:[#allocation11 + $0x8] sm:$0xff]
        %v2317 = vld [vmem:[#allocation11 + $0x10] sm:$0xff]
        %v2318 = vld [vmem:[#allocation11 + $0x18] sm:$0xff]
        %v2319 = vld [vmem:[#allocation11 + $0x20] sm:$0xff]
        %v2320 = vld [vmem:[#allocation11 + $0x28] sm:$0xff]
        %v2321 = vld [vmem:[#allocation11 + $0x30] sm:$0xff]
        %v2322 = vld [vmem:[#allocation11 + $0x38] sm:$0xff]
        %v2323 = vld [vmem:[#allocation11 + $0x40] sm:$0xff]
        %v2324 = vld [vmem:[#allocation11 + $0x48] sm:$0xff]
        %v2325 = vld [vmem:[#allocation11 + $0x50] sm:$0xff]
        %v2326 = vld [vmem:[#allocation11 + $0x58] sm:$0xff]
        %v2327 = vld [vmem:[#allocation11 + $0x60] sm:$0xff]
        %v2328 = vld [vmem:[#allocation11 + $0x68] sm:$0xff]
        %v2329 = vld [vmem:[#allocation11 + $0x70] sm:$0xff]
        %v2330 = vld [vmem:[#allocation11 + $0x78] sm:$0xff]
        %v2331 = vld [vmem:[%s14] sm:$0x3]
        %v2333 = vlaneseq
        %v2334 = vshrl.u32 %v2333, 7
        %v2335 = vsub.s32 0, %v2334
        %v2336 = vrot.slane %v2331, %v2335
        %v2337 = vlaneseq
        %v2338 = vshrl.u32 %v2337, 7
        %v2339 = vsub.s32 1, %v2338
        %v2340 = vrot.slane %v2331, %v2339
        %v2359 = vunpack.c.l.b16 %v2315
        %v2360 = vunpack.c.h.b16 %v2315
        %v2361 = vunpack.c.l.b16 %v2316
        %v2362 = vunpack.c.h.b16 %v2316
        %v2363 = vunpack.c.l.b16 %v2317
        %v2364 = vunpack.c.h.b16 %v2317
        %v2365 = vunpack.c.l.b16 %v2318
        %v2366 = vunpack.c.h.b16 %v2318
        %v2367 = vunpack.c.l.b16 %v2319
        %v2368 = vunpack.c.h.b16 %v2319
        %v2369 = vunpack.c.l.b16 %v2320
        %v2370 = vunpack.c.h.b16 %v2320
        %v2371 = vunpack.c.l.b16 %v2321
        %v2372 = vunpack.c.h.b16 %v2321
        %v2373 = vunpack.c.l.b16 %v2322
        %v2374 = vunpack.c.h.b16 %v2322
        %v2375 = vunpack.c.l.b16 %v2323
        %v2376 = vunpack.c.h.b16 %v2323
        %v2377 = vunpack.c.l.b16 %v2324
        %v2378 = vunpack.c.h.b16 %v2324
        %v2379 = vunpack.c.l.b16 %v2325
        %v2380 = vunpack.c.h.b16 %v2325
        %v2381 = vunpack.c.l.b16 %v2326
        %v2382 = vunpack.c.h.b16 %v2326
        %v2383 = vunpack.c.l.b16 %v2327
        %v2384 = vunpack.c.h.b16 %v2327
        %v2385 = vunpack.c.l.b16 %v2328
        %v2386 = vunpack.c.h.b16 %v2328
        %v2387 = vunpack.c.l.b16 %v2329
        %v2388 = vunpack.c.h.b16 %v2329
        %v2389 = vunpack.c.l.b16 %v2330
        %v2390 = vunpack.c.h.b16 %v2330
        %v2391 = vpack.c.b16 %v2361, %v2359
        %v2392 = vpack.c.b16 %v2362, %v2360
        %v2393 = vpack.c.b16 %v2365, %v2363
        %v2394 = vpack.c.b16 %v2366, %v2364
        %v2395 = vpack.c.b16 %v2369, %v2367
        %v2396 = vpack.c.b16 %v2370, %v2368
        %v2397 = vpack.c.b16 %v2373, %v2371
        %v2398 = vpack.c.b16 %v2374, %v2372
        %v2399 = vpack.c.b16 %v2377, %v2375
        %v2400 = vpack.c.b16 %v2378, %v2376
        %v2401 = vpack.c.b16 %v2381, %v2379
        %v2402 = vpack.c.b16 %v2382, %v2380
        %v2403 = vpack.c.b16 %v2385, %v2383
        %v2404 = vpack.c.b16 %v2386, %v2384
        %v2405 = vpack.c.b16 %v2389, %v2387
        %v2406 = vpack.c.b16 %v2390, %v2388
        %2423 = vmatprep.subr.bf16.mxu0 %v2392
        %2424 = vmatpush1.bf16.msra.mxu0 %v2391
        %2425 = vmatprep.subr.bf16.mxu0 %v2394
        %2426 = vmatpush1.bf16.msra.mxu0 %v2393
        %2427 = vmatprep.subr.bf16.mxu0 %v2396
        %2428 = vmatpush1.bf16.msra.mxu0 %v2395
        %2429 = vmatprep.subr.bf16.mxu0 %v2398
        %2430 = vmatpush1.bf16.msra.mxu0 %v2397
        %2431 = vmatprep.subr.bf16.mxu0 %v2400
        %2432 = vmatpush1.bf16.msra.mxu0 %v2399
        %2433 = vmatprep.subr.bf16.mxu0 %v2402
        %2434 = vmatpush1.bf16.msra.mxu0 %v2401
        %2435 = vmatprep.subr.bf16.mxu0 %v2404
        %2436 = vmatpush1.bf16.msra.mxu0 %v2403
        %2437 = vmatprep.subr.bf16.mxu0 %v2406
        %2438 = vmatpush1.bf16.msra.mxu0 %v2405
        %2439 = vmatprep.subr.bf16.mxu0 0
        %2440 = vmatpush1.bf16.msra.mxu0 0
        %2441 = vmatprep.subr.bf16.mxu0 0
        %2442 = vmatpush1.bf16.msra.mxu0 0
        %2443 = vmatprep.subr.bf16.mxu0 0
        %2444 = vmatpush1.bf16.msra.mxu0 0
        %2445 = vmatprep.subr.bf16.mxu0 0
        %2446 = vmatpush1.bf16.msra.mxu0 0
        %2447 = vmatprep.subr.bf16.mxu0 0
        %2448 = vmatpush1.bf16.msra.mxu0 0
        %2449 = vmatprep.subr.bf16.mxu0 0
        %2450 = vmatpush1.bf16.msra.mxu0 0
        %2451 = vmatprep.subr.bf16.mxu0 0
        %2452 = vmatpush1.bf16.msra.mxu0 0
        %2453 = vmatprep.subr.bf16.mxu0 0
        %2454 = vmatpush1.bf16.msra.mxu0 0
        %2455 = vmatprep.mubr.bf16.mxu0 0
        %2456 = vmatmul.mubr.bf16.gmra.mrb[0].mxu0 %v2313
        %v2457 = vpop.f32.mrb[0].mxu0
        %v2458 = vadd.f32 %v2336, %v2457
        %v2459 = vpop.f32.mrb[0].mxu0
        %v2460 = vadd.f32 %v2340, %v2459
        %v2461 = vpop.f32.mrb[0].mxu0
        %v2462 = vadd.f32 %v2336, %v2461
        %v2463 = vpop.f32.mrb[0].mxu0
        %v2464 = vadd.f32 %v2340, %v2463
        %2465 = vmatprep.mubr.bf16.mxu0 0
        %2466 = vmatmul.mubr.bf16.gmra.mrb[0].mxu0 %v2314
        %v2467 = vpop.f32.mrb[0].mxu0
        %v2468 = vadd.f32 %v2336, %v2467
        %v2469 = vpop.f32.mrb[0].mxu0
        %v2470 = vadd.f32 %v2340, %v2469
        %v2471 = vpop.f32.mrb[0].mxu0
        %v2472 = vadd.f32 %v2336, %v2471
        %v2473 = vpop.f32.mrb[0].mxu0
        %v2474 = vadd.f32 %v2340, %v2473
        %2475 = vdwg.mxu0
        %v2476 = vmul.f32 %v2458, 0.5
        %v2477 = vmul.f32 %v2460, 0.5
        %v2478 = vmul.f32 %v2462, 0.5
        %v2479 = vmul.f32 %v2464, 0.5
        %v2480 = vmul.f32 %v2468, 0.5
        %v2481 = vmul.f32 %v2470, 0.5
        %v2482 = vmul.f32 %v2472, 0.5
        %v2483 = vmul.f32 %v2474, 0.5
        %v2484 = vmul.f32 %v2458, 0.044715
        %v2485 = vmul.f32 %v2460, 0.044715
        %v2486 = vmul.f32 %v2462, 0.044715
        %v2487 = vmul.f32 %v2464, 0.044715
        %v2488 = vmul.f32 %v2468, 0.044715
        %v2489 = vmul.f32 %v2470, 0.044715
        %v2490 = vmul.f32 %v2472, 0.044715
        %v2491 = vmul.f32 %v2474, 0.044715
        %v2492 = vmul.f32 %v2484, %v2458
        %v2493 = vmul.f32 %v2485, %v2460
        %v2494 = vmul.f32 %v2486, %v2462
        %v2495 = vmul.f32 %v2487, %v2464
        %v2496 = vmul.f32 %v2488, %v2468
        %v2497 = vmul.f32 %v2489, %v2470
        %v2498 = vmul.f32 %v2490, %v2472
        %v2499 = vmul.f32 %v2491, %v2474
        %v2500 = vmul.f32 %v2492, %v2458
        %v2501 = vmul.f32 %v2493, %v2460
        %v2502 = vmul.f32 %v2494, %v2462
        %v2503 = vmul.f32 %v2495, %v2464
        %v2504 = vmul.f32 %v2496, %v2468
        %v2505 = vmul.f32 %v2497, %v2470
        %v2506 = vmul.f32 %v2498, %v2472
        %v2507 = vmul.f32 %v2499, %v2474
        %v2508 = vadd.f32 %v2458, %v2500
        %v2509 = vadd.f32 %v2460, %v2501
        %v2510 = vadd.f32 %v2462, %v2502
        %v2511 = vadd.f32 %v2464, %v2503
        %v2512 = vadd.f32 %v2468, %v2504
        %v2513 = vadd.f32 %v2470, %v2505
        %v2514 = vadd.f32 %v2472, %v2506
        %v2515 = vadd.f32 %v2474, %v2507
        %v2516 = vmul.f32 %v2508, 0.7978846
        %v2517 = vmul.f32 %v2509, 0.7978846
        %v2518 = vmul.f32 %v2510, 0.7978846
        %v2519 = vmul.f32 %v2511, 0.7978846
        %v2520 = vmul.f32 %v2512, 0.7978846
        %v2521 = vmul.f32 %v2513, 0.7978846
        %v2522 = vmul.f32 %v2514, 0.7978846
        %v2523 = vmul.f32 %v2515, 0.7978846
        %v2524 = vtanh.pop %v2516
        %v2525 = vtanh.pop %v2517
        %v2526 = vtanh.pop %v2518
        %v2527 = vtanh.pop %v2519
        %v2528 = vtanh.pop %v2520
        %v2529 = vtanh.pop %v2521
        %v2530 = vtanh.pop %v2522
        %v2531 = vtanh.pop %v2523
        %v2532 = vadd.f32 %v2524, 1.0
        %v2533 = vadd.f32 %v2525, 1.0
        %v2534 = vadd.f32 %v2526, 1.0
        %v2535 = vadd.f32 %v2527, 1.0
        %v2536 = vadd.f32 %v2528, 1.0
        %v2537 = vadd.f32 %v2529, 1.0
        %v2538 = vadd.f32 %v2530, 1.0
        %v2539 = vadd.f32 %v2531, 1.0
        %v2540 = vmul.f32 %v2476, %v2532
        %v2541 = vmul.f32 %v2477, %v2533
        %v2542 = vmul.f32 %v2478, %v2534
        %v2543 = vmul.f32 %v2479, %v2535
        %v2544 = vmul.f32 %v2480, %v2536
        %v2545 = vmul.f32 %v2481, %v2537
        %v2546 = vmul.f32 %v2482, %v2538
        %v2547 = vmul.f32 %v2483, %v2539
        %v2548 = vpack.c.bf16 %v2542, %v2540
        %v2549 = vpack.c.bf16 %v2543, %v2541
        %v2550 = vpack.c.bf16 %v2546, %v2544
        %v2551 = vpack.c.bf16 %v2547, %v2545
        %v2552 = vld [vmem:[#allocation13] sm:$0xf]
        %v2553 = vld [vmem:[#allocation13 + $0x4] sm:$0xf]
        %v2554 = vld [vmem:[#allocation13 + $0x8] sm:$0xf]
        %v2555 = vld [vmem:[#allocation13 + $0xc] sm:$0xf]
        %v2556 = vld [vmem:[#allocation13 + $0x10] sm:$0xf]
        %v2557 = vld [vmem:[#allocation13 + $0x14] sm:$0xf]
        %v2558 = vld [vmem:[#allocation13 + $0x18] sm:$0xf]
        %v2559 = vld [vmem:[#allocation13 + $0x1c] sm:$0xf]
        %v2560 = vld [vmem:[#allocation13 + $0x20] sm:$0xf]
        %v2561 = vld [vmem:[#allocation13 + $0x24] sm:$0xf]
        %v2562 = vld [vmem:[#allocation13 + $0x28] sm:$0xf]
        %v2563 = vld [vmem:[#allocation13 + $0x2c] sm:$0xf]
        %v2564 = vld [vmem:[#allocation13 + $0x30] sm:$0xf]
        %v2565 = vld [vmem:[#allocation13 + $0x34] sm:$0xf]
        %v2566 = vld [vmem:[#allocation13 + $0x38] sm:$0xf]
        %v2567 = vld [vmem:[#allocation13 + $0x3c] sm:$0xf]
        %v2568 = vld [vmem:[#allocation13 + $0x40] sm:$0xf]
        %v2569 = vld [vmem:[#allocation13 + $0x44] sm:$0xf]
        %v2570 = vld [vmem:[#allocation13 + $0x48] sm:$0xf]
        %v2571 = vld [vmem:[#allocation13 + $0x4c] sm:$0xf]
        %v2572 = vld [vmem:[#allocation13 + $0x50] sm:$0xf]
        %v2573 = vld [vmem:[#allocation13 + $0x54] sm:$0xf]
        %v2574 = vld [vmem:[#allocation13 + $0x58] sm:$0xf]
        %v2575 = vld [vmem:[#allocation13 + $0x5c] sm:$0xf]
        %v2576 = vld [vmem:[#allocation13 + $0x60] sm:$0xf]
        %v2577 = vld [vmem:[#allocation13 + $0x64] sm:$0xf]
        %v2578 = vld [vmem:[#allocation13 + $0x68] sm:$0xf]
        %v2579 = vld [vmem:[#allocation13 + $0x6c] sm:$0xf]
        %v2580 = vld [vmem:[#allocation13 + $0x70] sm:$0xf]
        %v2581 = vld [vmem:[#allocation13 + $0x74] sm:$0xf]
        %v2582 = vld [vmem:[#allocation13 + $0x78] sm:$0xf]
        %v2583 = vld [vmem:[#allocation13 + $0x7c] sm:$0xf]
        %v2584 = vld [vmem:[%s16] sm:$0x1]
        %v2586 = vlaneseq
        %v2587 = vshrl.u32 %v2586, 7
        %v2588 = vsub.s32 0, %v2587
        %v2589 = vrot.slane %v2584, %v2588
        %v2623 = vunpack.c.l.b16 %v2552
        %v2624 = vunpack.c.l.b16 %v2553
        %v2625 = vunpack.c.l.b16 %v2554
        %v2626 = vunpack.c.l.b16 %v2555
        %v2627 = vunpack.c.l.b16 %v2556
        %v2628 = vunpack.c.l.b16 %v2557
        %v2629 = vunpack.c.l.b16 %v2558
        %v2630 = vunpack.c.l.b16 %v2559
        %v2631 = vunpack.c.l.b16 %v2560
        %v2632 = vunpack.c.l.b16 %v2561
        %v2633 = vunpack.c.l.b16 %v2562
        %v2634 = vunpack.c.l.b16 %v2563
        %v2635 = vunpack.c.l.b16 %v2564
        %v2636 = vunpack.c.l.b16 %v2565
        %v2637 = vunpack.c.l.b16 %v2566
        %v2638 = vunpack.c.l.b16 %v2567
        %v2639 = vunpack.c.l.b16 %v2568
        %v2640 = vunpack.c.l.b16 %v2569
        %v2641 = vunpack.c.l.b16 %v2570
        %v2642 = vunpack.c.l.b16 %v2571
        %v2643 = vunpack.c.l.b16 %v2572
        %v2644 = vunpack.c.l.b16 %v2573
        %v2645 = vunpack.c.l.b16 %v2574
        %v2646 = vunpack.c.l.b16 %v2575
        %v2647 = vunpack.c.l.b16 %v2576
        %v2648 = vunpack.c.l.b16 %v2577
        %v2649 = vunpack.c.l.b16 %v2578
        %v2650 = vunpack.c.l.b16 %v2579
        %v2651 = vunpack.c.l.b16 %v2580
        %v2652 = vunpack.c.l.b16 %v2581
        %v2653 = vunpack.c.l.b16 %v2582
        %v2654 = vunpack.c.l.b16 %v2583
        %v2655 = vpack.c.b16 %v2624, %v2623
        %v2656 = vpack.c.b16 %v2626, %v2625
        %v2657 = vpack.c.b16 %v2628, %v2627
        %v2658 = vpack.c.b16 %v2630, %v2629
        %v2659 = vpack.c.b16 %v2632, %v2631
        %v2660 = vpack.c.b16 %v2634, %v2633
        %v2661 = vpack.c.b16 %v2636, %v2635
        %v2662 = vpack.c.b16 %v2638, %v2637
        %v2663 = vpack.c.b16 %v2640, %v2639
        %v2664 = vpack.c.b16 %v2642, %v2641
        %v2665 = vpack.c.b16 %v2644, %v2643
        %v2666 = vpack.c.b16 %v2646, %v2645
        %v2667 = vpack.c.b16 %v2648, %v2647
        %v2668 = vpack.c.b16 %v2650, %v2649
        %v2669 = vpack.c.b16 %v2652, %v2651
        %v2670 = vpack.c.b16 %v2654, %v2653
        %2687 = vmatprep.subr.bf16.mxu0 0
        %2688 = vmatpush1.bf16.msra.mxu0 %v2655
        %2689 = vmatprep.subr.bf16.mxu0 0
        %2690 = vmatpush1.bf16.msra.mxu0 %v2656
        %2691 = vmatprep.subr.bf16.mxu0 0
        %2692 = vmatpush1.bf16.msra.mxu0 %v2657
        %2693 = vmatprep.subr.bf16.mxu0 0
        %2694 = vmatpush1.bf16.msra.mxu0 %v2658
        %2695 = vmatprep.subr.bf16.mxu0 0
        %2696 = vmatpush1.bf16.msra.mxu0 %v2659
        %2697 = vmatprep.subr.bf16.mxu0 0
        %2698 = vmatpush1.bf16.msra.mxu0 %v2660
        %2699 = vmatprep.subr.bf16.mxu0 0
        %2700 = vmatpush1.bf16.msra.mxu0 %v2661
        %2701 = vmatprep.subr.bf16.mxu0 0
        %2702 = vmatpush1.bf16.msra.mxu0 %v2662
        %2703 = vmatprep.subr.bf16.mxu0 0
        %2704 = vmatpush1.bf16.msra.mxu0 %v2663
        %2705 = vmatprep.subr.bf16.mxu0 0
        %2706 = vmatpush1.bf16.msra.mxu0 %v2664
        %2707 = vmatprep.subr.bf16.mxu0 0
        %2708 = vmatpush1.bf16.msra.mxu0 %v2665
        %2709 = vmatprep.subr.bf16.mxu0 0
        %2710 = vmatpush1.bf16.msra.mxu0 %v2666
        %2711 = vmatprep.subr.bf16.mxu0 0
        %2712 = vmatpush1.bf16.msra.mxu0 %v2667
        %2713 = vmatprep.subr.bf16.mxu0 0
        %2714 = vmatpush1.bf16.msra.mxu0 %v2668
        %2715 = vmatprep.subr.bf16.mxu0 0
        %2716 = vmatpush1.bf16.msra.mxu0 %v2669
        %2717 = vmatprep.subr.bf16.mxu0 0
        %2718 = vmatpush1.bf16.msra.mxu0 %v2670
        %2719 = vmatprep.mubr.bf16.mxu0 %v2549
        %2720 = vmatmul.mubr.bf16.gmra.mrb[0].mxu0 %v2548
        %v2721 = vpop.f32.mrb[0].mxu0
        %v2722 = vadd.f32 %v2589, %v2721
        %v2723 = vpop.f32.mrb[0].mxu0
        %v2724 = vpop.f32.mrb[0].mxu0
        %v2725 = vadd.f32 %v2589, %v2724
        %v2726 = vpop.f32.mrb[0].mxu0
        %2727 = vmatprep.mubr.bf16.mxu0 %v2551
        %2728 = vmatmul.mubr.bf16.gmra.mrb[0].mxu0 %v2550
        %v2729 = vpop.f32.mrb[0].mxu0
        %v2730 = vadd.f32 %v2589, %v2729
        %v2731 = vpop.f32.mrb[0].mxu0
        %v2732 = vpop.f32.mrb[0].mxu0
        %v2733 = vadd.f32 %v2589, %v2732
        %v2734 = vpop.f32.mrb[0].mxu0
        %2735 = vdwg.mxu0
        %v2736 = vadd.f32 %v2243, %v2722
        %v2737 = vadd.f32 %v2244, %v2725
        %v2738 = vadd.f32 %v2245, %v2730
        %v2739 = vadd.f32 %v2246, %v2733
        %2740 = vst [vmem:[%s654] sm:$0xff] %v2736
        %2741 = vst [vmem:[%s654 + $0x8] sm:$0xff] %v2737
        %2742 = vst [vmem:[%s654 + $0x10] sm:$0xff] %v2738
        %2743 = vst [vmem:[%s654 + $0x18] sm:$0xff] %v2739
        %s2744 = sand.u32 %s407, 1
        %s2745 = scalar_lea.sflag [#allocation4], %s2744
        %s2746 = sand.u32 %s407, 1
        %s2747 = smul.addr %s2746, 32
        %s2748 = scalar_lea.vmem [#allocation14], %s2747
        // Predicated region
        $region117: #{tpu_custom_call.1} parent=87 // pred_check
          %p2749 = pneg %p417
        $region118: #{tpu_custom_call.1} parent=87 // pred_check_branch
          %2751 = sbr.rel (%p2749) target = $region120
        $region119: #{tpu_custom_call.1} parent=87 // pred_region
          %s2752 = smul.u32 2, %s37
          %s2754 = ssub.s32 512, 512
          %2755 = vsyncadd %s2745, %s2754
          %s2756 = smul.addr %s2752, 2
          %s2757 = smul.addr %s2756, 128
          %s2758 = scalar_lea.hbm %s17, %s2757
          %s2759 = sshll.u32 %s2748, 4
          %s2760 = int_to_ptr.vmem [resolvable:$true] %s2759
          %2765 = dma.vmem_to_hbm [thread:$0]  %s2760, 512, %s2758, %s2745, 128, 128, 8
        $region120: #{tpu_custom_call.1} parent=87 // pred_fallthru
          _
      $region88: #{tpu_custom_call.1} parent=5 // pred_fallthru
        _
      %p2766 = scmp.le.s32.totalorder 2, %s32
      // Predicated region
      $region121: #{tpu_custom_call.1} parent=5 // pred_check
        %p2767 = pneg %p2766
      $region122: #{tpu_custom_call.1} parent=5 // pred_check_branch
        %2769 = sbr.rel (%p2767) target = $region124
      $region123: #{tpu_custom_call.1} parent=5 // pred_region
        %s2770 = ssub.s32 %s32, 2
        // Predicated region
        $region125: #{tpu_custom_call.1} parent=123 // pred_check
          %p2771 = pneg %p423
        $region126: #{tpu_custom_call.1} parent=123 // pred_check_branch
          %2773 = sbr.rel (%p2771) target = $region128
        $region127: #{tpu_custom_call.1} parent=123 // pred_region
          %s2774 = sand.u32 %s408, 1
          %s2775 = scalar_lea.sflag [#allocation4], %s2774
          %s2776 = sand.u32 %s408, 1
          %s2777 = smul.addr %s2776, 32
          %s2778 = scalar_lea.vmem [#allocation14], %s2777
          %2779 = dma.done %s2775, 512
        $region128: #{tpu_custom_call.1} parent=123 // pred_fallthru
          _
      $region124: #{tpu_custom_call.1} parent=5 // pred_fallthru
        _
    $region6: #{tpu_custom_call.1} parent=1 // loop_footer
      %s36 = sadd.s32 1, %s32
    $region7: #{tpu_custom_call.1} parent=1 // loop_footer_branch
      %31 = sbr.rel target = $region3
    $region8: #{tpu_custom_call.1} parent=1 // loop_exit
      _
    %2780 = vsyncpa [#allocation3], 1
    %s2781 = scalar_lea.sflag [#allocation3], 1
    %2782 = vsyncpa %s2781, 1
    %2783 = vsyncpa [#allocation6], 1
    %2784 = vsyncpa [#allocation9], 1
    %2785 = vsyncpa [#allocation12], 1
    %2786 = vsyncpa [#allocation4], 1
    %s2787 = scalar_lea.sflag [#allocation4], 1
    %2788 = vsyncpa %s2787, 1

</llo_original>
